<compile_context>
chip_gen: v6e
topology: v6e:2x2x1
jax: 0.10.0
libtpu: 0.0.40
codegen_flags: <defaults>
</compile_context>

<pallas_src>
import jax
import jax.numpy as jnp
from jax.experimental import pallas as pl
from jax.experimental.pallas import tpu as pltpu


# ---------------------------------------------------------------------------
# Pallas kernel
# ---------------------------------------------------------------------------
def _self_attn_kernel(wq_ref, wk_ref, wv_ref, bq_ref, bk_ref, bv_ref, gamma_ref,
                      xj_ref, xi_ref, o_ref, g_sc, m_sc, l_sc, acc_sc):
    i = pl.program_id(2)

    @pl.when(i == 0)
    def _init():
        # "queries" for this j-tile: g = Wk @ x_j + bk  -> (C8, TJ); resident
        # in scratch for the whole i loop.
        g_sc[...] = (
            jnp.dot(wk_ref[...], xj_ref[...].astype(jnp.float32),
                    preferred_element_type=jnp.float32) + bk_ref[...])
        m_sc[...] = jnp.full_like(m_sc, -jnp.inf)
        l_sc[...] = jnp.zeros_like(l_sc)
        acc_sc[...] = jnp.zeros_like(acc_sc)

    x_i = xi_ref[...].astype(jnp.float32)
    # "keys":   f = Wq @ x_i + bq -> (C8, TI)
    f_i = jnp.dot(wq_ref[...], x_i,
                  preferred_element_type=jnp.float32) + bq_ref[...]
    # "values": h = Wv @ x_i + bv -> (C, TI)
    h_i = jnp.dot(wv_ref[...], x_i,
                  preferred_element_type=jnp.float32) + bv_ref[...]

    # energy[a, b] = sum_c f_i[c, a] * g_j[c, b]  -> (TI, TJ)
    e = jax.lax.dot_general(f_i, g_sc[...], (((0,), (0,)), ((), ())),
                            preferred_element_type=jnp.float32)

    # online softmax over the i (row / sublane) axis
    m_prev = m_sc[...]
    m_new = jnp.maximum(m_prev, jnp.max(e, axis=0, keepdims=True))
    alpha = jnp.exp(m_prev - m_new)
    p = jnp.exp(e - m_new)
    l_sc[...] = alpha * l_sc[...] + jnp.sum(p, axis=0, keepdims=True)
    acc_sc[...] = alpha * acc_sc[...] + jnp.dot(
        h_i, p, preferred_element_type=jnp.float32)
    m_sc[...] = m_new

    @pl.when(i == pl.num_programs(2) - 1)
    def _finalize():
        attn = acc_sc[...] / l_sc[...]
        o_ref[...] = (gamma_ref[...] * attn
                      + xj_ref[...].astype(jnp.float32)).astype(o_ref.dtype)


def _pick_tile(s):
    """Largest lane-dense tile (multiple of 128) that divides S; else full S."""
    for t in (512, 256, 128):
        if s % t == 0:
            return t
    return s  # ragged / tiny S: single full-extent tile (block == array dim)


def self_attention_pallas(x, wq, bq, wk, bk, wv, bv, gamma):
    """x: (N, C, S) f32; weights already spectrally normalized."""
    N, C, S = x.shape
    C8 = wq.shape[0]
    TJ = _pick_tile(S)
    TI = TJ
    num_j = S // TJ
    num_i = S // TI

    bq2 = bq.reshape(C8, 1).astype(jnp.float32)
    bk2 = bk.reshape(C8, 1).astype(jnp.float32)
    bv2 = bv.reshape(C, 1).astype(jnp.float32)
    gamma2 = jnp.asarray(gamma, jnp.float32).reshape(1, 1)

    # Advisory cost estimate: the op is memory / exp bound at small C8.
    flops = 2 * N * (num_j * S * C * (C8 + C)       # f/h projections per j-tile
                     + S * S * (C8 + C)             # energy + weighted sum
                     + num_j * C8 * C * TJ)         # g projection per j-tile
    transcendentals = N * S * S + N * num_i * num_j * TJ
    bytes_accessed = 4 * N * C * S * (num_j + 2)

    return pl.pallas_call(
        _self_attn_kernel,
        out_shape=jax.ShapeDtypeStruct((N, C, S), x.dtype),
        grid_spec=pltpu.PrefetchScalarGridSpec(
            num_scalar_prefetch=0,
            grid=(N, num_j, num_i),
            in_specs=[
                pl.BlockSpec((C8, C), lambda n, j, i: (0, 0)),    # Wq (resident)
                pl.BlockSpec((C8, C), lambda n, j, i: (0, 0)),    # Wk (resident)
                pl.BlockSpec((C, C), lambda n, j, i: (0, 0)),     # Wv (resident)
                pl.BlockSpec((C8, 1), lambda n, j, i: (0, 0)),    # bq
                pl.BlockSpec((C8, 1), lambda n, j, i: (0, 0)),    # bk
                pl.BlockSpec((C, 1), lambda n, j, i: (0, 0)),     # bv
                pl.BlockSpec((1, 1), lambda n, j, i: (0, 0)),     # gamma
                pl.BlockSpec((pl.Squeezed(), C, TJ),
                             lambda n, j, i: (n, 0, j)),          # x_j (queries + residual)
                pl.BlockSpec((pl.Squeezed(), C, TI),
                             lambda n, j, i: (n, 0, i)),          # x_i (keys/values stream)
            ],
            out_specs=pl.BlockSpec((pl.Squeezed(), C, TJ),
                                   lambda n, j, i: (n, 0, j)),
            scratch_shapes=[
                pltpu.VMEM((C8, TJ), jnp.float32),   # g (queries) for j-tile
                pltpu.VMEM((1, TJ), jnp.float32),    # running max
                pltpu.VMEM((1, TJ), jnp.float32),    # running denominator
                pltpu.VMEM((C, TJ), jnp.float32),    # running weighted sum
            ],
        ),
        compiler_params=pltpu.CompilerParams(
            dimension_semantics=("parallel", "parallel", "arbitrary"),
            vmem_limit_bytes=32 * 1024 * 1024,
        ),
        cost_estimate=pl.CostEstimate(
            flops=flops,
            transcendentals=transcendentals,
            bytes_accessed=bytes_accessed,
        ),
    )(wq, wk, wv, bq2, bk2, bv2, gamma2, x, x)


# ---------------------------------------------------------------------------
# Weight preprocessing: eval-mode spectral norm (W / sigma_max)
# ---------------------------------------------------------------------------
def _spectral_normalize(w, n_iter=30, eps=1e-12):
    # TODO(synk): PyTorch's nn.utils.spectral_norm updates u/v buffers once per
    # training forward; here sigma is a converged power iteration done as plain
    # JAX weight preprocessing -- it is not part of the Pallas data path.
    w2 = w.reshape(w.shape[0], -1)
    u0 = jnp.ones((w2.shape[0],), w2.dtype) / jnp.sqrt(w2.shape[0])
    v0 = jnp.ones((w2.shape[1],), w2.dtype) / jnp.sqrt(w2.shape[1])

    def body(_, uv):
        u, v = uv
        v = w2.T @ u
        v = v / (jnp.linalg.norm(v) + eps)
        u = w2 @ v
        u = u / (jnp.linalg.norm(u) + eps)
        return (u, v)

    u, v = jax.lax.fori_loop(0, n_iter, body, (u0, v0))
    sigma = u @ (w2 @ v)
    return (w2 / sigma).reshape(w.shape)


# ---------------------------------------------------------------------------
# Module wrapper
# ---------------------------------------------------------------------------
class SelfAttentionPallas:
    """SelfAttention(n_channels) forward (fastai-style self-attention)."""

    def __init__(self, n_channels, key=None, gamma=0.0):
        assert n_channels >= 8, "n_channels must be >= 8"
        self.n_channels = n_channels
        c8 = n_channels // 8
        key = jax.random.PRNGKey(42) if key is None else key
        ks = jax.random.split(key, 6)
        bound = 1.0 / (n_channels ** 0.5)   # PyTorch Conv1d default init (k=1)

        def init(k, shape):
            return jax.random.uniform(k, shape, minval=-bound, maxval=bound,
                                      dtype=jnp.float32)

        self.wq = _spectral_normalize(init(ks[0], (c8, n_channels)))
        self.bq = init(ks[1], (c8,))
        self.wk = _spectral_normalize(init(ks[2], (c8, n_channels)))
        self.bk = init(ks[3], (c8,))
        self.wv = _spectral_normalize(init(ks[4], (n_channels, n_channels)))
        self.bv = init(ks[5], (n_channels,))
        self.gamma = jnp.float32(gamma)     # PyTorch init value is 0.0

    def __call__(self, x):
        size = x.shape                      # (N, C, *spatial)
        n, c = size[0], size[1]
        x2 = x.reshape(n, c, -1)
        o = self_attention_pallas(x2, self.wq, self.bq, self.wk, self.bk,
                                  self.wv, self.bv, self.gamma)
        return o.reshape(size)


# ---------------------------------------------------------------------------
# Pure-JAX reference (same math as the PyTorch forward)
# ---------------------------------------------------------------------------
def self_attention_ref(x, wq, bq, wk, bk, wv, bv, gamma):
    size = x.shape
    n, c = size[0], size[1]
    x2 = x.reshape(n, c, -1)
    hp = jax.lax.Precision.HIGHEST
    f = jnp.einsum('oc,ncs->nos', wq, x2, precision=hp) + bq[None, :, None]
    g = jnp.einsum('oc,ncs->nos', wk, x2, precision=hp) + bk[None, :, None]
    h = jnp.einsum('oc,ncs->nos', wv, x2, precision=hp) + bv[None, :, None]
    energy = jnp.einsum('nci,ncj->nij', f, g, precision=hp)
    beta = jax.nn.softmax(energy, axis=1)
    o = gamma * jnp.einsum('nci,nij->ncj', h, beta, precision=hp) + x2
    return o.reshape(size)


if __name__ == "__main__":
    key = jax.random.PRNGKey(0)
    kx, kw = jax.random.split(key)

    # Small but non-degenerate shapes: S = 32*32 = 1024 -> 512-wide lane tiles,
    # grid (N, 2, 2), which exercises the multi-tile online-softmax path.
    N, C, H, W = 2, 32, 32, 32
    x = jax.random.normal(kx, (N, C, H, W), dtype=jnp.float32)

    # gamma = 0 (the PyTorch init) would make the output trivially equal to x,
    # so use a nonzero gamma to actually exercise the attention path.
    mod = SelfAttentionPallas(C, key=kw, gamma=0.7)
    out = jax.block_until_ready(mod(x))

    ref = self_attention_ref(x, mod.wq, mod.bq, mod.wk, mod.bk,
                             mod.wv, mod.bv, mod.gamma)

    assert out.shape == x.shape, out.shape
    max_err = float(jnp.max(jnp.abs(out - ref)))
    assert jnp.allclose(out, ref, atol=5e-3, rtol=5e-3), max_err
    print("KERNEL_OK")
</pallas_src>

<mosaic_0001>
module attributes {stable_mosaic.version = 11 : i64} {
  func.func @_self_attn_kernel(%arg0: i32, %arg1: i32, %arg2: i32, %arg3: memref<4x32xf32, #tpu.memory_space<vmem>>, %arg4: memref<4x32xf32, #tpu.memory_space<vmem>>, %arg5: memref<32x32xf32, #tpu.memory_space<vmem>>, %arg6: memref<4x1xf32, #tpu.memory_space<vmem>>, %arg7: memref<4x1xf32, #tpu.memory_space<vmem>>, %arg8: memref<32x1xf32, #tpu.memory_space<vmem>>, %arg9: memref<1x1xf32, #tpu.memory_space<vmem>>, %arg10: memref<1x32x512xf32, #tpu.memory_space<vmem>>, %arg11: memref<1x32x512xf32, #tpu.memory_space<vmem>>, %arg12: memref<1x32x512xf32, #tpu.memory_space<vmem>>, %arg13: memref<4x512xf32, #tpu.memory_space<vmem>>, %arg14: memref<1x512xf32, #tpu.memory_space<vmem>>, %arg15: memref<1x512xf32, #tpu.memory_space<vmem>>, %arg16: memref<32x512xf32, #tpu.memory_space<vmem>>) attributes {dimension_semantics = [#tpu.dimension_semantics<parallel>, #tpu.dimension_semantics<parallel>, #tpu.dimension_semantics<arbitrary>], iteration_bounds = array<i64: 2, 2, 2>, scalar_prefetch = 0 : i64, scratch_operands = 4 : i64, tpu.core_type = #tpu.core_type<tc>, window_params = [{pipeline_mode = #tpu.pipeline_mode<synchronous>, transform_indices = @transform_0, window_bounds = array<i64: 4, 32>}, {pipeline_mode = #tpu.pipeline_mode<synchronous>, transform_indices = @transform_1, window_bounds = array<i64: 4, 32>}, {pipeline_mode = #tpu.pipeline_mode<synchronous>, transform_indices = @transform_2, window_bounds = array<i64: 32, 32>}, {pipeline_mode = #tpu.pipeline_mode<synchronous>, transform_indices = @transform_3, window_bounds = array<i64: 4, 1>}, {pipeline_mode = #tpu.pipeline_mode<synchronous>, transform_indices = @transform_4, window_bounds = array<i64: 4, 1>}, {pipeline_mode = #tpu.pipeline_mode<synchronous>, transform_indices = @transform_5, window_bounds = array<i64: 32, 1>}, {pipeline_mode = #tpu.pipeline_mode<synchronous>, transform_indices = @transform_6, window_bounds = array<i64: 1, 1>}, {transform_indices = @transform_7, window_bounds = array<i64: 1, 32, 512>}, {transform_indices = @transform_8, window_bounds = array<i64: 1, 32, 512>}, {transform_indices = @transform_9, window_bounds = array<i64: 1, 32, 512>}]} {
    %c0_i32 = arith.constant 0 : i32
    %0 = arith.cmpi eq, %arg2, %c0_i32 : i32
    %1 = arith.extui %0 : i1 to i32
    %c0_i32_0 = arith.constant 0 : i32
    %2 = arith.cmpi ne, %1, %c0_i32_0 : i32
    scf.if %2 {
      %c0_31 = arith.constant 0 : index
      %c0_32 = arith.constant 0 : index
      %42 = vector.load %arg4[%c0_31, %c0_32] : memref<4x32xf32, #tpu.memory_space<vmem>>, vector<4x32xf32>
      %c0_33 = arith.constant 0 : index
      %c0_34 = arith.constant 0 : index
      %c0_35 = arith.constant 0 : index
      %43 = vector.load %arg10[%c0_33, %c0_34, %c0_35] : memref<1x32x512xf32, #tpu.memory_space<vmem>>, vector<1x32x512xf32>
      %44 = vector.shape_cast %43 : vector<1x32x512xf32> to vector<32x512xf32>
      %cst_36 = arith.constant dense<0.000000e+00> : vector<4x512xf32>
      %45 = tpu.matmul %42, %44, %cst_36 {dimension_numbers = #tpu.dot_dimension_numbers<[1], [0], [0], [1], [0, 0, 1, 1], [], []>} : vector<4x32xf32>, vector<32x512xf32>, vector<4x512xf32> -> vector<4x512xf32>
      %c0_37 = arith.constant 0 : index
      %c0_38 = arith.constant 0 : index
      %46 = vector.load %arg7[%c0_37, %c0_38] : memref<4x1xf32, #tpu.memory_space<vmem>>, vector<4x1xf32>
      %47 = vector.broadcast %46 : vector<4x1xf32> to vector<4x512xf32>
      %48 = arith.addf %45, %47 : vector<4x512xf32>
      %c0_39 = arith.constant 0 : index
      %c0_40 = arith.constant 0 : index
      %49 = vector.load %arg13[%c0_39, %c0_40] : memref<4x512xf32, #tpu.memory_space<vmem>>, vector<4x512xf32>
      tpu.vector_store %arg13[%c0_39, %c0_40], %48 {strides = array<i32>} : memref<4x512xf32, #tpu.memory_space<vmem>>, vector<4x512xf32>,
      %cst_41 = arith.constant 0xFF800000 : f32
      %50 = vector.broadcast %cst_41 : f32 to vector<1x512xf32>
      %c0_42 = arith.constant 0 : index
      %c0_43 = arith.constant 0 : index
      %51 = vector.load %arg14[%c0_42, %c0_43] : memref<1x512xf32, #tpu.memory_space<vmem>>, vector<1x512xf32>
      tpu.vector_store %arg14[%c0_42, %c0_43], %50 {strides = array<i32>} : memref<1x512xf32, #tpu.memory_space<vmem>>, vector<1x512xf32>,
      %cst_44 = arith.constant 0.000000e+00 : f32
      %52 = vector.broadcast %cst_44 : f32 to vector<1x512xf32>
      %c0_45 = arith.constant 0 : index
      %c0_46 = arith.constant 0 : index
      %53 = vector.load %arg15[%c0_45, %c0_46] : memref<1x512xf32, #tpu.memory_space<vmem>>, vector<1x512xf32>
      tpu.vector_store %arg15[%c0_45, %c0_46], %52 {strides = array<i32>} : memref<1x512xf32, #tpu.memory_space<vmem>>, vector<1x512xf32>,
      %cst_47 = arith.constant 0.000000e+00 : f32
      %54 = vector.broadcast %cst_47 : f32 to vector<32x512xf32>
      %c0_48 = arith.constant 0 : index
      %c0_49 = arith.constant 0 : index
      %55 = vector.load %arg16[%c0_48, %c0_49] : memref<32x512xf32, #tpu.memory_space<vmem>>, vector<32x512xf32>
      tpu.vector_store %arg16[%c0_48, %c0_49], %54 {strides = array<i32>} : memref<32x512xf32, #tpu.memory_space<vmem>>, vector<32x512xf32>,
    } else {
    }
    %c0 = arith.constant 0 : index
    %c0_1 = arith.constant 0 : index
    %c0_2 = arith.constant 0 : index
    %3 = vector.load %arg11[%c0, %c0_1, %c0_2] : memref<1x32x512xf32, #tpu.memory_space<vmem>>, vector<1x32x512xf32>
    %4 = vector.shape_cast %3 : vector<1x32x512xf32> to vector<32x512xf32>
    %c0_3 = arith.constant 0 : index
    %c0_4 = arith.constant 0 : index
    %5 = vector.load %arg3[%c0_3, %c0_4] : memref<4x32xf32, #tpu.memory_space<vmem>>, vector<4x32xf32>
    %cst = arith.constant dense<0.000000e+00> : vector<4x512xf32>
    %6 = tpu.matmul %5, %4, %cst {dimension_numbers = #tpu.dot_dimension_numbers<[1], [0], [0], [1], [0, 0, 1, 1], [], []>} : vector<4x32xf32>, vector<32x512xf32>, vector<4x512xf32> -> vector<4x512xf32>
    %c0_5 = arith.constant 0 : index
    %c0_6 = arith.constant 0 : index
    %7 = vector.load %arg6[%c0_5, %c0_6] : memref<4x1xf32, #tpu.memory_space<vmem>>, vector<4x1xf32>
    %8 = vector.broadcast %7 : vector<4x1xf32> to vector<4x512xf32>
    %9 = arith.addf %6, %8 : vector<4x512xf32>
    %c0_7 = arith.constant 0 : index
    %c0_8 = arith.constant 0 : index
    %10 = vector.load %arg5[%c0_7, %c0_8] : memref<32x32xf32, #tpu.memory_space<vmem>>, vector<32x32xf32>
    %cst_9 = arith.constant dense<0.000000e+00> : vector<32x512xf32>
    %11 = tpu.matmul %10, %4, %cst_9 {dimension_numbers = #tpu.dot_dimension_numbers<[1], [0], [0], [1], [0, 0, 1, 1], [], []>} : vector<32x32xf32>, vector<32x512xf32>, vector<32x512xf32> -> vector<32x512xf32>
    %c0_10 = arith.constant 0 : index
    %c0_11 = arith.constant 0 : index
    %12 = vector.load %arg8[%c0_10, %c0_11] : memref<32x1xf32, #tpu.memory_space<vmem>>, vector<32x1xf32>
    %13 = vector.broadcast %12 : vector<32x1xf32> to vector<32x512xf32>
    %14 = arith.addf %11, %13 : vector<32x512xf32>
    %c0_12 = arith.constant 0 : index
    %c0_13 = arith.constant 0 : index
    %15 = vector.load %arg13[%c0_12, %c0_13] : memref<4x512xf32, #tpu.memory_space<vmem>>, vector<4x512xf32>
    %cst_14 = arith.constant dense<0.000000e+00> : vector<512x512xf32>
    %16 = tpu.matmul %9, %15, %cst_14 {dimension_numbers = #tpu.dot_dimension_numbers<[0], [0], [1], [1], [0, 1, 1, 1], [], []>} : vector<4x512xf32>, vector<4x512xf32>, vector<512x512xf32> -> vector<512x512xf32>
    %c0_15 = arith.constant 0 : index
    %c0_16 = arith.constant 0 : index
    %17 = vector.load %arg14[%c0_15, %c0_16] : memref<1x512xf32, #tpu.memory_space<vmem>>, vector<1x512xf32>
    %cst_17 = arith.constant dense<0xFF800000> : vector<512xf32>
    %18 = vector.multi_reduction <maximumf>, %16, %cst_17 [0] : vector<512x512xf32> to vector<512xf32>
    %19 = vector.shape_cast %18 : vector<512xf32> to vector<1x512xf32>
    %20 = arith.maximumf %17, %19 : vector<1x512xf32>
    %21 = arith.subf %17, %20 : vector<1x512xf32>
    %22 = math.exp %21 : vector<1x512xf32>
    %23 = vector.broadcast %20 : vector<1x512xf32> to vector<512x512xf32>
    %24 = arith.subf %16, %23 : vector<512x512xf32>
    %25 = math.exp %24 : vector<512x512xf32>
    %c0_18 = arith.constant 0 : index
    %c0_19 = arith.constant 0 : index
    %26 = vector.load %arg15[%c0_18, %c0_19] : memref<1x512xf32, #tpu.memory_space<vmem>>, vector<1x512xf32>
    %27 = arith.mulf %22, %26 : vector<1x512xf32>
    %cst_20 = arith.constant dense<0.000000e+00> : vector<512xf32>
    %28 = vector.multi_reduction <add>, %25, %cst_20 [0] : vector<512x512xf32> to vector<512xf32>
    %29 = vector.shape_cast %28 : vector<512xf32> to vector<1x512xf32>
    %30 = arith.addf %27, %29 : vector<1x512xf32>
    %c0_21 = arith.constant 0 : index
    %c0_22 = arith.constant 0 : index
    %31 = vector.load %arg15[%c0_21, %c0_22] : memref<1x512xf32, #tpu.memory_space<vmem>>, vector<1x512xf32>
    tpu.vector_store %arg15[%c0_21, %c0_22], %30 {strides = array<i32>} : memref<1x512xf32, #tpu.memory_space<vmem>>, vector<1x512xf32>,
    %c0_23 = arith.constant 0 : index
    %c0_24 = arith.constant 0 : index
    %32 = vector.load %arg16[%c0_23, %c0_24] : memref<32x512xf32, #tpu.memory_space<vmem>>, vector<32x512xf32>
    %33 = vector.broadcast %22 : vector<1x512xf32> to vector<32x512xf32>
    %34 = arith.mulf %33, %32 : vector<32x512xf32>
    %cst_25 = arith.constant dense<0.000000e+00> : vector<32x512xf32>
    %35 = tpu.matmul %14, %25, %cst_25 {dimension_numbers = #tpu.dot_dimension_numbers<[1], [0], [0], [1], [0, 0, 1, 1], [], []>} : vector<32x512xf32>, vector<512x512xf32>, vector<32x512xf32> -> vector<32x512xf32>
    %36 = arith.addf %34, %35 : vector<32x512xf32>
    %c0_26 = arith.constant 0 : index
    %c0_27 = arith.constant 0 : index
    %37 = vector.load %arg16[%c0_26, %c0_27] : memref<32x512xf32, #tpu.memory_space<vmem>>, vector<32x512xf32>
    tpu.vector_store %arg16[%c0_26, %c0_27], %36 {strides = array<i32>} : memref<32x512xf32, #tpu.memory_space<vmem>>, vector<32x512xf32>,
    %c0_28 = arith.constant 0 : index
    %c0_29 = arith.constant 0 : index
    %38 = vector.load %arg14[%c0_28, %c0_29] : memref<1x512xf32, #tpu.memory_space<vmem>>, vector<1x512xf32>
    tpu.vector_store %arg14[%c0_28, %c0_29], %20 {strides = array<i32>} : memref<1x512xf32, #tpu.memory_space<vmem>>, vector<1x512xf32>,
    %c1_i32 = arith.constant 1 : i32
    %39 = arith.cmpi eq, %arg2, %c1_i32 : i32
    %40 = arith.extui %39 : i1 to i32
    %c0_i32_30 = arith.constant 0 : i32
    %41 = arith.cmpi ne, %40, %c0_i32_30 : i32
    scf.if %41 {
      %c0_31 = arith.constant 0 : index
      %c0_32 = arith.constant 0 : index
      %42 = vector.load %arg16[%c0_31, %c0_32] : memref<32x512xf32, #tpu.memory_space<vmem>>, vector<32x512xf32>
      %c0_33 = arith.constant 0 : index
      %c0_34 = arith.constant 0 : index
      %43 = vector.load %arg15[%c0_33, %c0_34] : memref<1x512xf32, #tpu.memory_space<vmem>>, vector<1x512xf32>
      %44 = vector.broadcast %43 : vector<1x512xf32> to vector<32x512xf32>
      %45 = arith.divf %42, %44 : vector<32x512xf32>
      %c0_35 = arith.constant 0 : index
      %c0_36 = arith.constant 0 : index
      %46 = vector.load %arg9[%c0_35, %c0_36] : memref<1x1xf32, #tpu.memory_space<vmem>>, vector<1x1xf32>
      %47 = vector.broadcast %46 : vector<1x1xf32> to vector<32x512xf32>
      %48 = arith.mulf %47, %45 : vector<32x512xf32>
      %c0_37 = arith.constant 0 : index
      %c0_38 = arith.constant 0 : index
      %c0_39 = arith.constant 0 : index
      %49 = vector.load %arg10[%c0_37, %c0_38, %c0_39] : memref<1x32x512xf32, #tpu.memory_space<vmem>>, vector<1x32x512xf32>
      %50 = vector.shape_cast %49 : vector<1x32x512xf32> to vector<32x512xf32>
      %51 = arith.addf %48, %50 : vector<32x512xf32>
      %c0_40 = arith.constant 0 : index
      %c0_41 = arith.constant 0 : index
      %c0_42 = arith.constant 0 : index
      %52 = vector.load %arg12[%c0_40, %c0_41, %c0_42] : memref<1x32x512xf32, #tpu.memory_space<vmem>>, vector<1x32x512xf32>
      %53 = vector.shape_cast %52 : vector<1x32x512xf32> to vector<32x512xf32>
      %54 = vector.shape_cast %51 : vector<32x512xf32> to vector<1x32x512xf32>
      tpu.vector_store %arg12[%c0_40, %c0_41, %c0_42], %54 {strides = array<i32>} : memref<1x32x512xf32, #tpu.memory_space<vmem>>, vector<1x32x512xf32>,
    } else {
    }
    return
  }
  func.func @transform_0(%arg0: i32, %arg1: i32, %arg2: i32) -> (i32, i32) {
    %c0_i32 = arith.constant 0 : i32
    %c0_i32_0 = arith.constant 0 : i32
    %c0_i32_1 = arith.constant 0 : i32
    return %c0_i32, %c0_i32_0 : i32, i32
  }
  func.func @transform_1(%arg0: i32, %arg1: i32, %arg2: i32) -> (i32, i32) {
    %c0_i32 = arith.constant 0 : i32
    %c0_i32_0 = arith.constant 0 : i32
    %c0_i32_1 = arith.constant 0 : i32
    return %c0_i32, %c0_i32_0 : i32, i32
  }
  func.func @transform_2(%arg0: i32, %arg1: i32, %arg2: i32) -> (i32, i32) {
    %c0_i32 = arith.constant 0 : i32
    %c0_i32_0 = arith.constant 0 : i32
    %c0_i32_1 = arith.constant 0 : i32
    return %c0_i32, %c0_i32_0 : i32, i32
  }
  func.func @transform_3(%arg0: i32, %arg1: i32, %arg2: i32) -> (i32, i32) {
    %c0_i32 = arith.constant 0 : i32
    %c0_i32_0 = arith.constant 0 : i32
    %c0_i32_1 = arith.constant 0 : i32
    return %c0_i32, %c0_i32_0 : i32, i32
  }
  func.func @transform_4(%arg0: i32, %arg1: i32, %arg2: i32) -> (i32, i32) {
    %c0_i32 = arith.constant 0 : i32
    %c0_i32_0 = arith.constant 0 : i32
    %c0_i32_1 = arith.constant 0 : i32
    return %c0_i32, %c0_i32_0 : i32, i32
  }
  func.func @transform_5(%arg0: i32, %arg1: i32, %arg2: i32) -> (i32, i32) {
    %c0_i32 = arith.constant 0 : i32
    %c0_i32_0 = arith.constant 0 : i32
    %c0_i32_1 = arith.constant 0 : i32
    return %c0_i32, %c0_i32_0 : i32, i32
  }
  func.func @transform_6(%arg0: i32, %arg1: i32, %arg2: i32) -> (i32, i32) {
    %c0_i32 = arith.constant 0 : i32
    %c0_i32_0 = arith.constant 0 : i32
    %c0_i32_1 = arith.constant 0 : i32
    return %c0_i32, %c0_i32_0 : i32, i32
  }
  func.func @transform_7(%arg0: i32, %arg1: i32, %arg2: i32) -> (i32, i32, i32) {
    %c0_i32 = arith.constant 0 : i32
    %c0_i32_0 = arith.constant 0 : i32
    return %arg0, %c0_i32, %arg1 : i32, i32, i32
  }
  func.func @transform_8(%arg0: i32, %arg1: i32, %arg2: i32) -> (i32, i32, i32) {
    %c0_i32 = arith.constant 0 : i32
    %c0_i32_0 = arith.constant 0 : i32
    return %arg0, %c0_i32, %arg2 : i32, i32, i32
  }
  func.func @transform_9(%arg0: i32, %arg1: i32, %arg2: i32) -> (i32, i32, i32) {
    %c0_i32 = arith.constant 0 : i32
    %c0_i32_0 = arith.constant 0 : i32
    return %arg0, %c0_i32, %arg1 : i32, i32, i32
  }
}

</mosaic_0001>

<llo_original>
// kernel: tpu_custom_call.1
$region0: #{tpu_custom_call.1}
  #allocation0 [shape = 'u32[]', space=smem, size = 0x4, offset = 0x4, fixed_abs, tag = 'smem constant byte address 0x4 - core index']
  #allocation1 [shape = 'u32[144,128]{1,0:T(1,128)}', space=vmem, size = 0x12000, scoped, tag = 'internal scratch']
  #allocation2 [shape = 'f32[4,512]{1,0:T(4,128)}', space=vmem, size = 0x2000, scoped, tag = 'scratch operand']
  #allocation3 [shape = 'f32[1,512]{1,0:T(1,128)}', space=vmem, size = 0x800, scoped, tag = 'scratch operand']
  #allocation4 [shape = 'f32[1,512]{1,0:T(1,128)}', space=vmem, size = 0x800, scoped, tag = 'scratch operand']
  #allocation5 [shape = 'f32[32,512]{1,0:T(8,128)}', space=vmem, size = 0x10000, scoped, tag = 'scratch operand']
  #allocation6 [shape = 'f32[1,1]{1,0:T(1,128)S(1)}', space=vmem, size = 0x200, scoped, tag = 'scoped memory for tpu_custom_call.1']
  %s0 = inlined_call_operand.vmem [shape: f32[4,32], index: 0, kind: input, shape index: {}]
  %s1 = inlined_call_operand.vmem [shape: f32[4,32], index: 1, kind: input, shape index: {}]
  %s2 = inlined_call_operand.vmem [shape: f32[32,32], index: 2, kind: input, shape index: {}]
  %s3 = inlined_call_operand.vmem [shape: f32[4,1], index: 3, kind: input, shape index: {}]
  %s4 = inlined_call_operand.vmem [shape: f32[4,1], index: 4, kind: input, shape index: {}]
  %s5 = inlined_call_operand.vmem [shape: f32[32,1], index: 5, kind: input, shape index: {}]
  %s6 = inlined_call_operand.<no memory space> [shape: f32[1,1], index: 6, kind: input, shape index: {}]
  %s7 = inlined_call_operand.hbm [shape: f32[2,32,1024], index: 7, kind: input, shape index: {}]
  %s8 = inlined_call_operand.hbm [shape: f32[2,32,1024], index: 8, kind: input, shape index: {}]
  %s9 = inlined_call_operand.hbm [shape: f32[2,32,1024], index: 9, kind: output, shape index: {}]
  %s10 = sld [smem:[#allocation0]]
  $region85: #{tpu_custom_call.1} parent=0
    _
  %s12 = ssub.s32 1, %s10
  %s13 = scalar_select 0, %s12, %s10
  %v14 = vstv %s6
  %15 = vst [vmem:[#allocation6] sm:$0x1] %v14
  $region1: #{tpu_custom_call.1} parent=0
    #allocation7 [shape = 'u8[131072]{0}', space=vmem, size = 0x20000, scoped, tag = 'input window, operand 7']
    #allocation8 [shape = 's32[2]{0}', space=sflag, size = 0x8, scoped, tag = 'scoped memory for tpu_custom_call.1']
    #allocation9 [shape = 's32[2]{0}', space=sflag, size = 0x8, scoped, tag = 'scoped memory for tpu_custom_call.1']
    #allocation10 [shape = 'u8[131072]{0}', space=vmem, size = 0x20000, scoped, tag = 'input window, operand 8']
    #allocation11 [shape = 's32[2]{0}', space=sflag, size = 0x8, scoped, tag = 'scoped memory for tpu_custom_call.1']
    #allocation12 [shape = 'u8[131072]{0}', space=vmem, size = 0x20000, scoped, tag = 'output window, operand 0']
    %16 = vsyncpa [#allocation8], 0
    %s17 = scalar_lea.sflag [#allocation8], 1
    %18 = vsyncpa %s17, 0
    %19 = vsyncpa [#allocation11], 0
    %s20 = scalar_lea.sflag [#allocation11], 1
    %21 = vsyncpa %s20, 0
    %22 = vsyncpa [#allocation9], 0
    %s23 = scalar_lea.sflag [#allocation9], 1
    %24 = vsyncpa %s23, 0
    loop: start=0, step=1, limit=10
    $region2: #{tpu_custom_call.1} parent=1 // loop_pre_header
      _
    $region3: #{tpu_custom_call.1} parent=1 // loop_header
      %s26 = sphi 0, %s30
      %p27 = scmp.ge.s32.totalorder %s26, 10
      %s33 = sphi 0, %s52
      %s34 = sphi 0, %s48
      %s35 = sphi 0, %s44
      %s36 = sphi 0, %s33
      %s37 = sphi 0, %s34
      %s38 = sphi 0, %s35
      %s39 = sphi 0, %s36
      %s40 = sphi 0, %s37
      %s41 = sphi 0, %s38
      %s53 = sphi 0, %s53
      %s55 = sphi 0, %s53
      %s56 = sphi 0, %s55
      %s70 = sphi 0, %s56
      %s74 = sphi 0, %s74
      %s76 = sphi 0, %s74
      %s77 = sphi 0, %s76
      %s91 = sphi 0, %s77
      %s95 = sphi 0, %s95
      %s97 = sphi 0, %s95
      %s98 = sphi 0, %s97
      %s112 = sphi 0, %s98
      %s116 = sphi 0, %s116
      %s118 = sphi 0, %s116
      %s119 = sphi 0, %s118
      %s133 = sphi 0, %s119
      %s137 = sphi 0, %s137
      %s139 = sphi 0, %s137
      %s140 = sphi 0, %s139
      %s154 = sphi 0, %s140
      %s158 = sphi 0, %s158
      %s160 = sphi 0, %s158
      %s161 = sphi 0, %s160
      %s175 = sphi 0, %s161
      %s179 = sphi 0, %s179
      %s181 = sphi 0, %s179
      %s182 = sphi 0, %s181
      %s196 = sphi 0, %s182
      %s204 = sphi 0, %s206
      %s207 = sphi 0, %s204
      %s208 = sphi 0, %s207
      %s224 = sphi 0, %s208
      %s232 = sphi 0, %s234
      %s235 = sphi 0, %s232
      %s236 = sphi 0, %s235
      %s252 = sphi 0, %s236
      %s260 = sphi 0, %s262
      %s263 = sphi 0, %s260
      %s264 = sphi 0, %s263
      %s280 = sphi 0, %s264
    $region4: #{tpu_custom_call.1} parent=1 // loop_header_branch
      %29 = sbr.rel (%p27) target = $region8
    $region5: #{tpu_custom_call.1} parent=1 // loop_body
      %s31 = ssub.s32 %s26, 1
      %s32 = ssub.s32 %s26, 2
      %s42 = sadd.s32 1, %s35
      %p43 = scmp.ge.s32.totalorder %s42, 2
      %s44 = scalar_select %p43, 0, %s42
      %s45 = sadd.s32 1, %s34
      %s46 = scalar_select %p43, %s45, %s34
      %p47 = scmp.ge.s32.totalorder %s46, 2
      %s48 = scalar_select %p47, 0, %s46
      %s49 = sadd.s32 1, %s33
      %s50 = scalar_select %p47, %s49, %s33
      %p51 = scmp.ge.s32.totalorder %s50, 2
      %s52 = scalar_select %p51, 0, %s50
      %s54 = sadd.s32 %s53, 1
      %p57 = scmp.eq.s32.totalorder %s26, 7
      %p58 = scmp.ne.s32.totalorder %s53, %s55
      %p59 = scmp.eq.s32.totalorder %s26, 0
      %p60 = por %p58, %p59
      %p61 = scmp.ne.s32.totalorder %s53, %s55
      %p62 = scmp.eq.s32.totalorder %s31, 7
      %p63 = por %p61, %p62
      %p64 = scmp.ne.s32.totalorder %s55, %s56
      %p65 = scmp.eq.s32.totalorder %s31, 0
      %p66 = por %p64, %p65
      %p67 = scmp.ne.s32.totalorder %s55, %s56
      %p68 = scmp.eq.s32.totalorder %s32, 7
      %p69 = por %p67, %p68
      %p71 = scmp.ne.s32.totalorder %s56, %s70
      %p72 = scmp.eq.s32.totalorder %s32, 0
      %p73 = por %p71, %p72
      %s75 = sadd.s32 %s74, 1
      %p78 = scmp.eq.s32.totalorder %s26, 7
      %p79 = scmp.ne.s32.totalorder %s74, %s76
      %p80 = scmp.eq.s32.totalorder %s26, 0
      %p81 = por %p79, %p80
      %p82 = scmp.ne.s32.totalorder %s74, %s76
      %p83 = scmp.eq.s32.totalorder %s31, 7
      %p84 = por %p82, %p83
      %p85 = scmp.ne.s32.totalorder %s76, %s77
      %p86 = scmp.eq.s32.totalorder %s31, 0
      %p87 = por %p85, %p86
      %p88 = scmp.ne.s32.totalorder %s76, %s77
      %p89 = scmp.eq.s32.totalorder %s32, 7
      %p90 = por %p88, %p89
      %p92 = scmp.ne.s32.totalorder %s77, %s91
      %p93 = scmp.eq.s32.totalorder %s32, 0
      %p94 = por %p92, %p93
      %s96 = sadd.s32 %s95, 1
      %p99 = scmp.eq.s32.totalorder %s26, 7
      %p100 = scmp.ne.s32.totalorder %s95, %s97
      %p101 = scmp.eq.s32.totalorder %s26, 0
      %p102 = por %p100, %p101
      %p103 = scmp.ne.s32.totalorder %s95, %s97
      %p104 = scmp.eq.s32.totalorder %s31, 7
      %p105 = por %p103, %p104
      %p106 = scmp.ne.s32.totalorder %s97, %s98
      %p107 = scmp.eq.s32.totalorder %s31, 0
      %p108 = por %p106, %p107
      %p109 = scmp.ne.s32.totalorder %s97, %s98
      %p110 = scmp.eq.s32.totalorder %s32, 7
      %p111 = por %p109, %p110
      %p113 = scmp.ne.s32.totalorder %s98, %s112
      %p114 = scmp.eq.s32.totalorder %s32, 0
      %p115 = por %p113, %p114
      %s117 = sadd.s32 %s116, 1
      %p120 = scmp.eq.s32.totalorder %s26, 7
      %p121 = scmp.ne.s32.totalorder %s116, %s118
      %p122 = scmp.eq.s32.totalorder %s26, 0
      %p123 = por %p121, %p122
      %p124 = scmp.ne.s32.totalorder %s116, %s118
      %p125 = scmp.eq.s32.totalorder %s31, 7
      %p126 = por %p124, %p125
      %p127 = scmp.ne.s32.totalorder %s118, %s119
      %p128 = scmp.eq.s32.totalorder %s31, 0
      %p129 = por %p127, %p128
      %p130 = scmp.ne.s32.totalorder %s118, %s119
      %p131 = scmp.eq.s32.totalorder %s32, 7
      %p132 = por %p130, %p131
      %p134 = scmp.ne.s32.totalorder %s119, %s133
      %p135 = scmp.eq.s32.totalorder %s32, 0
      %p136 = por %p134, %p135
      %s138 = sadd.s32 %s137, 1
      %p141 = scmp.eq.s32.totalorder %s26, 7
      %p142 = scmp.ne.s32.totalorder %s137, %s139
      %p143 = scmp.eq.s32.totalorder %s26, 0
      %p144 = por %p142, %p143
      %p145 = scmp.ne.s32.totalorder %s137, %s139
      %p146 = scmp.eq.s32.totalorder %s31, 7
      %p147 = por %p145, %p146
      %p148 = scmp.ne.s32.totalorder %s139, %s140
      %p149 = scmp.eq.s32.totalorder %s31, 0
      %p150 = por %p148, %p149
      %p151 = scmp.ne.s32.totalorder %s139, %s140
      %p152 = scmp.eq.s32.totalorder %s32, 7
      %p153 = por %p151, %p152
      %p155 = scmp.ne.s32.totalorder %s140, %s154
      %p156 = scmp.eq.s32.totalorder %s32, 0
      %p157 = por %p155, %p156
      %s159 = sadd.s32 %s158, 1
      %p162 = scmp.eq.s32.totalorder %s26, 7
      %p163 = scmp.ne.s32.totalorder %s158, %s160
      %p164 = scmp.eq.s32.totalorder %s26, 0
      %p165 = por %p163, %p164
      %p166 = scmp.ne.s32.totalorder %s158, %s160
      %p167 = scmp.eq.s32.totalorder %s31, 7
      %p168 = por %p166, %p167
      %p169 = scmp.ne.s32.totalorder %s160, %s161
      %p170 = scmp.eq.s32.totalorder %s31, 0
      %p171 = por %p169, %p170
      %p172 = scmp.ne.s32.totalorder %s160, %s161
      %p173 = scmp.eq.s32.totalorder %s32, 7
      %p174 = por %p172, %p173
      %p176 = scmp.ne.s32.totalorder %s161, %s175
      %p177 = scmp.eq.s32.totalorder %s32, 0
      %p178 = por %p176, %p177
      %s180 = sadd.s32 %s179, 1
      %p183 = scmp.eq.s32.totalorder %s26, 7
      %p184 = scmp.ne.s32.totalorder %s179, %s181
      %p185 = scmp.eq.s32.totalorder %s26, 0
      %p186 = por %p184, %p185
      %p187 = scmp.ne.s32.totalorder %s179, %s181
      %p188 = scmp.eq.s32.totalorder %s31, 7
      %p189 = por %p187, %p188
      %p190 = scmp.ne.s32.totalorder %s181, %s182
      %p191 = scmp.eq.s32.totalorder %s31, 0
      %p192 = por %p190, %p191
      %p193 = scmp.ne.s32.totalorder %s181, %s182
      %p194 = scmp.eq.s32.totalorder %s32, 7
      %p195 = por %p193, %p194
      %p197 = scmp.ne.s32.totalorder %s182, %s196
      %p198 = scmp.eq.s32.totalorder %s32, 0
      %p199 = por %p197, %p198
      %s200 = ssub.s32 %s33, %s52
      %s201 = ssub.s32 %s34, %s48
      %s202 = sor.u32 %s200, %s201
      %p203 = scmp.eq.s32.totalorder %s202, 0
      %s205 = sadd.s32 %s204, 1
      %s206 = scalar_select %p203, %s204, %s205
      %p209 = pneg %p203
      %p210 = scmp.eq.s32.totalorder %s26, 7
      %p211 = por %p209, %p210
      %p212 = scmp.ne.s32.totalorder %s204, %s207
      %p213 = scmp.eq.s32.totalorder %s26, 0
      %p214 = por %p212, %p213
      %p215 = scmp.ne.s32.totalorder %s204, %s207
      %p216 = scmp.eq.s32.totalorder %s31, 7
      %p217 = por %p215, %p216
      %p218 = scmp.ne.s32.totalorder %s207, %s208
      %p219 = scmp.eq.s32.totalorder %s31, 0
      %p220 = por %p218, %p219
      %p221 = scmp.ne.s32.totalorder %s207, %s208
      %p222 = scmp.eq.s32.totalorder %s32, 7
      %p223 = por %p221, %p222
      %p225 = scmp.ne.s32.totalorder %s208, %s224
      %p226 = scmp.eq.s32.totalorder %s32, 0
      %p227 = por %p225, %p226
      %s228 = ssub.s32 %s33, %s52
      %s229 = ssub.s32 %s35, %s44
      %s230 = sor.u32 %s228, %s229
      %p231 = scmp.eq.s32.totalorder %s230, 0
      %s233 = sadd.s32 %s232, 1
      %s234 = scalar_select %p231, %s232, %s233
      %p237 = pneg %p231
      %p238 = scmp.eq.s32.totalorder %s26, 7
      %p239 = por %p237, %p238
      %p240 = scmp.ne.s32.totalorder %s232, %s235
      %p241 = scmp.eq.s32.totalorder %s26, 0
      %p242 = por %p240, %p241
      %p243 = scmp.ne.s32.totalorder %s232, %s235
      %p244 = scmp.eq.s32.totalorder %s31, 7
      %p245 = por %p243, %p244
      %p246 = scmp.ne.s32.totalorder %s235, %s236
      %p247 = scmp.eq.s32.totalorder %s31, 0
      %p248 = por %p246, %p247
      %p249 = scmp.ne.s32.totalorder %s235, %s236
      %p250 = scmp.eq.s32.totalorder %s32, 7
      %p251 = por %p249, %p250
      %p253 = scmp.ne.s32.totalorder %s236, %s252
      %p254 = scmp.eq.s32.totalorder %s32, 0
      %p255 = por %p253, %p254
      %s256 = ssub.s32 %s33, %s52
      %s257 = ssub.s32 %s34, %s48
      %s258 = sor.u32 %s256, %s257
      %p259 = scmp.eq.s32.totalorder %s258, 0
      %s261 = sadd.s32 %s260, 1
      %s262 = scalar_select %p259, %s260, %s261
      %p265 = pneg %p259
      %p266 = scmp.eq.s32.totalorder %s26, 7
      %p267 = por %p265, %p266
      %p268 = scmp.ne.s32.totalorder %s260, %s263
      %p269 = scmp.eq.s32.totalorder %s26, 0
      %p270 = por %p268, %p269
      %p271 = scmp.ne.s32.totalorder %s260, %s263
      %p272 = scmp.eq.s32.totalorder %s31, 7
      %p273 = por %p271, %p272
      %p274 = scmp.ne.s32.totalorder %s263, %s264
      %p275 = scmp.eq.s32.totalorder %s31, 0
      %p276 = por %p274, %p275
      %p277 = scmp.ne.s32.totalorder %s263, %s264
      %p278 = scmp.eq.s32.totalorder %s32, 7
      %p279 = por %p277, %p278
      %p281 = scmp.ne.s32.totalorder %s264, %s280
      %p282 = scmp.eq.s32.totalorder %s32, 0
      %p283 = por %p281, %p282
      %p284 = scmp.le.s32.totalorder 1, %s26
      %p285 = scmp.lt.s32.totalorder %s26, 9
      %p286 = pnand %p284, %p285
      %p287 = pneg %p286
      // Predicated region
      $region9: #{tpu_custom_call.1} parent=5 // pred_check
        _
      $region10: #{tpu_custom_call.1} parent=5 // pred_check_branch
        %289 = sbr.rel (%p286) target = $region12
      $region11: #{tpu_custom_call.1} parent=5 // pred_region
        %s290 = ssub.s32 %s26, 1
        // Predicated region
        $region13: #{tpu_custom_call.1} parent=11 // pred_check
          %p291 = pneg %p66
        $region14: #{tpu_custom_call.1} parent=11 // pred_check_branch
          %293 = sbr.rel (%p291) target = $region16
        $region15: #{tpu_custom_call.1} parent=11 // pred_region
          _
        $region16: #{tpu_custom_call.1} parent=11 // pred_fallthru
          _
        // Predicated region
        $region17: #{tpu_custom_call.1} parent=11 // pred_check
          %p294 = pneg %p87
        $region18: #{tpu_custom_call.1} parent=11 // pred_check_branch
          %296 = sbr.rel (%p294) target = $region20
        $region19: #{tpu_custom_call.1} parent=11 // pred_region
          _
        $region20: #{tpu_custom_call.1} parent=11 // pred_fallthru
          _
        // Predicated region
        $region21: #{tpu_custom_call.1} parent=11 // pred_check
          %p297 = pneg %p108
        $region22: #{tpu_custom_call.1} parent=11 // pred_check_branch
          %299 = sbr.rel (%p297) target = $region24
        $region23: #{tpu_custom_call.1} parent=11 // pred_region
          _
        $region24: #{tpu_custom_call.1} parent=11 // pred_fallthru
          _
        // Predicated region
        $region25: #{tpu_custom_call.1} parent=11 // pred_check
          %p300 = pneg %p129
        $region26: #{tpu_custom_call.1} parent=11 // pred_check_branch
          %302 = sbr.rel (%p300) target = $region28
        $region27: #{tpu_custom_call.1} parent=11 // pred_region
          _
        $region28: #{tpu_custom_call.1} parent=11 // pred_fallthru
          _
        // Predicated region
        $region29: #{tpu_custom_call.1} parent=11 // pred_check
          %p303 = pneg %p150
        $region30: #{tpu_custom_call.1} parent=11 // pred_check_branch
          %305 = sbr.rel (%p303) target = $region32
        $region31: #{tpu_custom_call.1} parent=11 // pred_region
          _
        $region32: #{tpu_custom_call.1} parent=11 // pred_fallthru
          _
        // Predicated region
        $region33: #{tpu_custom_call.1} parent=11 // pred_check
          %p306 = pneg %p171
        $region34: #{tpu_custom_call.1} parent=11 // pred_check_branch
          %308 = sbr.rel (%p306) target = $region36
        $region35: #{tpu_custom_call.1} parent=11 // pred_region
          _
        $region36: #{tpu_custom_call.1} parent=11 // pred_fallthru
          _
        // Predicated region
        $region37: #{tpu_custom_call.1} parent=11 // pred_check
          %p309 = pneg %p192
        $region38: #{tpu_custom_call.1} parent=11 // pred_check_branch
          %311 = sbr.rel (%p309) target = $region40
        $region39: #{tpu_custom_call.1} parent=11 // pred_region
          _
        $region40: #{tpu_custom_call.1} parent=11 // pred_fallthru
          _
      $region12: #{tpu_custom_call.1} parent=5 // pred_fallthru
        _
      %p312 = scmp.lt.s32.totalorder %s26, 8
      // Predicated region
      $region41: #{tpu_custom_call.1} parent=5 // pred_check
        %p313 = pneg %p312
      $region42: #{tpu_custom_call.1} parent=5 // pred_check_branch
        %315 = sbr.rel (%p313) target = $region44
      $region43: #{tpu_custom_call.1} parent=5 // pred_region
        // Predicated region
        $region45: #{tpu_custom_call.1} parent=43 // pred_check
          %p316 = pneg %p214
        $region46: #{tpu_custom_call.1} parent=43 // pred_check_branch
          %318 = sbr.rel (%p316) target = $region48
        $region47: #{tpu_custom_call.1} parent=43 // pred_region
          %s319 = sand.u32 %s204, 1
          %s320 = scalar_lea.sflag [#allocation8], %s319
          %s321 = sand.u32 %s204, 1
          %s322 = smul.addr %s321, 128
          %s323 = scalar_lea.vmem [#allocation7], %s322
          %s324 = smul.u32 4, %s34
          %s326 = ssub.s32 2048, 2048
          %327 = vsyncadd %s320, %s326
          %s328 = smul.addr %s33, 32
          %s329 = sadd.s32 %s324, %s328
          %s330 = smul.addr %s329, 128
          %s331 = scalar_lea.hbm %s7, %s330
          %s332 = sshll.u32 %s323, 4
          %s333 = int_to_ptr.vmem [resolvable:$true] %s332
          %338 = dma.hbm_to_vmem [thread:$0]  %s331, 2048, %s333, %s320, 1024, 512, 32
        $region48: #{tpu_custom_call.1} parent=43 // pred_fallthru
          _
        // Predicated region
        $region49: #{tpu_custom_call.1} parent=43 // pred_check
          %p339 = pneg %p242
        $region50: #{tpu_custom_call.1} parent=43 // pred_check_branch
          %341 = sbr.rel (%p339) target = $region52
        $region51: #{tpu_custom_call.1} parent=43 // pred_region
          %s342 = sand.u32 %s232, 1
          %s343 = scalar_lea.sflag [#allocation11], %s342
          %s344 = sand.u32 %s232, 1
          %s345 = smul.addr %s344, 128
          %s346 = scalar_lea.vmem [#allocation10], %s345
          %s347 = smul.u32 4, %s35
          %s349 = ssub.s32 2048, 2048
          %350 = vsyncadd %s343, %s349
          %s351 = smul.addr %s33, 32
          %s352 = sadd.s32 %s347, %s351
          %s353 = smul.addr %s352, 128
          %s354 = scalar_lea.hbm %s8, %s353
          %s355 = sshll.u32 %s346, 4
          %s356 = int_to_ptr.vmem [resolvable:$true] %s355
          %361 = dma.hbm_to_vmem [thread:$0]  %s354, 2048, %s356, %s343, 1024, 512, 32
        $region52: #{tpu_custom_call.1} parent=43 // pred_fallthru
          _
      $region44: #{tpu_custom_call.1} parent=5 // pred_fallthru
        _
      %p362 = scmp.le.s32.totalorder 1, %s26
      %p363 = scmp.lt.s32.totalorder %s26, 9
      %p364 = pnand %p362, %p363
      %p365 = pneg %p364
      // Predicated region
      $region53: #{tpu_custom_call.1} parent=5 // pred_check
        _
      $region54: #{tpu_custom_call.1} parent=5 // pred_check_branch
        %367 = sbr.rel (%p364) target = $region56
      $region55: #{tpu_custom_call.1} parent=5 // pred_region
        %s368 = ssub.s32 %s26, 1
        %s369 = sand.u32 %s207, 1
        %s370 = scalar_lea.sflag [#allocation8], %s369
        %s371 = sand.u32 %s207, 1
        %s372 = smul.addr %s371, 128
        %s373 = scalar_lea.vmem [#allocation7], %s372
        // Predicated region
        $region57: #{tpu_custom_call.1} parent=55 // pred_check
          %p374 = pneg %p220
        $region58: #{tpu_custom_call.1} parent=55 // pred_check_branch
          %376 = sbr.rel (%p374) target = $region60
        $region59: #{tpu_custom_call.1} parent=55 // pred_region
          %377 = dma.done %s370, 2048
        $region60: #{tpu_custom_call.1} parent=55 // pred_fallthru
          _
        %s378 = sand.u32 %s235, 1
        %s379 = scalar_lea.sflag [#allocation11], %s378
        %s380 = sand.u32 %s235, 1
        %s381 = smul.addr %s380, 128
        %s382 = scalar_lea.vmem [#allocation10], %s381
        // Predicated region
        $region61: #{tpu_custom_call.1} parent=55 // pred_check
          %p383 = pneg %p248
        $region62: #{tpu_custom_call.1} parent=55 // pred_check_branch
          %385 = sbr.rel (%p383) target = $region64
        $region63: #{tpu_custom_call.1} parent=55 // pred_region
          %386 = dma.done %s379, 2048
        $region64: #{tpu_custom_call.1} parent=55 // pred_fallthru
          _
        %p387 = pneg %p66
        %p388 = pneg %p63
        %p389 = pneg %p87
        %p390 = pneg %p84
        %p391 = pneg %p108
        %p392 = pneg %p105
        %p393 = pneg %p129
        %p394 = pneg %p126
        %p395 = pneg %p150
        %p396 = pneg %p147
        %p397 = pneg %p171
        %p398 = pneg %p168
        %p399 = pneg %p192
        %p400 = pneg %p189
        %s401 = sand.u32 %s207, 1
        %s402 = scalar_lea.sflag [#allocation8], %s401
        %s403 = sand.u32 %s207, 1
        %s404 = smul.addr %s403, 128
        %s405 = scalar_lea.vmem [#allocation7], %s404
        %p406 = pneg %p220
        %p407 = pneg %p217
        %s408 = sand.u32 %s235, 1
        %s409 = scalar_lea.sflag [#allocation11], %s408
        %s410 = sand.u32 %s235, 1
        %s411 = smul.addr %s410, 128
        %s412 = scalar_lea.vmem [#allocation10], %s411
        %p413 = pneg %p248
        %p414 = pneg %p245
        %p415 = pneg %p276
        %p416 = pneg %p273
        %s417 = sand.u32 %s263, 1
        %s418 = scalar_lea.sflag [#allocation9], %s417
        %s419 = sand.u32 %s263, 1
        %s420 = smul.addr %s419, 128
        %s421 = scalar_lea.vmem [#allocation12], %s420
        %s422 = smul.u32 4, %s37
        %s423 = smul.u32 4, %s38
        %s424 = smul.u32 4, %s37
        %p425 = scmp.eq.s32.totalorder %s38, 0
        // Predicated region
        $region65: #{tpu_custom_call.1} parent=55 // pred_check
          %p426 = pneg %p425
        $region66: #{tpu_custom_call.1} parent=55 // pred_check_branch
          %428 = sbr.rel (%p426) target = $region68
        $region67: #{tpu_custom_call.1} parent=55 // pred_region
          %v429 = vld [vmem:[%s1] sm:$0xf]
          %v430 = vld [vmem:[%s373] sm:$0xff]
          %v431 = vld [vmem:[%s373 + $0x8] sm:$0xff]
          %v432 = vld [vmem:[%s373 + $0x10] sm:$0xff]
          %v433 = vld [vmem:[%s373 + $0x18] sm:$0xff]
          %v434 = vld [vmem:[%s373 + $0x20] sm:$0xff]
          %v435 = vld [vmem:[%s373 + $0x28] sm:$0xff]
          %v436 = vld [vmem:[%s373 + $0x30] sm:$0xff]
          %v437 = vld [vmem:[%s373 + $0x38] sm:$0xff]
          %v438 = vld [vmem:[%s373 + $0x40] sm:$0xff]
          %v439 = vld [vmem:[%s373 + $0x48] sm:$0xff]
          %v440 = vld [vmem:[%s373 + $0x50] sm:$0xff]
          %v441 = vld [vmem:[%s373 + $0x58] sm:$0xff]
          %v442 = vld [vmem:[%s373 + $0x60] sm:$0xff]
          %v443 = vld [vmem:[%s373 + $0x68] sm:$0xff]
          %v444 = vld [vmem:[%s373 + $0x70] sm:$0xff]
          %v445 = vld [vmem:[%s373 + $0x78] sm:$0xff]
          %v446 = vld [vmem:[%s4] sm:$0xf]
          %448 = vset.pattern.permute.xlu0 0
          %449 = vperm.xlu0 %448, %v446
          %v450 = vpop.permute.xlu0 %449
          %vm452 = vcmask 261120
          %v454 = vsel %vm452, %v429, 0
          %456 = vmatprep.subr.mxu0 0.0
          %457 = vmatpush1.msra.mxu0 0.0
          %458 = vmatprep.subr.mxu0 0.0
          %459 = vmatpush1.msra.mxu0 0.0
          %460 = vmatprep.subr.mxu0 0.0
          %461 = vmatpush1.msra.mxu0 0.0
          %462 = vmatprep.subr.mxu0 0.0
          %463 = vmatpush1.msra.mxu0 0.0
          %464 = vmatprep.subr.mxu0 0.0
          %465 = vmatpush1.msra.mxu0 0.0
          %466 = vmatprep.subr.mxu0 0.0
          %467 = vmatpush1.msra.mxu0 0.0
          %468 = vmatprep.subr.mxu0 0.0
          %469 = vmatpush1.msra.mxu0 0.0
          %470 = vmatprep.subr.mxu0 0.0
          %471 = vmatpush1.msra.mxu0 0.0
          %472 = vmatprep.subr.mxu0 0.0
          %473 = vmatpush1.msra.mxu0 0.0
          %474 = vmatprep.subr.mxu0 0.0
          %475 = vmatpush1.msra.mxu0 0.0
          %476 = vmatprep.subr.mxu0 0.0
          %477 = vmatpush1.msra.mxu0 0.0
          %478 = vmatprep.subr.mxu0 0.0
          %479 = vmatpush1.msra.mxu0 0.0
          %480 = vmatprep.subr.mxu0 %v443
          %481 = vmatpush1.msra.mxu0 %v442
          %482 = vmatprep.subr.mxu0 %v439
          %483 = vmatpush1.msra.mxu0 %v438
          %484 = vmatprep.subr.mxu0 %v435
          %485 = vmatpush1.msra.mxu0 %v434
          %486 = vmatprep.subr.mxu0 %v431
          %487 = vmatpush1.msra.mxu0 %v430
          %488 = vmatprep.subr.mxu0 0.0
          %489 = vmatpush2.msra.mxu0 0.0
          %490 = vmatprep.subr.mxu0 0.0
          %491 = vmatpush2.msra.mxu0 0.0
          %492 = vmatprep.subr.mxu0 0.0
          %493 = vmatpush2.msra.mxu0 0.0
          %494 = vmatprep.subr.mxu0 0.0
          %495 = vmatpush2.msra.mxu0 0.0
          %496 = vmatprep.subr.mxu0 0.0
          %497 = vmatpush2.msra.mxu0 0.0
          %498 = vmatprep.subr.mxu0 0.0
          %499 = vmatpush2.msra.mxu0 0.0
          %500 = vmatprep.subr.mxu0 0.0
          %501 = vmatpush2.msra.mxu0 0.0
          %502 = vmatprep.subr.mxu0 0.0
          %503 = vmatpush2.msra.mxu0 0.0
          %504 = vmatprep.subr.mxu0 0.0
          %505 = vmatpush2.msra.mxu0 0.0
          %506 = vmatprep.subr.mxu0 0.0
          %507 = vmatpush2.msra.mxu0 0.0
          %508 = vmatprep.subr.mxu0 0.0
          %509 = vmatpush2.msra.mxu0 0.0
          %510 = vmatprep.subr.mxu0 0.0
          %511 = vmatpush2.msra.mxu0 0.0
          %512 = vmatprep.subr.mxu0 0.0
          %513 = vmatpush2.msra.mxu0 0.0
          %514 = vmatprep.subr.mxu0 0.0
          %515 = vmatpush2.msra.mxu0 0.0
          %516 = vmatprep.subr.mxu0 0.0
          %517 = vmatpush2.msra.mxu0 0.0
          %518 = vmatprep.subr.mxu0 0.0
          %519 = vmatpush2.msra.mxu0 0.0
          %520 = vmatprep.mubr.f32.mxu0 0.0
          %521 = vmatmul.mubr.f32.gmra.mxu0 %v454
          %v522 = vpop.f32.mrf.mxu0
          %v523 = vadd.f32 %v450, %v522
          %v524 = vpop.f32.mrf.mxu0
          %v525 = vadd.f32 %v450, %v524
          %526 = vdwg.mxu0
          %527 = vmatprep.subr.mxu0 0.0
          %528 = vmatpush1.msra.mxu0 0.0
          %529 = vmatprep.subr.mxu0 0.0
          %530 = vmatpush1.msra.mxu0 0.0
          %531 = vmatprep.subr.mxu0 0.0
          %532 = vmatpush1.msra.mxu0 0.0
          %533 = vmatprep.subr.mxu0 0.0
          %534 = vmatpush1.msra.mxu0 0.0
          %535 = vmatprep.subr.mxu0 0.0
          %536 = vmatpush1.msra.mxu0 0.0
          %537 = vmatprep.subr.mxu0 0.0
          %538 = vmatpush1.msra.mxu0 0.0
          %539 = vmatprep.subr.mxu0 0.0
          %540 = vmatpush1.msra.mxu0 0.0
          %541 = vmatprep.subr.mxu0 0.0
          %542 = vmatpush1.msra.mxu0 0.0
          %543 = vmatprep.subr.mxu0 0.0
          %544 = vmatpush1.msra.mxu0 0.0
          %545 = vmatprep.subr.mxu0 0.0
          %546 = vmatpush1.msra.mxu0 0.0
          %547 = vmatprep.subr.mxu0 0.0
          %548 = vmatpush1.msra.mxu0 0.0
          %549 = vmatprep.subr.mxu0 0.0
          %550 = vmatpush1.msra.mxu0 0.0
          %551 = vmatprep.subr.mxu0 %v445
          %552 = vmatpush1.msra.mxu0 %v444
          %553 = vmatprep.subr.mxu0 %v441
          %554 = vmatpush1.msra.mxu0 %v440
          %555 = vmatprep.subr.mxu0 %v437
          %556 = vmatpush1.msra.mxu0 %v436
          %557 = vmatprep.subr.mxu0 %v433
          %558 = vmatpush1.msra.mxu0 %v432
          %559 = vmatprep.subr.mxu0 0.0
          %560 = vmatpush2.msra.mxu0 0.0
          %561 = vmatprep.subr.mxu0 0.0
          %562 = vmatpush2.msra.mxu0 0.0
          %563 = vmatprep.subr.mxu0 0.0
          %564 = vmatpush2.msra.mxu0 0.0
          %565 = vmatprep.subr.mxu0 0.0
          %566 = vmatpush2.msra.mxu0 0.0
          %567 = vmatprep.subr.mxu0 0.0
          %568 = vmatpush2.msra.mxu0 0.0
          %569 = vmatprep.subr.mxu0 0.0
          %570 = vmatpush2.msra.mxu0 0.0
          %571 = vmatprep.subr.mxu0 0.0
          %572 = vmatpush2.msra.mxu0 0.0
          %573 = vmatprep.subr.mxu0 0.0
          %574 = vmatpush2.msra.mxu0 0.0
          %575 = vmatprep.subr.mxu0 0.0
          %576 = vmatpush2.msra.mxu0 0.0
          %577 = vmatprep.subr.mxu0 0.0
          %578 = vmatpush2.msra.mxu0 0.0
          %579 = vmatprep.subr.mxu0 0.0
          %580 = vmatpush2.msra.mxu0 0.0
          %581 = vmatprep.subr.mxu0 0.0
          %582 = vmatpush2.msra.mxu0 0.0
          %583 = vmatprep.subr.mxu0 0.0
          %584 = vmatpush2.msra.mxu0 0.0
          %585 = vmatprep.subr.mxu0 0.0
          %586 = vmatpush2.msra.mxu0 0.0
          %587 = vmatprep.subr.mxu0 0.0
          %588 = vmatpush2.msra.mxu0 0.0
          %589 = vmatprep.subr.mxu0 0.0
          %590 = vmatpush2.msra.mxu0 0.0
          %591 = vmatprep.mubr.f32.mxu0 0.0
          %592 = vmatmul.mubr.f32.gmra.mxu0 %v454
          %v593 = vpop.f32.mrf.mxu0
          %v594 = vadd.f32 %v450, %v593
          %v595 = vpop.f32.mrf.mxu0
          %v596 = vadd.f32 %v450, %v595
          %597 = vdwg.mxu0
          %v602 = vcombine.low %v523, %v525
          %v603 = vcombine.low %v594, %v596
          %606 = vst [vmem:[#allocation2] sm:$0xff] %v602
          %607 = vst [vmem:[#allocation2 + $0x8] sm:$0xff] %v603
          %v608 = vlaneseq
          %vm609 = vcmp.ge.s32.totalorder %v608, 0
          %vm610 = vcmp.lt.s32.totalorder %v608, 512
          %vm611 = vmand %vm609, %vm610
          %612 = vst.msk [vmem:[#allocation3] sm:$0xf] %vm611, -inf
          %613 = vst.msk [vmem:[#allocation4] sm:$0xf] %vm611, 0.0
          %614 = vst [vmem:[#allocation5] sm:$0xff] 0.0
          %615 = vst [vmem:[#allocation5 + $0x8] sm:$0xff] 0.0
          %616 = vst [vmem:[#allocation5 + $0x10] sm:$0xff] 0.0
          %617 = vst [vmem:[#allocation5 + $0x18] sm:$0xff] 0.0
          %618 = vst [vmem:[#allocation5 + $0x20] sm:$0xff] 0.0
          %619 = vst [vmem:[#allocation5 + $0x28] sm:$0xff] 0.0
          %620 = vst [vmem:[#allocation5 + $0x30] sm:$0xff] 0.0
          %621 = vst [vmem:[#allocation5 + $0x38] sm:$0xff] 0.0
          %622 = vst [vmem:[#allocation5 + $0x40] sm:$0xff] 0.0
          %623 = vst [vmem:[#allocation5 + $0x48] sm:$0xff] 0.0
          %624 = vst [vmem:[#allocation5 + $0x50] sm:$0xff] 0.0
          %625 = vst [vmem:[#allocation5 + $0x58] sm:$0xff] 0.0
          %626 = vst [vmem:[#allocation5 + $0x60] sm:$0xff] 0.0
          %627 = vst [vmem:[#allocation5 + $0x68] sm:$0xff] 0.0
          %628 = vst [vmem:[#allocation5 + $0x70] sm:$0xff] 0.0
          %629 = vst [vmem:[#allocation5 + $0x78] sm:$0xff] 0.0
        $region68: #{tpu_custom_call.1} parent=55 // pred_fallthru
          _
        %v630 = vld [vmem:[%s382] sm:$0xff]
        %v631 = vld [vmem:[%s382 + $0x8] sm:$0xff]
        %v632 = vld [vmem:[%s382 + $0x10] sm:$0xff]
        %v633 = vld [vmem:[%s382 + $0x18] sm:$0xff]
        %v634 = vld [vmem:[%s382 + $0x20] sm:$0xff]
        %v635 = vld [vmem:[%s382 + $0x28] sm:$0xff]
        %v636 = vld [vmem:[%s382 + $0x30] sm:$0xff]
        %v637 = vld [vmem:[%s382 + $0x38] sm:$0xff]
        %v638 = vld [vmem:[%s382 + $0x40] sm:$0xff]
        %v639 = vld [vmem:[%s382 + $0x48] sm:$0xff]
        %v640 = vld [vmem:[%s382 + $0x50] sm:$0xff]
        %v641 = vld [vmem:[%s382 + $0x58] sm:$0xff]
        %v642 = vld [vmem:[%s382 + $0x60] sm:$0xff]
        %v643 = vld [vmem:[%s382 + $0x68] sm:$0xff]
        %v644 = vld [vmem:[%s382 + $0x70] sm:$0xff]
        %v645 = vld [vmem:[%s382 + $0x78] sm:$0xff]
        %v646 = vld [vmem:[%s0] sm:$0xf]
        %v647 = vld [vmem:[%s3] sm:$0xf]
        %649 = vset.pattern.permute.xlu0 0
        %650 = vperm.xlu0 %649, %v647
        %v651 = vpop.permute.xlu0 %650
        %vm653 = vcmask 261120
        %v655 = vsel %vm653, %v646, 0
        %657 = vmatprep.subr.mxu0 0.0
        %658 = vmatpush1.msra.mxu0 0.0
        %659 = vmatprep.subr.mxu0 0.0
        %660 = vmatpush1.msra.mxu0 0.0
        %661 = vmatprep.subr.mxu0 0.0
        %662 = vmatpush1.msra.mxu0 0.0
        %663 = vmatprep.subr.mxu0 0.0
        %664 = vmatpush1.msra.mxu0 0.0
        %665 = vmatprep.subr.mxu0 0.0
        %666 = vmatpush1.msra.mxu0 0.0
        %667 = vmatprep.subr.mxu0 0.0
        %668 = vmatpush1.msra.mxu0 0.0
        %669 = vmatprep.subr.mxu0 0.0
        %670 = vmatpush1.msra.mxu0 0.0
        %671 = vmatprep.subr.mxu0 0.0
        %672 = vmatpush1.msra.mxu0 0.0
        %673 = vmatprep.subr.mxu0 0.0
        %674 = vmatpush1.msra.mxu0 0.0
        %675 = vmatprep.subr.mxu0 0.0
        %676 = vmatpush1.msra.mxu0 0.0
        %677 = vmatprep.subr.mxu0 0.0
        %678 = vmatpush1.msra.mxu0 0.0
        %679 = vmatprep.subr.mxu0 0.0
        %680 = vmatpush1.msra.mxu0 0.0
        %681 = vmatprep.subr.mxu0 %v643
        %682 = vmatpush1.msra.mxu0 %v642
        %683 = vmatprep.subr.mxu0 %v639
        %684 = vmatpush1.msra.mxu0 %v638
        %685 = vmatprep.subr.mxu0 %v635
        %686 = vmatpush1.msra.mxu0 %v634
        %687 = vmatprep.subr.mxu0 %v631
        %688 = vmatpush1.msra.mxu0 %v630
        %689 = vmatprep.subr.mxu0 0.0
        %690 = vmatpush2.msra.mxu0 0.0
        %691 = vmatprep.subr.mxu0 0.0
        %692 = vmatpush2.msra.mxu0 0.0
        %693 = vmatprep.subr.mxu0 0.0
        %694 = vmatpush2.msra.mxu0 0.0
        %695 = vmatprep.subr.mxu0 0.0
        %696 = vmatpush2.msra.mxu0 0.0
        %697 = vmatprep.subr.mxu0 0.0
        %698 = vmatpush2.msra.mxu0 0.0
        %699 = vmatprep.subr.mxu0 0.0
        %700 = vmatpush2.msra.mxu0 0.0
        %701 = vmatprep.subr.mxu0 0.0
        %702 = vmatpush2.msra.mxu0 0.0
        %703 = vmatprep.subr.mxu0 0.0
        %704 = vmatpush2.msra.mxu0 0.0
        %705 = vmatprep.subr.mxu0 0.0
        %706 = vmatpush2.msra.mxu0 0.0
        %707 = vmatprep.subr.mxu0 0.0
        %708 = vmatpush2.msra.mxu0 0.0
        %709 = vmatprep.subr.mxu0 0.0
        %710 = vmatpush2.msra.mxu0 0.0
        %711 = vmatprep.subr.mxu0 0.0
        %712 = vmatpush2.msra.mxu0 0.0
        %713 = vmatprep.subr.mxu0 0.0
        %714 = vmatpush2.msra.mxu0 0.0
        %715 = vmatprep.subr.mxu0 0.0
        %716 = vmatpush2.msra.mxu0 0.0
        %717 = vmatprep.subr.mxu0 0.0
        %718 = vmatpush2.msra.mxu0 0.0
        %719 = vmatprep.subr.mxu0 0.0
        %720 = vmatpush2.msra.mxu0 0.0
        %721 = vmatprep.mubr.f32.mxu0 0.0
        %722 = vmatmul.mubr.f32.gmra.mxu0 %v655
        %v723 = vpop.f32.mrf.mxu0
        %v724 = vadd.f32 %v651, %v723
        %v725 = vpop.f32.mrf.mxu0
        %v726 = vadd.f32 %v651, %v725
        %727 = vdwg.mxu0
        %728 = vmatprep.subr.mxu0 0.0
        %729 = vmatpush1.msra.mxu0 0.0
        %730 = vmatprep.subr.mxu0 0.0
        %731 = vmatpush1.msra.mxu0 0.0
        %732 = vmatprep.subr.mxu0 0.0
        %733 = vmatpush1.msra.mxu0 0.0
        %734 = vmatprep.subr.mxu0 0.0
        %735 = vmatpush1.msra.mxu0 0.0
        %736 = vmatprep.subr.mxu0 0.0
        %737 = vmatpush1.msra.mxu0 0.0
        %738 = vmatprep.subr.mxu0 0.0
        %739 = vmatpush1.msra.mxu0 0.0
        %740 = vmatprep.subr.mxu0 0.0
        %741 = vmatpush1.msra.mxu0 0.0
        %742 = vmatprep.subr.mxu0 0.0
        %743 = vmatpush1.msra.mxu0 0.0
        %744 = vmatprep.subr.mxu0 0.0
        %745 = vmatpush1.msra.mxu0 0.0
        %746 = vmatprep.subr.mxu0 0.0
        %747 = vmatpush1.msra.mxu0 0.0
        %748 = vmatprep.subr.mxu0 0.0
        %749 = vmatpush1.msra.mxu0 0.0
        %750 = vmatprep.subr.mxu0 0.0
        %751 = vmatpush1.msra.mxu0 0.0
        %752 = vmatprep.subr.mxu0 %v645
        %753 = vmatpush1.msra.mxu0 %v644
        %754 = vmatprep.subr.mxu0 %v641
        %755 = vmatpush1.msra.mxu0 %v640
        %756 = vmatprep.subr.mxu0 %v637
        %757 = vmatpush1.msra.mxu0 %v636
        %758 = vmatprep.subr.mxu0 %v633
        %759 = vmatpush1.msra.mxu0 %v632
        %760 = vmatprep.subr.mxu0 0.0
        %761 = vmatpush2.msra.mxu0 0.0
        %762 = vmatprep.subr.mxu0 0.0
        %763 = vmatpush2.msra.mxu0 0.0
        %764 = vmatprep.subr.mxu0 0.0
        %765 = vmatpush2.msra.mxu0 0.0
        %766 = vmatprep.subr.mxu0 0.0
        %767 = vmatpush2.msra.mxu0 0.0
        %768 = vmatprep.subr.mxu0 0.0
        %769 = vmatpush2.msra.mxu0 0.0
        %770 = vmatprep.subr.mxu0 0.0
        %771 = vmatpush2.msra.mxu0 0.0
        %772 = vmatprep.subr.mxu0 0.0
        %773 = vmatpush2.msra.mxu0 0.0
        %774 = vmatprep.subr.mxu0 0.0
        %775 = vmatpush2.msra.mxu0 0.0
        %776 = vmatprep.subr.mxu0 0.0
        %777 = vmatpush2.msra.mxu0 0.0
        %778 = vmatprep.subr.mxu0 0.0
        %779 = vmatpush2.msra.mxu0 0.0
        %780 = vmatprep.subr.mxu0 0.0
        %781 = vmatpush2.msra.mxu0 0.0
        %782 = vmatprep.subr.mxu0 0.0
        %783 = vmatpush2.msra.mxu0 0.0
        %784 = vmatprep.subr.mxu0 0.0
        %785 = vmatpush2.msra.mxu0 0.0
        %786 = vmatprep.subr.mxu0 0.0
        %787 = vmatpush2.msra.mxu0 0.0
        %788 = vmatprep.subr.mxu0 0.0
        %789 = vmatpush2.msra.mxu0 0.0
        %790 = vmatprep.subr.mxu0 0.0
        %791 = vmatpush2.msra.mxu0 0.0
        %792 = vmatprep.mubr.f32.mxu0 0.0
        %793 = vmatmul.mubr.f32.gmra.mxu0 %v655
        %v794 = vpop.f32.mrf.mxu0
        %v795 = vadd.f32 %v651, %v794
        %v796 = vpop.f32.mrf.mxu0
        %v797 = vadd.f32 %v651, %v796
        %798 = vdwg.mxu0
        %v799 = vld [vmem:[%s2] sm:$0xff]
        %v800 = vld [vmem:[%s2 + $0x8] sm:$0xff]
        %v801 = vld [vmem:[%s2 + $0x10] sm:$0xff]
        %v802 = vld [vmem:[%s2 + $0x18] sm:$0xff]
        %v803 = vld [vmem:[%s5] sm:$0xff]
        %v804 = vld [vmem:[%s5 + $0x8] sm:$0xff]
        %v805 = vld [vmem:[%s5 + $0x10] sm:$0xff]
        %v806 = vld [vmem:[%s5 + $0x18] sm:$0xff]
        %808 = vset.pattern.permute.xlu0 0
        %809 = vperm.xlu0 %808, %v803
        %v810 = vpop.permute.xlu0 %809
        %813 = vset.pattern.permute.xlu0 0
        %814 = vperm.xlu0 %813, %v804
        %v815 = vpop.permute.xlu0 %814
        %818 = vset.pattern.permute.xlu0 0
        %819 = vperm.xlu0 %818, %v805
        %v820 = vpop.permute.xlu0 %819
        %823 = vset.pattern.permute.xlu0 0
        %824 = vperm.xlu0 %823, %v806
        %v825 = vpop.permute.xlu0 %824
        %v828 = vsel %vm653, %v799, 0
        %v831 = vsel %vm653, %v800, 0
        %v834 = vsel %vm653, %v801, 0
        %v837 = vsel %vm653, %v802, 0
        %839 = vmatprep.subr.mxu0 0.0
        %840 = vmatpush1.msra.mxu0 0.0
        %841 = vmatprep.subr.mxu0 0.0
        %842 = vmatpush1.msra.mxu0 0.0
        %843 = vmatprep.subr.mxu0 0.0
        %844 = vmatpush1.msra.mxu0 0.0
        %845 = vmatprep.subr.mxu0 0.0
        %846 = vmatpush1.msra.mxu0 0.0
        %847 = vmatprep.subr.mxu0 0.0
        %848 = vmatpush1.msra.mxu0 0.0
        %849 = vmatprep.subr.mxu0 0.0
        %850 = vmatpush1.msra.mxu0 0.0
        %851 = vmatprep.subr.mxu0 0.0
        %852 = vmatpush1.msra.mxu0 0.0
        %853 = vmatprep.subr.mxu0 0.0
        %854 = vmatpush1.msra.mxu0 0.0
        %855 = vmatprep.subr.mxu0 0.0
        %856 = vmatpush1.msra.mxu0 0.0
        %857 = vmatprep.subr.mxu0 0.0
        %858 = vmatpush1.msra.mxu0 0.0
        %859 = vmatprep.subr.mxu0 0.0
        %860 = vmatpush1.msra.mxu0 0.0
        %861 = vmatprep.subr.mxu0 0.0
        %862 = vmatpush1.msra.mxu0 0.0
        %863 = vmatprep.subr.mxu0 %v643
        %864 = vmatpush1.msra.mxu0 %v642
        %865 = vmatprep.subr.mxu0 %v639
        %866 = vmatpush1.msra.mxu0 %v638
        %867 = vmatprep.subr.mxu0 %v635
        %868 = vmatpush1.msra.mxu0 %v634
        %869 = vmatprep.subr.mxu0 %v631
        %870 = vmatpush1.msra.mxu0 %v630
        %871 = vmatprep.subr.mxu0 0.0
        %872 = vmatpush2.msra.mxu0 0.0
        %873 = vmatprep.subr.mxu0 0.0
        %874 = vmatpush2.msra.mxu0 0.0
        %875 = vmatprep.subr.mxu0 0.0
        %876 = vmatpush2.msra.mxu0 0.0
        %877 = vmatprep.subr.mxu0 0.0
        %878 = vmatpush2.msra.mxu0 0.0
        %879 = vmatprep.subr.mxu0 0.0
        %880 = vmatpush2.msra.mxu0 0.0
        %881 = vmatprep.subr.mxu0 0.0
        %882 = vmatpush2.msra.mxu0 0.0
        %883 = vmatprep.subr.mxu0 0.0
        %884 = vmatpush2.msra.mxu0 0.0
        %885 = vmatprep.subr.mxu0 0.0
        %886 = vmatpush2.msra.mxu0 0.0
        %887 = vmatprep.subr.mxu0 0.0
        %888 = vmatpush2.msra.mxu0 0.0
        %889 = vmatprep.subr.mxu0 0.0
        %890 = vmatpush2.msra.mxu0 0.0
        %891 = vmatprep.subr.mxu0 0.0
        %892 = vmatpush2.msra.mxu0 0.0
        %893 = vmatprep.subr.mxu0 0.0
        %894 = vmatpush2.msra.mxu0 0.0
        %895 = vmatprep.subr.mxu0 0.0
        %896 = vmatpush2.msra.mxu0 0.0
        %897 = vmatprep.subr.mxu0 0.0
        %898 = vmatpush2.msra.mxu0 0.0
        %899 = vmatprep.subr.mxu0 0.0
        %900 = vmatpush2.msra.mxu0 0.0
        %901 = vmatprep.subr.mxu0 0.0
        %902 = vmatpush2.msra.mxu0 0.0
        %903 = vmatprep.mubr.f32.mxu0 0.0
        %904 = vmatmul.mubr.f32.gmra.mxu0 %v828
        %v905 = vpop.f32.mrf.mxu0
        %v906 = vadd.f32 %v810, %v905
        %v907 = vpop.f32.mrf.mxu0
        %v908 = vadd.f32 %v810, %v907
        %909 = vmatprep.mubr.f32.mxu0 0.0
        %910 = vmatmul.mubr.f32.gmra.mxu0 %v831
        %v911 = vpop.f32.mrf.mxu0
        %v912 = vadd.f32 %v815, %v911
        %v913 = vpop.f32.mrf.mxu0
        %v914 = vadd.f32 %v815, %v913
        %915 = vmatprep.mubr.f32.mxu0 0.0
        %916 = vmatmul.mubr.f32.gmra.mxu0 %v834
        %v917 = vpop.f32.mrf.mxu0
        %v918 = vadd.f32 %v820, %v917
        %v919 = vpop.f32.mrf.mxu0
        %v920 = vadd.f32 %v820, %v919
        %921 = vmatprep.mubr.f32.mxu0 0.0
        %922 = vmatmul.mubr.f32.gmra.mxu0 %v837
        %v923 = vpop.f32.mrf.mxu0
        %v924 = vadd.f32 %v825, %v923
        %v925 = vpop.f32.mrf.mxu0
        %v926 = vadd.f32 %v825, %v925
        %927 = vdwg.mxu0
        %928 = vmatprep.subr.mxu0 0.0
        %929 = vmatpush1.msra.mxu0 0.0
        %930 = vmatprep.subr.mxu0 0.0
        %931 = vmatpush1.msra.mxu0 0.0
        %932 = vmatprep.subr.mxu0 0.0
        %933 = vmatpush1.msra.mxu0 0.0
        %934 = vmatprep.subr.mxu0 0.0
        %935 = vmatpush1.msra.mxu0 0.0
        %936 = vmatprep.subr.mxu0 0.0
        %937 = vmatpush1.msra.mxu0 0.0
        %938 = vmatprep.subr.mxu0 0.0
        %939 = vmatpush1.msra.mxu0 0.0
        %940 = vmatprep.subr.mxu0 0.0
        %941 = vmatpush1.msra.mxu0 0.0
        %942 = vmatprep.subr.mxu0 0.0
        %943 = vmatpush1.msra.mxu0 0.0
        %944 = vmatprep.subr.mxu0 0.0
        %945 = vmatpush1.msra.mxu0 0.0
        %946 = vmatprep.subr.mxu0 0.0
        %947 = vmatpush1.msra.mxu0 0.0
        %948 = vmatprep.subr.mxu0 0.0
        %949 = vmatpush1.msra.mxu0 0.0
        %950 = vmatprep.subr.mxu0 0.0
        %951 = vmatpush1.msra.mxu0 0.0
        %952 = vmatprep.subr.mxu0 %v645
        %953 = vmatpush1.msra.mxu0 %v644
        %954 = vmatprep.subr.mxu0 %v641
        %955 = vmatpush1.msra.mxu0 %v640
        %956 = vmatprep.subr.mxu0 %v637
        %957 = vmatpush1.msra.mxu0 %v636
        %958 = vmatprep.subr.mxu0 %v633
        %959 = vmatpush1.msra.mxu0 %v632
        %960 = vmatprep.subr.mxu0 0.0
        %961 = vmatpush2.msra.mxu0 0.0
        %962 = vmatprep.subr.mxu0 0.0
        %963 = vmatpush2.msra.mxu0 0.0
        %964 = vmatprep.subr.mxu0 0.0
        %965 = vmatpush2.msra.mxu0 0.0
        %966 = vmatprep.subr.mxu0 0.0
        %967 = vmatpush2.msra.mxu0 0.0
        %968 = vmatprep.subr.mxu0 0.0
        %969 = vmatpush2.msra.mxu0 0.0
        %970 = vmatprep.subr.mxu0 0.0
        %971 = vmatpush2.msra.mxu0 0.0
        %972 = vmatprep.subr.mxu0 0.0
        %973 = vmatpush2.msra.mxu0 0.0
        %974 = vmatprep.subr.mxu0 0.0
        %975 = vmatpush2.msra.mxu0 0.0
        %976 = vmatprep.subr.mxu0 0.0
        %977 = vmatpush2.msra.mxu0 0.0
        %978 = vmatprep.subr.mxu0 0.0
        %979 = vmatpush2.msra.mxu0 0.0
        %980 = vmatprep.subr.mxu0 0.0
        %981 = vmatpush2.msra.mxu0 0.0
        %982 = vmatprep.subr.mxu0 0.0
        %983 = vmatpush2.msra.mxu0 0.0
        %984 = vmatprep.subr.mxu0 0.0
        %985 = vmatpush2.msra.mxu0 0.0
        %986 = vmatprep.subr.mxu0 0.0
        %987 = vmatpush2.msra.mxu0 0.0
        %988 = vmatprep.subr.mxu0 0.0
        %989 = vmatpush2.msra.mxu0 0.0
        %990 = vmatprep.subr.mxu0 0.0
        %991 = vmatpush2.msra.mxu0 0.0
        %992 = vmatprep.mubr.f32.mxu0 0.0
        %993 = vmatmul.mubr.f32.gmra.mxu0 %v828
        %v994 = vpop.f32.mrf.mxu0
        %v995 = vadd.f32 %v810, %v994
        %v996 = vpop.f32.mrf.mxu0
        %v997 = vadd.f32 %v810, %v996
        %998 = vmatprep.mubr.f32.mxu0 0.0
        %999 = vmatmul.mubr.f32.gmra.mxu0 %v831
        %v1000 = vpop.f32.mrf.mxu0
        %v1001 = vadd.f32 %v815, %v1000
        %v1002 = vpop.f32.mrf.mxu0
        %v1003 = vadd.f32 %v815, %v1002
        %1004 = vmatprep.mubr.f32.mxu0 0.0
        %1005 = vmatmul.mubr.f32.gmra.mxu0 %v834
        %v1006 = vpop.f32.mrf.mxu0
        %v1007 = vadd.f32 %v820, %v1006
        %v1008 = vpop.f32.mrf.mxu0
        %v1009 = vadd.f32 %v820, %v1008
        %1010 = vmatprep.mubr.f32.mxu0 0.0
        %1011 = vmatmul.mubr.f32.gmra.mxu0 %v837
        %v1012 = vpop.f32.mrf.mxu0
        %v1013 = vadd.f32 %v825, %v1012
        %v1014 = vpop.f32.mrf.mxu0
        %v1015 = vadd.f32 %v825, %v1014
        %1016 = vdwg.mxu0
        %v1017 = vld [vmem:[#allocation2] sm:$0xff]
        %v1018 = vld [vmem:[#allocation2 + $0x8] sm:$0xff]
        %1019 = vxpose.xlu0.b32.start [1/16] %v724, 128
        %1020 = vxpose.xlu0.b32.cont [2/16] 0.0, 128
        %1021 = vxpose.xlu0.b32.cont [3/16] 0.0, 128
        %1022 = vxpose.xlu0.b32.cont [4/16] 0.0, 128
        %1023 = vxpose.xlu0.b32.cont [5/16] 0.0, 128
        %1024 = vxpose.xlu0.b32.cont [6/16] 0.0, 128
        %1025 = vxpose.xlu0.b32.cont [7/16] 0.0, 128
        %1026 = vxpose.xlu0.b32.cont [8/16] 0.0, 128
        %1027 = vxpose.xlu0.b32.cont [9/16] 0.0, 128
        %1028 = vxpose.xlu0.b32.cont [10/16] 0.0, 128
        %1029 = vxpose.xlu0.b32.cont [11/16] 0.0, 128
        %1030 = vxpose.xlu0.b32.cont [12/16] 0.0, 128
        %1031 = vxpose.xlu0.b32.cont [13/16] 0.0, 128
        %1032 = vxpose.xlu0.b32.cont [14/16] 0.0, 128
        %1033 = vxpose.xlu0.b32.cont [15/16] 0.0, 128
        %1034 = vxpose.xlu0.b32.end [16/16] 0.0, 128
        %v1035 = vpop.trf.xlu0
        %v1036 = vpop.trf.xlu0
        %v1037 = vpop.trf.xlu0
        %v1038 = vpop.trf.xlu0
        %v1039 = vpop.trf.xlu0
        %v1040 = vpop.trf.xlu0
        %v1041 = vpop.trf.xlu0
        %v1042 = vpop.trf.xlu0
        %v1043 = vpop.trf.xlu0
        %v1044 = vpop.trf.xlu0
        %v1045 = vpop.trf.xlu0
        %v1046 = vpop.trf.xlu0
        %v1047 = vpop.trf.xlu0
        %v1048 = vpop.trf.xlu0
        %v1049 = vpop.trf.xlu0
        %v1050 = vpop.trf.xlu0
        %1051 = vxpose.xlu0.b32.start [1/16] %v726, 128
        %1052 = vxpose.xlu0.b32.cont [2/16] 0.0, 128
        %1053 = vxpose.xlu0.b32.cont [3/16] 0.0, 128
        %1054 = vxpose.xlu0.b32.cont [4/16] 0.0, 128
        %1055 = vxpose.xlu0.b32.cont [5/16] 0.0, 128
        %1056 = vxpose.xlu0.b32.cont [6/16] 0.0, 128
        %1057 = vxpose.xlu0.b32.cont [7/16] 0.0, 128
        %1058 = vxpose.xlu0.b32.cont [8/16] 0.0, 128
        %1059 = vxpose.xlu0.b32.cont [9/16] 0.0, 128
        %1060 = vxpose.xlu0.b32.cont [10/16] 0.0, 128
        %1061 = vxpose.xlu0.b32.cont [11/16] 0.0, 128
        %1062 = vxpose.xlu0.b32.cont [12/16] 0.0, 128
        %1063 = vxpose.xlu0.b32.cont [13/16] 0.0, 128
        %1064 = vxpose.xlu0.b32.cont [14/16] 0.0, 128
        %1065 = vxpose.xlu0.b32.cont [15/16] 0.0, 128
        %1066 = vxpose.xlu0.b32.end [16/16] 0.0, 128
        %v1067 = vpop.trf.xlu0
        %v1068 = vpop.trf.xlu0
        %v1069 = vpop.trf.xlu0
        %v1070 = vpop.trf.xlu0
        %v1071 = vpop.trf.xlu0
        %v1072 = vpop.trf.xlu0
        %v1073 = vpop.trf.xlu0
        %v1074 = vpop.trf.xlu0
        %v1075 = vpop.trf.xlu0
        %v1076 = vpop.trf.xlu0
        %v1077 = vpop.trf.xlu0
        %v1078 = vpop.trf.xlu0
        %v1079 = vpop.trf.xlu0
        %v1080 = vpop.trf.xlu0
        %v1081 = vpop.trf.xlu0
        %v1082 = vpop.trf.xlu0
        %1083 = vxpose.xlu0.b32.start [1/16] %v795, 128
        %1084 = vxpose.xlu0.b32.cont [2/16] 0.0, 128
        %1085 = vxpose.xlu0.b32.cont [3/16] 0.0, 128
        %1086 = vxpose.xlu0.b32.cont [4/16] 0.0, 128
        %1087 = vxpose.xlu0.b32.cont [5/16] 0.0, 128
        %1088 = vxpose.xlu0.b32.cont [6/16] 0.0, 128
        %1089 = vxpose.xlu0.b32.cont [7/16] 0.0, 128
        %1090 = vxpose.xlu0.b32.cont [8/16] 0.0, 128
        %1091 = vxpose.xlu0.b32.cont [9/16] 0.0, 128
        %1092 = vxpose.xlu0.b32.cont [10/16] 0.0, 128
        %1093 = vxpose.xlu0.b32.cont [11/16] 0.0, 128
        %1094 = vxpose.xlu0.b32.cont [12/16] 0.0, 128
        %1095 = vxpose.xlu0.b32.cont [13/16] 0.0, 128
        %1096 = vxpose.xlu0.b32.cont [14/16] 0.0, 128
        %1097 = vxpose.xlu0.b32.cont [15/16] 0.0, 128
        %1098 = vxpose.xlu0.b32.end [16/16] 0.0, 128
        %v1099 = vpop.trf.xlu0
        %v1100 = vpop.trf.xlu0
        %v1101 = vpop.trf.xlu0
        %v1102 = vpop.trf.xlu0
        %v1103 = vpop.trf.xlu0
        %v1104 = vpop.trf.xlu0
        %v1105 = vpop.trf.xlu0
        %v1106 = vpop.trf.xlu0
        %v1107 = vpop.trf.xlu0
        %v1108 = vpop.trf.xlu0
        %v1109 = vpop.trf.xlu0
        %v1110 = vpop.trf.xlu0
        %v1111 = vpop.trf.xlu0
        %v1112 = vpop.trf.xlu0
        %v1113 = vpop.trf.xlu0
        %v1114 = vpop.trf.xlu0
        %1115 = vxpose.xlu0.b32.start [1/16] %v797, 128
        %1116 = vxpose.xlu0.b32.cont [2/16] 0.0, 128
        %1117 = vxpose.xlu0.b32.cont [3/16] 0.0, 128
        %1118 = vxpose.xlu0.b32.cont [4/16] 0.0, 128
        %1119 = vxpose.xlu0.b32.cont [5/16] 0.0, 128
        %1120 = vxpose.xlu0.b32.cont [6/16] 0.0, 128
        %1121 = vxpose.xlu0.b32.cont [7/16] 0.0, 128
        %1122 = vxpose.xlu0.b32.cont [8/16] 0.0, 128
        %1123 = vxpose.xlu0.b32.cont [9/16] 0.0, 128
        %1124 = vxpose.xlu0.b32.cont [10/16] 0.0, 128
        %1125 = vxpose.xlu0.b32.cont [11/16] 0.0, 128
        %1126 = vxpose.xlu0.b32.cont [12/16] 0.0, 128
        %1127 = vxpose.xlu0.b32.cont [13/16] 0.0, 128
        %1128 = vxpose.xlu0.b32.cont [14/16] 0.0, 128
        %1129 = vxpose.xlu0.b32.cont [15/16] 0.0, 128
        %1130 = vxpose.xlu0.b32.end [16/16] 0.0, 128
        %v1131 = vpop.trf.xlu0
        %v1132 = vpop.trf.xlu0
        %v1133 = vpop.trf.xlu0
        %v1134 = vpop.trf.xlu0
        %v1135 = vpop.trf.xlu0
        %v1136 = vpop.trf.xlu0
        %v1137 = vpop.trf.xlu0
        %v1138 = vpop.trf.xlu0
        %v1139 = vpop.trf.xlu0
        %v1140 = vpop.trf.xlu0
        %v1141 = vpop.trf.xlu0
        %v1142 = vpop.trf.xlu0
        %v1143 = vpop.trf.xlu0
        %v1144 = vpop.trf.xlu0
        %v1145 = vpop.trf.xlu0
        %v1146 = vpop.trf.xlu0
        %v1149 = vcombine.high %v1017, %v1017
        %v1150 = vcombine.high %v1018, %v1018
        %vm1151 = vcmask 31744
        %v1153 = vsel %vm1151, %v1035, 0
        %v1156 = vsel %vm1151, %v1036, 0
        %v1159 = vsel %vm1151, %v1037, 0
        %v1162 = vsel %vm1151, %v1038, 0
        %v1165 = vsel %vm1151, %v1039, 0
        %v1168 = vsel %vm1151, %v1040, 0
        %v1171 = vsel %vm1151, %v1041, 0
        %v1174 = vsel %vm1151, %v1042, 0
        %v1177 = vsel %vm1151, %v1043, 0
        %v1180 = vsel %vm1151, %v1044, 0
        %v1183 = vsel %vm1151, %v1045, 0
        %v1186 = vsel %vm1151, %v1046, 0
        %v1189 = vsel %vm1151, %v1047, 0
        %v1192 = vsel %vm1151, %v1048, 0
        %v1195 = vsel %vm1151, %v1049, 0
        %v1198 = vsel %vm1151, %v1050, 0
        %v1201 = vsel %vm1151, %v1067, 0
        %v1204 = vsel %vm1151, %v1068, 0
        %v1207 = vsel %vm1151, %v1069, 0
        %v1210 = vsel %vm1151, %v1070, 0
        %v1213 = vsel %vm1151, %v1071, 0
        %v1216 = vsel %vm1151, %v1072, 0
        %v1219 = vsel %vm1151, %v1073, 0
        %v1222 = vsel %vm1151, %v1074, 0
        %v1225 = vsel %vm1151, %v1075, 0
        %v1228 = vsel %vm1151, %v1076, 0
        %v1231 = vsel %vm1151, %v1077, 0
        %v1234 = vsel %vm1151, %v1078, 0
        %v1237 = vsel %vm1151, %v1079, 0
        %v1240 = vsel %vm1151, %v1080, 0
        %v1243 = vsel %vm1151, %v1081, 0
        %v1246 = vsel %vm1151, %v1082, 0
        %v1249 = vsel %vm1151, %v1099, 0
        %v1252 = vsel %vm1151, %v1100, 0
        %v1255 = vsel %vm1151, %v1101, 0
        %v1258 = vsel %vm1151, %v1102, 0
        %v1261 = vsel %vm1151, %v1103, 0
        %v1264 = vsel %vm1151, %v1104, 0
        %v1267 = vsel %vm1151, %v1105, 0
        %v1270 = vsel %vm1151, %v1106, 0
        %v1273 = vsel %vm1151, %v1107, 0
        %v1276 = vsel %vm1151, %v1108, 0
        %v1279 = vsel %vm1151, %v1109, 0
        %v1282 = vsel %vm1151, %v1110, 0
        %v1285 = vsel %vm1151, %v1111, 0
        %v1288 = vsel %vm1151, %v1112, 0
        %v1291 = vsel %vm1151, %v1113, 0
        %v1294 = vsel %vm1151, %v1114, 0
        %v1297 = vsel %vm1151, %v1131, 0
        %v1300 = vsel %vm1151, %v1132, 0
        %v1303 = vsel %vm1151, %v1133, 0
        %v1306 = vsel %vm1151, %v1134, 0
        %v1309 = vsel %vm1151, %v1135, 0
        %v1312 = vsel %vm1151, %v1136, 0
        %v1315 = vsel %vm1151, %v1137, 0
        %v1318 = vsel %vm1151, %v1138, 0
        %v1321 = vsel %vm1151, %v1139, 0
        %v1324 = vsel %vm1151, %v1140, 0
        %v1327 = vsel %vm1151, %v1141, 0
        %v1330 = vsel %vm1151, %v1142, 0
        %v1333 = vsel %vm1151, %v1143, 0
        %v1336 = vsel %vm1151, %v1144, 0
        %v1339 = vsel %vm1151, %v1145, 0
        %v1342 = vsel %vm1151, %v1146, 0
        %vm1344 = vcmask 1043456
        %v1345 = vsel %vm1344, %v1017, 0
        %v1347 = vsel %vm1344, %v1149, 0
        %v1349 = vsel %vm1344, %v1018, 0
        %v1351 = vsel %vm1344, %v1150, 0
        %1353 = vmatprep.subr.mxu0 0.0
        %1354 = vmatpush1.msra.mxu0 0.0
        %1355 = vmatprep.subr.mxu0 0.0
        %1356 = vmatpush1.msra.mxu0 0.0
        %1357 = vmatprep.subr.mxu0 0.0
        %1358 = vmatpush1.msra.mxu0 0.0
        %1359 = vmatprep.subr.mxu0 0.0
        %1360 = vmatpush1.msra.mxu0 0.0
        %1361 = vmatprep.subr.mxu0 0.0
        %1362 = vmatpush1.msra.mxu0 0.0
        %1363 = vmatprep.subr.mxu0 0.0
        %1364 = vmatpush1.msra.mxu0 0.0
        %1365 = vmatprep.subr.mxu0 0.0
        %1366 = vmatpush1.msra.mxu0 0.0
        %1367 = vmatprep.subr.mxu0 0.0
        %1368 = vmatpush1.msra.mxu0 0.0
        %1369 = vmatprep.subr.mxu0 0.0
        %1370 = vmatpush1.msra.mxu0 0.0
        %1371 = vmatprep.subr.mxu0 0.0
        %1372 = vmatpush1.msra.mxu0 0.0
        %1373 = vmatprep.subr.mxu0 0.0
        %1374 = vmatpush1.msra.mxu0 0.0
        %1375 = vmatprep.subr.mxu0 0.0
        %1376 = vmatpush1.msra.mxu0 0.0
        %1377 = vmatprep.subr.mxu0 0.0
        %1378 = vmatpush1.msra.mxu0 0.0
        %1379 = vmatprep.subr.mxu0 0.0
        %1380 = vmatpush1.msra.mxu0 0.0
        %1381 = vmatprep.subr.mxu0 0.0
        %1382 = vmatpush1.msra.mxu0 0.0
        %1383 = vmatprep.subr.mxu0 %v1347
        %1384 = vmatpush1.msra.mxu0 %v1345
        %1385 = vmatprep.subr.mxu0 0.0
        %1386 = vmatpush2.msra.mxu0 0.0
        %1387 = vmatprep.subr.mxu0 0.0
        %1388 = vmatpush2.msra.mxu0 0.0
        %1389 = vmatprep.subr.mxu0 0.0
        %1390 = vmatpush2.msra.mxu0 0.0
        %1391 = vmatprep.subr.mxu0 0.0
        %1392 = vmatpush2.msra.mxu0 0.0
        %1393 = vmatprep.subr.mxu0 0.0
        %1394 = vmatpush2.msra.mxu0 0.0
        %1395 = vmatprep.subr.mxu0 0.0
        %1396 = vmatpush2.msra.mxu0 0.0
        %1397 = vmatprep.subr.mxu0 0.0
        %1398 = vmatpush2.msra.mxu0 0.0
        %1399 = vmatprep.subr.mxu0 0.0
        %1400 = vmatpush2.msra.mxu0 0.0
        %1401 = vmatprep.subr.mxu0 0.0
        %1402 = vmatpush2.msra.mxu0 0.0
        %1403 = vmatprep.subr.mxu0 0.0
        %1404 = vmatpush2.msra.mxu0 0.0
        %1405 = vmatprep.subr.mxu0 0.0
        %1406 = vmatpush2.msra.mxu0 0.0
        %1407 = vmatprep.subr.mxu0 0.0
        %1408 = vmatpush2.msra.mxu0 0.0
        %1409 = vmatprep.subr.mxu0 0.0
        %1410 = vmatpush2.msra.mxu0 0.0
        %1411 = vmatprep.subr.mxu0 0.0
        %1412 = vmatpush2.msra.mxu0 0.0
        %1413 = vmatprep.subr.mxu0 0.0
        %1414 = vmatpush2.msra.mxu0 0.0
        %1415 = vmatprep.subr.mxu0 0.0
        %1416 = vmatpush2.msra.mxu0 0.0
        %1417 = vmatprep.mubr.f32.mxu0 0.0
        %1418 = vmatmul.mubr.f32.gmra.mxu0 %v1153
        %v1419 = vpop.f32.mrf.mxu0
        %v1420 = vadd.f32 0.0, %v1419
        %v1421 = vpop.f32.mrf.mxu0
        %v1422 = vadd.f32 0.0, %v1421
        %1423 = vmatprep.mubr.f32.mxu0 0.0
        %1424 = vmatmul.mubr.f32.gmra.mxu0 %v1156
        %v1425 = vpop.f32.mrf.mxu0
        %v1426 = vadd.f32 0.0, %v1425
        %v1427 = vpop.f32.mrf.mxu0
        %v1428 = vadd.f32 0.0, %v1427
        %1429 = vmatprep.mubr.f32.mxu0 0.0
        %1430 = vmatmul.mubr.f32.gmra.mxu0 %v1159
        %v1431 = vpop.f32.mrf.mxu0
        %v1432 = vadd.f32 0.0, %v1431
        %v1433 = vpop.f32.mrf.mxu0
        %v1434 = vadd.f32 0.0, %v1433
        %1435 = vmatprep.mubr.f32.mxu0 0.0
        %1436 = vmatmul.mubr.f32.gmra.mxu0 %v1162
        %v1437 = vpop.f32.mrf.mxu0
        %v1438 = vadd.f32 0.0, %v1437
        %v1439 = vpop.f32.mrf.mxu0
        %v1440 = vadd.f32 0.0, %v1439
        %1441 = vmatprep.mubr.f32.mxu0 0.0
        %1442 = vmatmul.mubr.f32.gmra.mxu0 %v1165
        %v1443 = vpop.f32.mrf.mxu0
        %v1444 = vadd.f32 0.0, %v1443
        %v1445 = vpop.f32.mrf.mxu0
        %v1446 = vadd.f32 0.0, %v1445
        %1447 = vmatprep.mubr.f32.mxu0 0.0
        %1448 = vmatmul.mubr.f32.gmra.mxu0 %v1168
        %v1449 = vpop.f32.mrf.mxu0
        %v1450 = vadd.f32 0.0, %v1449
        %v1451 = vpop.f32.mrf.mxu0
        %v1452 = vadd.f32 0.0, %v1451
        %1453 = vmatprep.mubr.f32.mxu0 0.0
        %1454 = vmatmul.mubr.f32.gmra.mxu0 %v1171
        %v1455 = vpop.f32.mrf.mxu0
        %v1456 = vadd.f32 0.0, %v1455
        %v1457 = vpop.f32.mrf.mxu0
        %v1458 = vadd.f32 0.0, %v1457
        %1459 = vmatprep.mubr.f32.mxu0 0.0
        %1460 = vmatmul.mubr.f32.gmra.mxu0 %v1174
        %v1461 = vpop.f32.mrf.mxu0
        %v1462 = vadd.f32 0.0, %v1461
        %v1463 = vpop.f32.mrf.mxu0
        %v1464 = vadd.f32 0.0, %v1463
        %1465 = vmatprep.mubr.f32.mxu0 0.0
        %1466 = vmatmul.mubr.f32.gmra.mxu0 %v1177
        %v1467 = vpop.f32.mrf.mxu0
        %v1468 = vadd.f32 0.0, %v1467
        %v1469 = vpop.f32.mrf.mxu0
        %v1470 = vadd.f32 0.0, %v1469
        %1471 = vmatprep.mubr.f32.mxu0 0.0
        %1472 = vmatmul.mubr.f32.gmra.mxu0 %v1180
        %v1473 = vpop.f32.mrf.mxu0
        %v1474 = vadd.f32 0.0, %v1473
        %v1475 = vpop.f32.mrf.mxu0
        %v1476 = vadd.f32 0.0, %v1475
        %1477 = vmatprep.mubr.f32.mxu0 0.0
        %1478 = vmatmul.mubr.f32.gmra.mxu0 %v1183
        %v1479 = vpop.f32.mrf.mxu0
        %v1480 = vadd.f32 0.0, %v1479
        %v1481 = vpop.f32.mrf.mxu0
        %v1482 = vadd.f32 0.0, %v1481
        %1483 = vmatprep.mubr.f32.mxu0 0.0
        %1484 = vmatmul.mubr.f32.gmra.mxu0 %v1186
        %v1485 = vpop.f32.mrf.mxu0
        %v1486 = vadd.f32 0.0, %v1485
        %v1487 = vpop.f32.mrf.mxu0
        %v1488 = vadd.f32 0.0, %v1487
        %1489 = vmatprep.mubr.f32.mxu0 0.0
        %1490 = vmatmul.mubr.f32.gmra.mxu0 %v1189
        %v1491 = vpop.f32.mrf.mxu0
        %v1492 = vadd.f32 0.0, %v1491
        %v1493 = vpop.f32.mrf.mxu0
        %v1494 = vadd.f32 0.0, %v1493
        %1495 = vmatprep.mubr.f32.mxu0 0.0
        %1496 = vmatmul.mubr.f32.gmra.mxu0 %v1192
        %v1497 = vpop.f32.mrf.mxu0
        %v1498 = vadd.f32 0.0, %v1497
        %v1499 = vpop.f32.mrf.mxu0
        %v1500 = vadd.f32 0.0, %v1499
        %1501 = vmatprep.mubr.f32.mxu0 0.0
        %1502 = vmatmul.mubr.f32.gmra.mxu0 %v1195
        %v1503 = vpop.f32.mrf.mxu0
        %v1504 = vadd.f32 0.0, %v1503
        %v1505 = vpop.f32.mrf.mxu0
        %v1506 = vadd.f32 0.0, %v1505
        %1507 = vmatprep.mubr.f32.mxu0 0.0
        %1508 = vmatmul.mubr.f32.gmra.mxu0 %v1198
        %v1509 = vpop.f32.mrf.mxu0
        %v1510 = vadd.f32 0.0, %v1509
        %v1511 = vpop.f32.mrf.mxu0
        %v1512 = vadd.f32 0.0, %v1511
        %1513 = vmatprep.mubr.f32.mxu0 0.0
        %1514 = vmatmul.mubr.f32.gmra.mxu0 %v1201
        %v1515 = vpop.f32.mrf.mxu0
        %v1516 = vadd.f32 0.0, %v1515
        %v1517 = vpop.f32.mrf.mxu0
        %v1518 = vadd.f32 0.0, %v1517
        %1519 = vmatprep.mubr.f32.mxu0 0.0
        %1520 = vmatmul.mubr.f32.gmra.mxu0 %v1204
        %v1521 = vpop.f32.mrf.mxu0
        %v1522 = vadd.f32 0.0, %v1521
        %v1523 = vpop.f32.mrf.mxu0
        %v1524 = vadd.f32 0.0, %v1523
        %1525 = vmatprep.mubr.f32.mxu0 0.0
        %1526 = vmatmul.mubr.f32.gmra.mxu0 %v1207
        %v1527 = vpop.f32.mrf.mxu0
        %v1528 = vadd.f32 0.0, %v1527
        %v1529 = vpop.f32.mrf.mxu0
        %v1530 = vadd.f32 0.0, %v1529
        %1531 = vmatprep.mubr.f32.mxu0 0.0
        %1532 = vmatmul.mubr.f32.gmra.mxu0 %v1210
        %v1533 = vpop.f32.mrf.mxu0
        %v1534 = vadd.f32 0.0, %v1533
        %v1535 = vpop.f32.mrf.mxu0
        %v1536 = vadd.f32 0.0, %v1535
        %1537 = vmatprep.mubr.f32.mxu0 0.0
        %1538 = vmatmul.mubr.f32.gmra.mxu0 %v1213
        %v1539 = vpop.f32.mrf.mxu0
        %v1540 = vadd.f32 0.0, %v1539
        %v1541 = vpop.f32.mrf.mxu0
        %v1542 = vadd.f32 0.0, %v1541
        %1543 = vmatprep.mubr.f32.mxu0 0.0
        %1544 = vmatmul.mubr.f32.gmra.mxu0 %v1216
        %v1545 = vpop.f32.mrf.mxu0
        %v1546 = vadd.f32 0.0, %v1545
        %v1547 = vpop.f32.mrf.mxu0
        %v1548 = vadd.f32 0.0, %v1547
        %1549 = vmatprep.mubr.f32.mxu0 0.0
        %1550 = vmatmul.mubr.f32.gmra.mxu0 %v1219
        %v1551 = vpop.f32.mrf.mxu0
        %v1552 = vadd.f32 0.0, %v1551
        %v1553 = vpop.f32.mrf.mxu0
        %v1554 = vadd.f32 0.0, %v1553
        %1555 = vmatprep.mubr.f32.mxu0 0.0
        %1556 = vmatmul.mubr.f32.gmra.mxu0 %v1222
        %v1557 = vpop.f32.mrf.mxu0
        %v1558 = vadd.f32 0.0, %v1557
        %v1559 = vpop.f32.mrf.mxu0
        %v1560 = vadd.f32 0.0, %v1559
        %1561 = vmatprep.mubr.f32.mxu0 0.0
        %1562 = vmatmul.mubr.f32.gmra.mxu0 %v1225
        %v1563 = vpop.f32.mrf.mxu0
        %v1564 = vadd.f32 0.0, %v1563
        %v1565 = vpop.f32.mrf.mxu0
        %v1566 = vadd.f32 0.0, %v1565
        %1567 = vmatprep.mubr.f32.mxu0 0.0
        %1568 = vmatmul.mubr.f32.gmra.mxu0 %v1228
        %v1569 = vpop.f32.mrf.mxu0
        %v1570 = vadd.f32 0.0, %v1569
        %v1571 = vpop.f32.mrf.mxu0
        %v1572 = vadd.f32 0.0, %v1571
        %1573 = vmatprep.mubr.f32.mxu0 0.0
        %1574 = vmatmul.mubr.f32.gmra.mxu0 %v1231
        %v1575 = vpop.f32.mrf.mxu0
        %v1576 = vadd.f32 0.0, %v1575
        %v1577 = vpop.f32.mrf.mxu0
        %v1578 = vadd.f32 0.0, %v1577
        %1579 = vmatprep.mubr.f32.mxu0 0.0
        %1580 = vmatmul.mubr.f32.gmra.mxu0 %v1234
        %v1581 = vpop.f32.mrf.mxu0
        %v1582 = vadd.f32 0.0, %v1581
        %v1583 = vpop.f32.mrf.mxu0
        %v1584 = vadd.f32 0.0, %v1583
        %1585 = vmatprep.mubr.f32.mxu0 0.0
        %1586 = vmatmul.mubr.f32.gmra.mxu0 %v1237
        %v1587 = vpop.f32.mrf.mxu0
        %v1588 = vadd.f32 0.0, %v1587
        %v1589 = vpop.f32.mrf.mxu0
        %v1590 = vadd.f32 0.0, %v1589
        %1591 = vmatprep.mubr.f32.mxu0 0.0
        %1592 = vmatmul.mubr.f32.gmra.mxu0 %v1240
        %v1593 = vpop.f32.mrf.mxu0
        %v1594 = vadd.f32 0.0, %v1593
        %v1595 = vpop.f32.mrf.mxu0
        %v1596 = vadd.f32 0.0, %v1595
        %1597 = vmatprep.mubr.f32.mxu0 0.0
        %1598 = vmatmul.mubr.f32.gmra.mxu0 %v1243
        %v1599 = vpop.f32.mrf.mxu0
        %v1600 = vadd.f32 0.0, %v1599
        %v1601 = vpop.f32.mrf.mxu0
        %v1602 = vadd.f32 0.0, %v1601
        %1603 = vmatprep.mubr.f32.mxu0 0.0
        %1604 = vmatmul.mubr.f32.gmra.mxu0 %v1246
        %v1605 = vpop.f32.mrf.mxu0
        %v1606 = vadd.f32 0.0, %v1605
        %v1607 = vpop.f32.mrf.mxu0
        %v1608 = vadd.f32 0.0, %v1607
        %1609 = vmatprep.mubr.f32.mxu0 0.0
        %1610 = vmatmul.mubr.f32.gmra.mxu0 %v1249
        %v1611 = vpop.f32.mrf.mxu0
        %v1612 = vadd.f32 0.0, %v1611
        %v1613 = vpop.f32.mrf.mxu0
        %v1614 = vadd.f32 0.0, %v1613
        %1615 = vmatprep.mubr.f32.mxu0 0.0
        %1616 = vmatmul.mubr.f32.gmra.mxu0 %v1252
        %v1617 = vpop.f32.mrf.mxu0
        %v1618 = vadd.f32 0.0, %v1617
        %v1619 = vpop.f32.mrf.mxu0
        %v1620 = vadd.f32 0.0, %v1619
        %1621 = vmatprep.mubr.f32.mxu0 0.0
        %1622 = vmatmul.mubr.f32.gmra.mxu0 %v1255
        %v1623 = vpop.f32.mrf.mxu0
        %v1624 = vadd.f32 0.0, %v1623
        %v1625 = vpop.f32.mrf.mxu0
        %v1626 = vadd.f32 0.0, %v1625
        %1627 = vmatprep.mubr.f32.mxu0 0.0
        %1628 = vmatmul.mubr.f32.gmra.mxu0 %v1258
        %v1629 = vpop.f32.mrf.mxu0
        %v1630 = vadd.f32 0.0, %v1629
        %v1631 = vpop.f32.mrf.mxu0
        %v1632 = vadd.f32 0.0, %v1631
        %1633 = vmatprep.mubr.f32.mxu0 0.0
        %1634 = vmatmul.mubr.f32.gmra.mxu0 %v1261
        %v1635 = vpop.f32.mrf.mxu0
        %v1636 = vadd.f32 0.0, %v1635
        %v1637 = vpop.f32.mrf.mxu0
        %v1638 = vadd.f32 0.0, %v1637
        %1639 = vmatprep.mubr.f32.mxu0 0.0
        %1640 = vmatmul.mubr.f32.gmra.mxu0 %v1264
        %v1641 = vpop.f32.mrf.mxu0
        %v1642 = vadd.f32 0.0, %v1641
        %v1643 = vpop.f32.mrf.mxu0
        %v1644 = vadd.f32 0.0, %v1643
        %1645 = vmatprep.mubr.f32.mxu0 0.0
        %1646 = vmatmul.mubr.f32.gmra.mxu0 %v1267
        %v1647 = vpop.f32.mrf.mxu0
        %v1648 = vadd.f32 0.0, %v1647
        %v1649 = vpop.f32.mrf.mxu0
        %v1650 = vadd.f32 0.0, %v1649
        %1651 = vmatprep.mubr.f32.mxu0 0.0
        %1652 = vmatmul.mubr.f32.gmra.mxu0 %v1270
        %v1653 = vpop.f32.mrf.mxu0
        %v1654 = vadd.f32 0.0, %v1653
        %v1655 = vpop.f32.mrf.mxu0
        %v1656 = vadd.f32 0.0, %v1655
        %1657 = vmatprep.mubr.f32.mxu0 0.0
        %1658 = vmatmul.mubr.f32.gmra.mxu0 %v1273
        %v1659 = vpop.f32.mrf.mxu0
        %v1660 = vadd.f32 0.0, %v1659
        %v1661 = vpop.f32.mrf.mxu0
        %v1662 = vadd.f32 0.0, %v1661
        %1663 = vmatprep.mubr.f32.mxu0 0.0
        %1664 = vmatmul.mubr.f32.gmra.mxu0 %v1276
        %v1665 = vpop.f32.mrf.mxu0
        %v1666 = vadd.f32 0.0, %v1665
        %v1667 = vpop.f32.mrf.mxu0
        %v1668 = vadd.f32 0.0, %v1667
        %1669 = vmatprep.mubr.f32.mxu0 0.0
        %1670 = vmatmul.mubr.f32.gmra.mxu0 %v1279
        %v1671 = vpop.f32.mrf.mxu0
        %v1672 = vadd.f32 0.0, %v1671
        %v1673 = vpop.f32.mrf.mxu0
        %v1674 = vadd.f32 0.0, %v1673
        %1675 = vmatprep.mubr.f32.mxu0 0.0
        %1676 = vmatmul.mubr.f32.gmra.mxu0 %v1282
        %v1677 = vpop.f32.mrf.mxu0
        %v1678 = vadd.f32 0.0, %v1677
        %v1679 = vpop.f32.mrf.mxu0
        %v1680 = vadd.f32 0.0, %v1679
        %1681 = vmatprep.mubr.f32.mxu0 0.0
        %1682 = vmatmul.mubr.f32.gmra.mxu0 %v1285
        %v1683 = vpop.f32.mrf.mxu0
        %v1684 = vadd.f32 0.0, %v1683
        %v1685 = vpop.f32.mrf.mxu0
        %v1686 = vadd.f32 0.0, %v1685
        %1687 = vmatprep.mubr.f32.mxu0 0.0
        %1688 = vmatmul.mubr.f32.gmra.mxu0 %v1288
        %v1689 = vpop.f32.mrf.mxu0
        %v1690 = vadd.f32 0.0, %v1689
        %v1691 = vpop.f32.mrf.mxu0
        %v1692 = vadd.f32 0.0, %v1691
        %1693 = vmatprep.mubr.f32.mxu0 0.0
        %1694 = vmatmul.mubr.f32.gmra.mxu0 %v1291
        %v1695 = vpop.f32.mrf.mxu0
        %v1696 = vadd.f32 0.0, %v1695
        %v1697 = vpop.f32.mrf.mxu0
        %v1698 = vadd.f32 0.0, %v1697
        %1699 = vmatprep.mubr.f32.mxu0 0.0
        %1700 = vmatmul.mubr.f32.gmra.mxu0 %v1294
        %v1701 = vpop.f32.mrf.mxu0
        %v1702 = vadd.f32 0.0, %v1701
        %v1703 = vpop.f32.mrf.mxu0
        %v1704 = vadd.f32 0.0, %v1703
        %1705 = vmatprep.mubr.f32.mxu0 0.0
        %1706 = vmatmul.mubr.f32.gmra.mxu0 %v1297
        %v1707 = vpop.f32.mrf.mxu0
        %v1708 = vadd.f32 0.0, %v1707
        %v1709 = vpop.f32.mrf.mxu0
        %v1710 = vadd.f32 0.0, %v1709
        %1711 = vmatprep.mubr.f32.mxu0 0.0
        %1712 = vmatmul.mubr.f32.gmra.mxu0 %v1300
        %v1713 = vpop.f32.mrf.mxu0
        %v1714 = vadd.f32 0.0, %v1713
        %v1715 = vpop.f32.mrf.mxu0
        %v1716 = vadd.f32 0.0, %v1715
        %1717 = vmatprep.mubr.f32.mxu0 0.0
        %1718 = vmatmul.mubr.f32.gmra.mxu0 %v1303
        %v1719 = vpop.f32.mrf.mxu0
        %v1720 = vadd.f32 0.0, %v1719
        %v1721 = vpop.f32.mrf.mxu0
        %v1722 = vadd.f32 0.0, %v1721
        %1723 = vmatprep.mubr.f32.mxu0 0.0
        %1724 = vmatmul.mubr.f32.gmra.mxu0 %v1306
        %v1725 = vpop.f32.mrf.mxu0
        %v1726 = vadd.f32 0.0, %v1725
        %v1727 = vpop.f32.mrf.mxu0
        %v1728 = vadd.f32 0.0, %v1727
        %1729 = vmatprep.mubr.f32.mxu0 0.0
        %1730 = vmatmul.mubr.f32.gmra.mxu0 %v1309
        %v1731 = vpop.f32.mrf.mxu0
        %v1732 = vadd.f32 0.0, %v1731
        %v1733 = vpop.f32.mrf.mxu0
        %v1734 = vadd.f32 0.0, %v1733
        %1735 = vmatprep.mubr.f32.mxu0 0.0
        %1736 = vmatmul.mubr.f32.gmra.mxu0 %v1312
        %v1737 = vpop.f32.mrf.mxu0
        %v1738 = vadd.f32 0.0, %v1737
        %v1739 = vpop.f32.mrf.mxu0
        %v1740 = vadd.f32 0.0, %v1739
        %1741 = vmatprep.mubr.f32.mxu0 0.0
        %1742 = vmatmul.mubr.f32.gmra.mxu0 %v1315
        %v1743 = vpop.f32.mrf.mxu0
        %v1744 = vadd.f32 0.0, %v1743
        %v1745 = vpop.f32.mrf.mxu0
        %v1746 = vadd.f32 0.0, %v1745
        %1747 = vmatprep.mubr.f32.mxu0 0.0
        %1748 = vmatmul.mubr.f32.gmra.mxu0 %v1318
        %v1749 = vpop.f32.mrf.mxu0
        %v1750 = vadd.f32 0.0, %v1749
        %v1751 = vpop.f32.mrf.mxu0
        %v1752 = vadd.f32 0.0, %v1751
        %1753 = vmatprep.mubr.f32.mxu0 0.0
        %1754 = vmatmul.mubr.f32.gmra.mxu0 %v1321
        %v1755 = vpop.f32.mrf.mxu0
        %v1756 = vadd.f32 0.0, %v1755
        %v1757 = vpop.f32.mrf.mxu0
        %v1758 = vadd.f32 0.0, %v1757
        %1759 = vmatprep.mubr.f32.mxu0 0.0
        %1760 = vmatmul.mubr.f32.gmra.mxu0 %v1324
        %v1761 = vpop.f32.mrf.mxu0
        %v1762 = vadd.f32 0.0, %v1761
        %v1763 = vpop.f32.mrf.mxu0
        %v1764 = vadd.f32 0.0, %v1763
        %1765 = vmatprep.mubr.f32.mxu0 0.0
        %1766 = vmatmul.mubr.f32.gmra.mxu0 %v1327
        %v1767 = vpop.f32.mrf.mxu0
        %v1768 = vadd.f32 0.0, %v1767
        %v1769 = vpop.f32.mrf.mxu0
        %v1770 = vadd.f32 0.0, %v1769
        %1771 = vmatprep.mubr.f32.mxu0 0.0
        %1772 = vmatmul.mubr.f32.gmra.mxu0 %v1330
        %v1773 = vpop.f32.mrf.mxu0
        %v1774 = vadd.f32 0.0, %v1773
        %v1775 = vpop.f32.mrf.mxu0
        %v1776 = vadd.f32 0.0, %v1775
        %1777 = vmatprep.mubr.f32.mxu0 0.0
        %1778 = vmatmul.mubr.f32.gmra.mxu0 %v1333
        %v1779 = vpop.f32.mrf.mxu0
        %v1780 = vadd.f32 0.0, %v1779
        %v1781 = vpop.f32.mrf.mxu0
        %v1782 = vadd.f32 0.0, %v1781
        %1783 = vmatprep.mubr.f32.mxu0 0.0
        %1784 = vmatmul.mubr.f32.gmra.mxu0 %v1336
        %v1785 = vpop.f32.mrf.mxu0
        %v1786 = vadd.f32 0.0, %v1785
        %v1787 = vpop.f32.mrf.mxu0
        %v1788 = vadd.f32 0.0, %v1787
        %1789 = vmatprep.mubr.f32.mxu0 0.0
        %1790 = vmatmul.mubr.f32.gmra.mxu0 %v1339
        %v1791 = vpop.f32.mrf.mxu0
        %v1792 = vadd.f32 0.0, %v1791
        %v1793 = vpop.f32.mrf.mxu0
        %v1794 = vadd.f32 0.0, %v1793
        %1795 = vmatprep.mubr.f32.mxu0 0.0
        %1796 = vmatmul.mubr.f32.gmra.mxu0 %v1342
        %v1797 = vpop.f32.mrf.mxu0
        %v1798 = vadd.f32 0.0, %v1797
        %v1799 = vpop.f32.mrf.mxu0
        %v1800 = vadd.f32 0.0, %v1799
        %1801 = vdwg.mxu0
        %1802 = vmatprep.subr.mxu0 0.0
        %1803 = vmatpush1.msra.mxu0 0.0
        %1804 = vmatprep.subr.mxu0 0.0
        %1805 = vmatpush1.msra.mxu0 0.0
        %1806 = vmatprep.subr.mxu0 0.0
        %1807 = vmatpush1.msra.mxu0 0.0
        %1808 = vmatprep.subr.mxu0 0.0
        %1809 = vmatpush1.msra.mxu0 0.0
        %1810 = vmatprep.subr.mxu0 0.0
        %1811 = vmatpush1.msra.mxu0 0.0
        %1812 = vmatprep.subr.mxu0 0.0
        %1813 = vmatpush1.msra.mxu0 0.0
        %1814 = vmatprep.subr.mxu0 0.0
        %1815 = vmatpush1.msra.mxu0 0.0
        %1816 = vmatprep.subr.mxu0 0.0
        %1817 = vmatpush1.msra.mxu0 0.0
        %1818 = vmatprep.subr.mxu0 0.0
        %1819 = vmatpush1.msra.mxu0 0.0
        %1820 = vmatprep.subr.mxu0 0.0
        %1821 = vmatpush1.msra.mxu0 0.0
        %1822 = vmatprep.subr.mxu0 0.0
        %1823 = vmatpush1.msra.mxu0 0.0
        %1824 = vmatprep.subr.mxu0 0.0
        %1825 = vmatpush1.msra.mxu0 0.0
        %1826 = vmatprep.subr.mxu0 0.0
        %1827 = vmatpush1.msra.mxu0 0.0
        %1828 = vmatprep.subr.mxu0 0.0
        %1829 = vmatpush1.msra.mxu0 0.0
        %1830 = vmatprep.subr.mxu0 0.0
        %1831 = vmatpush1.msra.mxu0 0.0
        %1832 = vmatprep.subr.mxu0 %v1351
        %1833 = vmatpush1.msra.mxu0 %v1349
        %1834 = vmatprep.subr.mxu0 0.0
        %1835 = vmatpush2.msra.mxu0 0.0
        %1836 = vmatprep.subr.mxu0 0.0
        %1837 = vmatpush2.msra.mxu0 0.0
        %1838 = vmatprep.subr.mxu0 0.0
        %1839 = vmatpush2.msra.mxu0 0.0
        %1840 = vmatprep.subr.mxu0 0.0
        %1841 = vmatpush2.msra.mxu0 0.0
        %1842 = vmatprep.subr.mxu0 0.0
        %1843 = vmatpush2.msra.mxu0 0.0
        %1844 = vmatprep.subr.mxu0 0.0
        %1845 = vmatpush2.msra.mxu0 0.0
        %1846 = vmatprep.subr.mxu0 0.0
        %1847 = vmatpush2.msra.mxu0 0.0
        %1848 = vmatprep.subr.mxu0 0.0
        %1849 = vmatpush2.msra.mxu0 0.0
        %1850 = vmatprep.subr.mxu0 0.0
        %1851 = vmatpush2.msra.mxu0 0.0
        %1852 = vmatprep.subr.mxu0 0.0
        %1853 = vmatpush2.msra.mxu0 0.0
        %1854 = vmatprep.subr.mxu0 0.0
        %1855 = vmatpush2.msra.mxu0 0.0
        %1856 = vmatprep.subr.mxu0 0.0
        %1857 = vmatpush2.msra.mxu0 0.0
        %1858 = vmatprep.subr.mxu0 0.0
        %1859 = vmatpush2.msra.mxu0 0.0
        %1860 = vmatprep.subr.mxu0 0.0
        %1861 = vmatpush2.msra.mxu0 0.0
        %1862 = vmatprep.subr.mxu0 0.0
        %1863 = vmatpush2.msra.mxu0 0.0
        %1864 = vmatprep.subr.mxu0 0.0
        %1865 = vmatpush2.msra.mxu0 0.0
        %1866 = vmatprep.mubr.f32.mxu0 0.0
        %1867 = vmatmul.mubr.f32.gmra.mxu0 %v1153
        %v1868 = vpop.f32.mrf.mxu0
        %v1869 = vadd.f32 0.0, %v1868
        %v1870 = vpop.f32.mrf.mxu0
        %v1871 = vadd.f32 0.0, %v1870
        %1872 = vmatprep.mubr.f32.mxu0 0.0
        %1873 = vmatmul.mubr.f32.gmra.mxu0 %v1156
        %v1874 = vpop.f32.mrf.mxu0
        %v1875 = vadd.f32 0.0, %v1874
        %v1876 = vpop.f32.mrf.mxu0
        %v1877 = vadd.f32 0.0, %v1876
        %1878 = vmatprep.mubr.f32.mxu0 0.0
        %1879 = vmatmul.mubr.f32.gmra.mxu0 %v1159
        %v1880 = vpop.f32.mrf.mxu0
        %v1881 = vadd.f32 0.0, %v1880
        %v1882 = vpop.f32.mrf.mxu0
        %v1883 = vadd.f32 0.0, %v1882
        %1884 = vmatprep.mubr.f32.mxu0 0.0
        %1885 = vmatmul.mubr.f32.gmra.mxu0 %v1162
        %v1886 = vpop.f32.mrf.mxu0
        %v1887 = vadd.f32 0.0, %v1886
        %v1888 = vpop.f32.mrf.mxu0
        %v1889 = vadd.f32 0.0, %v1888
        %1890 = vmatprep.mubr.f32.mxu0 0.0
        %1891 = vmatmul.mubr.f32.gmra.mxu0 %v1165
        %v1892 = vpop.f32.mrf.mxu0
        %v1893 = vadd.f32 0.0, %v1892
        %v1894 = vpop.f32.mrf.mxu0
        %v1895 = vadd.f32 0.0, %v1894
        %1896 = vmatprep.mubr.f32.mxu0 0.0
        %1897 = vmatmul.mubr.f32.gmra.mxu0 %v1168
        %v1898 = vpop.f32.mrf.mxu0
        %v1899 = vadd.f32 0.0, %v1898
        %v1900 = vpop.f32.mrf.mxu0
        %v1901 = vadd.f32 0.0, %v1900
        %1902 = vmatprep.mubr.f32.mxu0 0.0
        %1903 = vmatmul.mubr.f32.gmra.mxu0 %v1171
        %v1904 = vpop.f32.mrf.mxu0
        %v1905 = vadd.f32 0.0, %v1904
        %v1906 = vpop.f32.mrf.mxu0
        %v1907 = vadd.f32 0.0, %v1906
        %1908 = vmatprep.mubr.f32.mxu0 0.0
        %1909 = vmatmul.mubr.f32.gmra.mxu0 %v1174
        %v1910 = vpop.f32.mrf.mxu0
        %v1911 = vadd.f32 0.0, %v1910
        %v1912 = vpop.f32.mrf.mxu0
        %v1913 = vadd.f32 0.0, %v1912
        %1914 = vmatprep.mubr.f32.mxu0 0.0
        %1915 = vmatmul.mubr.f32.gmra.mxu0 %v1177
        %v1916 = vpop.f32.mrf.mxu0
        %v1917 = vadd.f32 0.0, %v1916
        %v1918 = vpop.f32.mrf.mxu0
        %v1919 = vadd.f32 0.0, %v1918
        %1920 = vmatprep.mubr.f32.mxu0 0.0
        %1921 = vmatmul.mubr.f32.gmra.mxu0 %v1180
        %v1922 = vpop.f32.mrf.mxu0
        %v1923 = vadd.f32 0.0, %v1922
        %v1924 = vpop.f32.mrf.mxu0
        %v1925 = vadd.f32 0.0, %v1924
        %1926 = vmatprep.mubr.f32.mxu0 0.0
        %1927 = vmatmul.mubr.f32.gmra.mxu0 %v1183
        %v1928 = vpop.f32.mrf.mxu0
        %v1929 = vadd.f32 0.0, %v1928
        %v1930 = vpop.f32.mrf.mxu0
        %v1931 = vadd.f32 0.0, %v1930
        %1932 = vmatprep.mubr.f32.mxu0 0.0
        %1933 = vmatmul.mubr.f32.gmra.mxu0 %v1186
        %v1934 = vpop.f32.mrf.mxu0
        %v1935 = vadd.f32 0.0, %v1934
        %v1936 = vpop.f32.mrf.mxu0
        %v1937 = vadd.f32 0.0, %v1936
        %1938 = vmatprep.mubr.f32.mxu0 0.0
        %1939 = vmatmul.mubr.f32.gmra.mxu0 %v1189
        %v1940 = vpop.f32.mrf.mxu0
        %v1941 = vadd.f32 0.0, %v1940
        %v1942 = vpop.f32.mrf.mxu0
        %v1943 = vadd.f32 0.0, %v1942
        %1944 = vmatprep.mubr.f32.mxu0 0.0
        %1945 = vmatmul.mubr.f32.gmra.mxu0 %v1192
        %v1946 = vpop.f32.mrf.mxu0
        %v1947 = vadd.f32 0.0, %v1946
        %v1948 = vpop.f32.mrf.mxu0
        %v1949 = vadd.f32 0.0, %v1948
        %1950 = vmatprep.mubr.f32.mxu0 0.0
        %1951 = vmatmul.mubr.f32.gmra.mxu0 %v1195
        %v1952 = vpop.f32.mrf.mxu0
        %v1953 = vadd.f32 0.0, %v1952
        %v1954 = vpop.f32.mrf.mxu0
        %v1955 = vadd.f32 0.0, %v1954
        %1956 = vmatprep.mubr.f32.mxu0 0.0
        %1957 = vmatmul.mubr.f32.gmra.mxu0 %v1198
        %v1958 = vpop.f32.mrf.mxu0
        %v1959 = vadd.f32 0.0, %v1958
        %v1960 = vpop.f32.mrf.mxu0
        %v1961 = vadd.f32 0.0, %v1960
        %1962 = vmatprep.mubr.f32.mxu0 0.0
        %1963 = vmatmul.mubr.f32.gmra.mxu0 %v1201
        %v1964 = vpop.f32.mrf.mxu0
        %v1965 = vadd.f32 0.0, %v1964
        %v1966 = vpop.f32.mrf.mxu0
        %v1967 = vadd.f32 0.0, %v1966
        %1968 = vmatprep.mubr.f32.mxu0 0.0
        %1969 = vmatmul.mubr.f32.gmra.mxu0 %v1204
        %v1970 = vpop.f32.mrf.mxu0
        %v1971 = vadd.f32 0.0, %v1970
        %v1972 = vpop.f32.mrf.mxu0
        %v1973 = vadd.f32 0.0, %v1972
        %1974 = vmatprep.mubr.f32.mxu0 0.0
        %1975 = vmatmul.mubr.f32.gmra.mxu0 %v1207
        %v1976 = vpop.f32.mrf.mxu0
        %v1977 = vadd.f32 0.0, %v1976
        %v1978 = vpop.f32.mrf.mxu0
        %v1979 = vadd.f32 0.0, %v1978
        %1980 = vmatprep.mubr.f32.mxu0 0.0
        %1981 = vmatmul.mubr.f32.gmra.mxu0 %v1210
        %v1982 = vpop.f32.mrf.mxu0
        %v1983 = vadd.f32 0.0, %v1982
        %v1984 = vpop.f32.mrf.mxu0
        %v1985 = vadd.f32 0.0, %v1984
        %1986 = vmatprep.mubr.f32.mxu0 0.0
        %1987 = vmatmul.mubr.f32.gmra.mxu0 %v1213
        %v1988 = vpop.f32.mrf.mxu0
        %v1989 = vadd.f32 0.0, %v1988
        %v1990 = vpop.f32.mrf.mxu0
        %v1991 = vadd.f32 0.0, %v1990
        %1992 = vmatprep.mubr.f32.mxu0 0.0
        %1993 = vmatmul.mubr.f32.gmra.mxu0 %v1216
        %v1994 = vpop.f32.mrf.mxu0
        %v1995 = vadd.f32 0.0, %v1994
        %v1996 = vpop.f32.mrf.mxu0
        %v1997 = vadd.f32 0.0, %v1996
        %1998 = vmatprep.mubr.f32.mxu0 0.0
        %1999 = vmatmul.mubr.f32.gmra.mxu0 %v1219
        %v2000 = vpop.f32.mrf.mxu0
        %v2001 = vadd.f32 0.0, %v2000
        %v2002 = vpop.f32.mrf.mxu0
        %v2003 = vadd.f32 0.0, %v2002
        %2004 = vmatprep.mubr.f32.mxu0 0.0
        %2005 = vmatmul.mubr.f32.gmra.mxu0 %v1222
        %v2006 = vpop.f32.mrf.mxu0
        %v2007 = vadd.f32 0.0, %v2006
        %v2008 = vpop.f32.mrf.mxu0
        %v2009 = vadd.f32 0.0, %v2008
        %2010 = vmatprep.mubr.f32.mxu0 0.0
        %2011 = vmatmul.mubr.f32.gmra.mxu0 %v1225
        %v2012 = vpop.f32.mrf.mxu0
        %v2013 = vadd.f32 0.0, %v2012
        %v2014 = vpop.f32.mrf.mxu0
        %v2015 = vadd.f32 0.0, %v2014
        %2016 = vmatprep.mubr.f32.mxu0 0.0
        %2017 = vmatmul.mubr.f32.gmra.mxu0 %v1228
        %v2018 = vpop.f32.mrf.mxu0
        %v2019 = vadd.f32 0.0, %v2018
        %v2020 = vpop.f32.mrf.mxu0
        %v2021 = vadd.f32 0.0, %v2020
        %2022 = vmatprep.mubr.f32.mxu0 0.0
        %2023 = vmatmul.mubr.f32.gmra.mxu0 %v1231
        %v2024 = vpop.f32.mrf.mxu0
        %v2025 = vadd.f32 0.0, %v2024
        %v2026 = vpop.f32.mrf.mxu0
        %v2027 = vadd.f32 0.0, %v2026
        %2028 = vmatprep.mubr.f32.mxu0 0.0
        %2029 = vmatmul.mubr.f32.gmra.mxu0 %v1234
        %v2030 = vpop.f32.mrf.mxu0
        %v2031 = vadd.f32 0.0, %v2030
        %v2032 = vpop.f32.mrf.mxu0
        %v2033 = vadd.f32 0.0, %v2032
        %2034 = vmatprep.mubr.f32.mxu0 0.0
        %2035 = vmatmul.mubr.f32.gmra.mxu0 %v1237
        %v2036 = vpop.f32.mrf.mxu0
        %v2037 = vadd.f32 0.0, %v2036
        %v2038 = vpop.f32.mrf.mxu0
        %v2039 = vadd.f32 0.0, %v2038
        %2040 = vmatprep.mubr.f32.mxu0 0.0
        %2041 = vmatmul.mubr.f32.gmra.mxu0 %v1240
        %v2042 = vpop.f32.mrf.mxu0
        %v2043 = vadd.f32 0.0, %v2042
        %v2044 = vpop.f32.mrf.mxu0
        %v2045 = vadd.f32 0.0, %v2044
        %2046 = vmatprep.mubr.f32.mxu0 0.0
        %2047 = vmatmul.mubr.f32.gmra.mxu0 %v1243
        %v2048 = vpop.f32.mrf.mxu0
        %v2049 = vadd.f32 0.0, %v2048
        %v2050 = vpop.f32.mrf.mxu0
        %v2051 = vadd.f32 0.0, %v2050
        %2052 = vmatprep.mubr.f32.mxu0 0.0
        %2053 = vmatmul.mubr.f32.gmra.mxu0 %v1246
        %v2054 = vpop.f32.mrf.mxu0
        %v2055 = vadd.f32 0.0, %v2054
        %v2056 = vpop.f32.mrf.mxu0
        %v2057 = vadd.f32 0.0, %v2056
        %2058 = vmatprep.mubr.f32.mxu0 0.0
        %2059 = vmatmul.mubr.f32.gmra.mxu0 %v1249
        %v2060 = vpop.f32.mrf.mxu0
        %v2061 = vadd.f32 0.0, %v2060
        %v2062 = vpop.f32.mrf.mxu0
        %v2063 = vadd.f32 0.0, %v2062
        %2064 = vmatprep.mubr.f32.mxu0 0.0
        %2065 = vmatmul.mubr.f32.gmra.mxu0 %v1252
        %v2066 = vpop.f32.mrf.mxu0
        %v2067 = vadd.f32 0.0, %v2066
        %v2068 = vpop.f32.mrf.mxu0
        %v2069 = vadd.f32 0.0, %v2068
        %2070 = vmatprep.mubr.f32.mxu0 0.0
        %2071 = vmatmul.mubr.f32.gmra.mxu0 %v1255
        %v2072 = vpop.f32.mrf.mxu0
        %v2073 = vadd.f32 0.0, %v2072
        %v2074 = vpop.f32.mrf.mxu0
        %v2075 = vadd.f32 0.0, %v2074
        %2076 = vmatprep.mubr.f32.mxu0 0.0
        %2077 = vmatmul.mubr.f32.gmra.mxu0 %v1258
        %v2078 = vpop.f32.mrf.mxu0
        %v2079 = vadd.f32 0.0, %v2078
        %v2080 = vpop.f32.mrf.mxu0
        %v2081 = vadd.f32 0.0, %v2080
        %2082 = vmatprep.mubr.f32.mxu0 0.0
        %2083 = vmatmul.mubr.f32.gmra.mxu0 %v1261
        %v2084 = vpop.f32.mrf.mxu0
        %v2085 = vadd.f32 0.0, %v2084
        %v2086 = vpop.f32.mrf.mxu0
        %v2087 = vadd.f32 0.0, %v2086
        %2088 = vmatprep.mubr.f32.mxu0 0.0
        %2089 = vmatmul.mubr.f32.gmra.mxu0 %v1264
        %v2090 = vpop.f32.mrf.mxu0
        %v2091 = vadd.f32 0.0, %v2090
        %v2092 = vpop.f32.mrf.mxu0
        %v2093 = vadd.f32 0.0, %v2092
        %2094 = vmatprep.mubr.f32.mxu0 0.0
        %2095 = vmatmul.mubr.f32.gmra.mxu0 %v1267
        %v2096 = vpop.f32.mrf.mxu0
        %v2097 = vadd.f32 0.0, %v2096
        %v2098 = vpop.f32.mrf.mxu0
        %v2099 = vadd.f32 0.0, %v2098
        %2100 = vmatprep.mubr.f32.mxu0 0.0
        %2101 = vmatmul.mubr.f32.gmra.mxu0 %v1270
        %v2102 = vpop.f32.mrf.mxu0
        %v2103 = vadd.f32 0.0, %v2102
        %v2104 = vpop.f32.mrf.mxu0
        %v2105 = vadd.f32 0.0, %v2104
        %2106 = vmatprep.mubr.f32.mxu0 0.0
        %2107 = vmatmul.mubr.f32.gmra.mxu0 %v1273
        %v2108 = vpop.f32.mrf.mxu0
        %v2109 = vadd.f32 0.0, %v2108
        %v2110 = vpop.f32.mrf.mxu0
        %v2111 = vadd.f32 0.0, %v2110
        %2112 = vmatprep.mubr.f32.mxu0 0.0
        %2113 = vmatmul.mubr.f32.gmra.mxu0 %v1276
        %v2114 = vpop.f32.mrf.mxu0
        %v2115 = vadd.f32 0.0, %v2114
        %v2116 = vpop.f32.mrf.mxu0
        %v2117 = vadd.f32 0.0, %v2116
        %2118 = vmatprep.mubr.f32.mxu0 0.0
        %2119 = vmatmul.mubr.f32.gmra.mxu0 %v1279
        %v2120 = vpop.f32.mrf.mxu0
        %v2121 = vadd.f32 0.0, %v2120
        %v2122 = vpop.f32.mrf.mxu0
        %v2123 = vadd.f32 0.0, %v2122
        %2124 = vmatprep.mubr.f32.mxu0 0.0
        %2125 = vmatmul.mubr.f32.gmra.mxu0 %v1282
        %v2126 = vpop.f32.mrf.mxu0
        %v2127 = vadd.f32 0.0, %v2126
        %v2128 = vpop.f32.mrf.mxu0
        %v2129 = vadd.f32 0.0, %v2128
        %2130 = vmatprep.mubr.f32.mxu0 0.0
        %2131 = vmatmul.mubr.f32.gmra.mxu0 %v1285
        %v2132 = vpop.f32.mrf.mxu0
        %v2133 = vadd.f32 0.0, %v2132
        %v2134 = vpop.f32.mrf.mxu0
        %v2135 = vadd.f32 0.0, %v2134
        %2136 = vmatprep.mubr.f32.mxu0 0.0
        %2137 = vmatmul.mubr.f32.gmra.mxu0 %v1288
        %v2138 = vpop.f32.mrf.mxu0
        %v2139 = vadd.f32 0.0, %v2138
        %v2140 = vpop.f32.mrf.mxu0
        %v2141 = vadd.f32 0.0, %v2140
        %2142 = vmatprep.mubr.f32.mxu0 0.0
        %2143 = vmatmul.mubr.f32.gmra.mxu0 %v1291
        %v2144 = vpop.f32.mrf.mxu0
        %v2145 = vadd.f32 0.0, %v2144
        %v2146 = vpop.f32.mrf.mxu0
        %v2147 = vadd.f32 0.0, %v2146
        %2148 = vmatprep.mubr.f32.mxu0 0.0
        %2149 = vmatmul.mubr.f32.gmra.mxu0 %v1294
        %v2150 = vpop.f32.mrf.mxu0
        %v2151 = vadd.f32 0.0, %v2150
        %v2152 = vpop.f32.mrf.mxu0
        %v2153 = vadd.f32 0.0, %v2152
        %2154 = vmatprep.mubr.f32.mxu0 0.0
        %2155 = vmatmul.mubr.f32.gmra.mxu0 %v1297
        %v2156 = vpop.f32.mrf.mxu0
        %v2157 = vadd.f32 0.0, %v2156
        %v2158 = vpop.f32.mrf.mxu0
        %v2159 = vadd.f32 0.0, %v2158
        %2160 = vmatprep.mubr.f32.mxu0 0.0
        %2161 = vmatmul.mubr.f32.gmra.mxu0 %v1300
        %v2162 = vpop.f32.mrf.mxu0
        %v2163 = vadd.f32 0.0, %v2162
        %v2164 = vpop.f32.mrf.mxu0
        %v2165 = vadd.f32 0.0, %v2164
        %2166 = vmatprep.mubr.f32.mxu0 0.0
        %2167 = vmatmul.mubr.f32.gmra.mxu0 %v1303
        %v2168 = vpop.f32.mrf.mxu0
        %v2169 = vadd.f32 0.0, %v2168
        %v2170 = vpop.f32.mrf.mxu0
        %v2171 = vadd.f32 0.0, %v2170
        %2172 = vmatprep.mubr.f32.mxu0 0.0
        %2173 = vmatmul.mubr.f32.gmra.mxu0 %v1306
        %v2174 = vpop.f32.mrf.mxu0
        %v2175 = vadd.f32 0.0, %v2174
        %v2176 = vpop.f32.mrf.mxu0
        %v2177 = vadd.f32 0.0, %v2176
        %2178 = vmatprep.mubr.f32.mxu0 0.0
        %2179 = vmatmul.mubr.f32.gmra.mxu0 %v1309
        %v2180 = vpop.f32.mrf.mxu0
        %v2181 = vadd.f32 0.0, %v2180
        %v2182 = vpop.f32.mrf.mxu0
        %v2183 = vadd.f32 0.0, %v2182
        %2184 = vmatprep.mubr.f32.mxu0 0.0
        %2185 = vmatmul.mubr.f32.gmra.mxu0 %v1312
        %v2186 = vpop.f32.mrf.mxu0
        %v2187 = vadd.f32 0.0, %v2186
        %v2188 = vpop.f32.mrf.mxu0
        %v2189 = vadd.f32 0.0, %v2188
        %2190 = vmatprep.mubr.f32.mxu0 0.0
        %2191 = vmatmul.mubr.f32.gmra.mxu0 %v1315
        %v2192 = vpop.f32.mrf.mxu0
        %v2193 = vadd.f32 0.0, %v2192
        %v2194 = vpop.f32.mrf.mxu0
        %v2195 = vadd.f32 0.0, %v2194
        %2196 = vmatprep.mubr.f32.mxu0 0.0
        %2197 = vmatmul.mubr.f32.gmra.mxu0 %v1318
        %v2198 = vpop.f32.mrf.mxu0
        %v2199 = vadd.f32 0.0, %v2198
        %v2200 = vpop.f32.mrf.mxu0
        %v2201 = vadd.f32 0.0, %v2200
        %2202 = vmatprep.mubr.f32.mxu0 0.0
        %2203 = vmatmul.mubr.f32.gmra.mxu0 %v1321
        %v2204 = vpop.f32.mrf.mxu0
        %v2205 = vadd.f32 0.0, %v2204
        %v2206 = vpop.f32.mrf.mxu0
        %v2207 = vadd.f32 0.0, %v2206
        %2208 = vmatprep.mubr.f32.mxu0 0.0
        %2209 = vmatmul.mubr.f32.gmra.mxu0 %v1324
        %v2210 = vpop.f32.mrf.mxu0
        %v2211 = vadd.f32 0.0, %v2210
        %v2212 = vpop.f32.mrf.mxu0
        %v2213 = vadd.f32 0.0, %v2212
        %2214 = vmatprep.mubr.f32.mxu0 0.0
        %2215 = vmatmul.mubr.f32.gmra.mxu0 %v1327
        %v2216 = vpop.f32.mrf.mxu0
        %v2217 = vadd.f32 0.0, %v2216
        %v2218 = vpop.f32.mrf.mxu0
        %v2219 = vadd.f32 0.0, %v2218
        %2220 = vmatprep.mubr.f32.mxu0 0.0
        %2221 = vmatmul.mubr.f32.gmra.mxu0 %v1330
        %v2222 = vpop.f32.mrf.mxu0
        %v2223 = vadd.f32 0.0, %v2222
        %v2224 = vpop.f32.mrf.mxu0
        %v2225 = vadd.f32 0.0, %v2224
        %2226 = vmatprep.mubr.f32.mxu0 0.0
        %2227 = vmatmul.mubr.f32.gmra.mxu0 %v1333
        %v2228 = vpop.f32.mrf.mxu0
        %v2229 = vadd.f32 0.0, %v2228
        %v2230 = vpop.f32.mrf.mxu0
        %v2231 = vadd.f32 0.0, %v2230
        %2232 = vmatprep.mubr.f32.mxu0 0.0
        %2233 = vmatmul.mubr.f32.gmra.mxu0 %v1336
        %v2234 = vpop.f32.mrf.mxu0
        %v2235 = vadd.f32 0.0, %v2234
        %v2236 = vpop.f32.mrf.mxu0
        %v2237 = vadd.f32 0.0, %v2236
        %2238 = vmatprep.mubr.f32.mxu0 0.0
        %2239 = vmatmul.mubr.f32.gmra.mxu0 %v1339
        %v2240 = vpop.f32.mrf.mxu0
        %v2241 = vadd.f32 0.0, %v2240
        %v2242 = vpop.f32.mrf.mxu0
        %v2243 = vadd.f32 0.0, %v2242
        %2244 = vmatprep.mubr.f32.mxu0 0.0
        %2245 = vmatmul.mubr.f32.gmra.mxu0 %v1342
        %v2246 = vpop.f32.mrf.mxu0
        %v2247 = vadd.f32 0.0, %v2246
        %v2248 = vpop.f32.mrf.mxu0
        %v2249 = vadd.f32 0.0, %v2248
        %2250 = vdwg.mxu0
        %v2251 = vld [vmem:[#allocation3] sm:$0xf]
        %v2252 = vmax.f32 %v1420, %v1426
        %v2253 = vmax.f32 %v2252, %v1432
        %v2254 = vmax.f32 %v2253, %v1438
        %v2255 = vmax.f32 %v2254, %v1444
        %v2256 = vmax.f32 %v2255, %v1450
        %v2257 = vmax.f32 %v2256, %v1456
        %v2258 = vmax.f32 %v2257, %v1462
        %v2259 = vmax.f32 %v2258, %v1468
        %v2260 = vmax.f32 %v2259, %v1474
        %v2261 = vmax.f32 %v2260, %v1480
        %v2262 = vmax.f32 %v2261, %v1486
        %v2263 = vmax.f32 %v2262, %v1492
        %v2264 = vmax.f32 %v2263, %v1498
        %v2265 = vmax.f32 %v2264, %v1504
        %v2266 = vmax.f32 %v2265, %v1510
        %v2267 = vmax.f32 %v2266, %v1516
        %v2268 = vmax.f32 %v2267, %v1522
        %v2269 = vmax.f32 %v2268, %v1528
        %v2270 = vmax.f32 %v2269, %v1534
        %v2271 = vmax.f32 %v2270, %v1540
        %v2272 = vmax.f32 %v2271, %v1546
        %v2273 = vmax.f32 %v2272, %v1552
        %v2274 = vmax.f32 %v2273, %v1558
        %v2275 = vmax.f32 %v2274, %v1564
        %v2276 = vmax.f32 %v2275, %v1570
        %v2277 = vmax.f32 %v2276, %v1576
        %v2278 = vmax.f32 %v2277, %v1582
        %v2279 = vmax.f32 %v2278, %v1588
        %v2280 = vmax.f32 %v2279, %v1594
        %v2281 = vmax.f32 %v2280, %v1600
        %v2282 = vmax.f32 %v2281, %v1606
        %v2283 = vmax.f32 %v2282, %v1612
        %v2284 = vmax.f32 %v2283, %v1618
        %v2285 = vmax.f32 %v2284, %v1624
        %v2286 = vmax.f32 %v2285, %v1630
        %v2287 = vmax.f32 %v2286, %v1636
        %v2288 = vmax.f32 %v2287, %v1642
        %v2289 = vmax.f32 %v2288, %v1648
        %v2290 = vmax.f32 %v2289, %v1654
        %v2291 = vmax.f32 %v2290, %v1660
        %v2292 = vmax.f32 %v2291, %v1666
        %v2293 = vmax.f32 %v2292, %v1672
        %v2294 = vmax.f32 %v2293, %v1678
        %v2295 = vmax.f32 %v2294, %v1684
        %v2296 = vmax.f32 %v2295, %v1690
        %v2297 = vmax.f32 %v2296, %v1696
        %v2298 = vmax.f32 %v2297, %v1702
        %v2299 = vmax.f32 %v2298, %v1708
        %v2300 = vmax.f32 %v2299, %v1714
        %v2301 = vmax.f32 %v2300, %v1720
        %v2302 = vmax.f32 %v2301, %v1726
        %v2303 = vmax.f32 %v2302, %v1732
        %v2304 = vmax.f32 %v2303, %v1738
        %v2305 = vmax.f32 %v2304, %v1744
        %v2306 = vmax.f32 %v2305, %v1750
        %v2307 = vmax.f32 %v2306, %v1756
        %v2308 = vmax.f32 %v2307, %v1762
        %v2309 = vmax.f32 %v2308, %v1768
        %v2310 = vmax.f32 %v2309, %v1774
        %v2311 = vmax.f32 %v2310, %v1780
        %v2312 = vmax.f32 %v2311, %v1786
        %v2313 = vmax.f32 %v2312, %v1792
        %v2314 = vmax.f32 %v2313, %v1798
        %v2315 = vrot.slane %v2314, 4
        %v2316 = vmax.f32 %v2314, %v2315
        %v2317 = vrot.slane %v2316, 2
        %v2318 = vmax.f32 %v2316, %v2317
        %v2319 = vrot.slane %v2318, 1
        %v2320 = vmax.f32 %v2318, %v2319
        %v2321 = vmax.f32 %v1422, %v1428
        %v2322 = vmax.f32 %v2321, %v1434
        %v2323 = vmax.f32 %v2322, %v1440
        %v2324 = vmax.f32 %v2323, %v1446
        %v2325 = vmax.f32 %v2324, %v1452
        %v2326 = vmax.f32 %v2325, %v1458
        %v2327 = vmax.f32 %v2326, %v1464
        %v2328 = vmax.f32 %v2327, %v1470
        %v2329 = vmax.f32 %v2328, %v1476
        %v2330 = vmax.f32 %v2329, %v1482
        %v2331 = vmax.f32 %v2330, %v1488
        %v2332 = vmax.f32 %v2331, %v1494
        %v2333 = vmax.f32 %v2332, %v1500
        %v2334 = vmax.f32 %v2333, %v1506
        %v2335 = vmax.f32 %v2334, %v1512
        %v2336 = vmax.f32 %v2335, %v1518
        %v2337 = vmax.f32 %v2336, %v1524
        %v2338 = vmax.f32 %v2337, %v1530
        %v2339 = vmax.f32 %v2338, %v1536
        %v2340 = vmax.f32 %v2339, %v1542
        %v2341 = vmax.f32 %v2340, %v1548
        %v2342 = vmax.f32 %v2341, %v1554
        %v2343 = vmax.f32 %v2342, %v1560
        %v2344 = vmax.f32 %v2343, %v1566
        %v2345 = vmax.f32 %v2344, %v1572
        %v2346 = vmax.f32 %v2345, %v1578
        %v2347 = vmax.f32 %v2346, %v1584
        %v2348 = vmax.f32 %v2347, %v1590
        %v2349 = vmax.f32 %v2348, %v1596
        %v2350 = vmax.f32 %v2349, %v1602
        %v2351 = vmax.f32 %v2350, %v1608
        %v2352 = vmax.f32 %v2351, %v1614
        %v2353 = vmax.f32 %v2352, %v1620
        %v2354 = vmax.f32 %v2353, %v1626
        %v2355 = vmax.f32 %v2354, %v1632
        %v2356 = vmax.f32 %v2355, %v1638
        %v2357 = vmax.f32 %v2356, %v1644
        %v2358 = vmax.f32 %v2357, %v1650
        %v2359 = vmax.f32 %v2358, %v1656
        %v2360 = vmax.f32 %v2359, %v1662
        %v2361 = vmax.f32 %v2360, %v1668
        %v2362 = vmax.f32 %v2361, %v1674
        %v2363 = vmax.f32 %v2362, %v1680
        %v2364 = vmax.f32 %v2363, %v1686
        %v2365 = vmax.f32 %v2364, %v1692
        %v2366 = vmax.f32 %v2365, %v1698
        %v2367 = vmax.f32 %v2366, %v1704
        %v2368 = vmax.f32 %v2367, %v1710
        %v2369 = vmax.f32 %v2368, %v1716
        %v2370 = vmax.f32 %v2369, %v1722
        %v2371 = vmax.f32 %v2370, %v1728
        %v2372 = vmax.f32 %v2371, %v1734
        %v2373 = vmax.f32 %v2372, %v1740
        %v2374 = vmax.f32 %v2373, %v1746
        %v2375 = vmax.f32 %v2374, %v1752
        %v2376 = vmax.f32 %v2375, %v1758
        %v2377 = vmax.f32 %v2376, %v1764
        %v2378 = vmax.f32 %v2377, %v1770
        %v2379 = vmax.f32 %v2378, %v1776
        %v2380 = vmax.f32 %v2379, %v1782
        %v2381 = vmax.f32 %v2380, %v1788
        %v2382 = vmax.f32 %v2381, %v1794
        %v2383 = vmax.f32 %v2382, %v1800
        %v2384 = vrot.slane %v2383, 4
        %v2385 = vmax.f32 %v2383, %v2384
        %v2386 = vrot.slane %v2385, 2
        %v2387 = vmax.f32 %v2385, %v2386
        %v2388 = vrot.slane %v2387, 1
        %v2389 = vmax.f32 %v2387, %v2388
        %v2390 = vmax.f32 %v1869, %v1875
        %v2391 = vmax.f32 %v2390, %v1881
        %v2392 = vmax.f32 %v2391, %v1887
        %v2393 = vmax.f32 %v2392, %v1893
        %v2394 = vmax.f32 %v2393, %v1899
        %v2395 = vmax.f32 %v2394, %v1905
        %v2396 = vmax.f32 %v2395, %v1911
        %v2397 = vmax.f32 %v2396, %v1917
        %v2398 = vmax.f32 %v2397, %v1923
        %v2399 = vmax.f32 %v2398, %v1929
        %v2400 = vmax.f32 %v2399, %v1935
        %v2401 = vmax.f32 %v2400, %v1941
        %v2402 = vmax.f32 %v2401, %v1947
        %v2403 = vmax.f32 %v2402, %v1953
        %v2404 = vmax.f32 %v2403, %v1959
        %v2405 = vmax.f32 %v2404, %v1965
        %v2406 = vmax.f32 %v2405, %v1971
        %v2407 = vmax.f32 %v2406, %v1977
        %v2408 = vmax.f32 %v2407, %v1983
        %v2409 = vmax.f32 %v2408, %v1989
        %v2410 = vmax.f32 %v2409, %v1995
        %v2411 = vmax.f32 %v2410, %v2001
        %v2412 = vmax.f32 %v2411, %v2007
        %v2413 = vmax.f32 %v2412, %v2013
        %v2414 = vmax.f32 %v2413, %v2019
        %v2415 = vmax.f32 %v2414, %v2025
        %v2416 = vmax.f32 %v2415, %v2031
        %v2417 = vmax.f32 %v2416, %v2037
        %v2418 = vmax.f32 %v2417, %v2043
        %v2419 = vmax.f32 %v2418, %v2049
        %v2420 = vmax.f32 %v2419, %v2055
        %v2421 = vmax.f32 %v2420, %v2061
        %v2422 = vmax.f32 %v2421, %v2067
        %v2423 = vmax.f32 %v2422, %v2073
        %v2424 = vmax.f32 %v2423, %v2079
        %v2425 = vmax.f32 %v2424, %v2085
        %v2426 = vmax.f32 %v2425, %v2091
        %v2427 = vmax.f32 %v2426, %v2097
        %v2428 = vmax.f32 %v2427, %v2103
        %v2429 = vmax.f32 %v2428, %v2109
        %v2430 = vmax.f32 %v2429, %v2115
        %v2431 = vmax.f32 %v2430, %v2121
        %v2432 = vmax.f32 %v2431, %v2127
        %v2433 = vmax.f32 %v2432, %v2133
        %v2434 = vmax.f32 %v2433, %v2139
        %v2435 = vmax.f32 %v2434, %v2145
        %v2436 = vmax.f32 %v2435, %v2151
        %v2437 = vmax.f32 %v2436, %v2157
        %v2438 = vmax.f32 %v2437, %v2163
        %v2439 = vmax.f32 %v2438, %v2169
        %v2440 = vmax.f32 %v2439, %v2175
        %v2441 = vmax.f32 %v2440, %v2181
        %v2442 = vmax.f32 %v2441, %v2187
        %v2443 = vmax.f32 %v2442, %v2193
        %v2444 = vmax.f32 %v2443, %v2199
        %v2445 = vmax.f32 %v2444, %v2205
        %v2446 = vmax.f32 %v2445, %v2211
        %v2447 = vmax.f32 %v2446, %v2217
        %v2448 = vmax.f32 %v2447, %v2223
        %v2449 = vmax.f32 %v2448, %v2229
        %v2450 = vmax.f32 %v2449, %v2235
        %v2451 = vmax.f32 %v2450, %v2241
        %v2452 = vmax.f32 %v2451, %v2247
        %v2453 = vrot.slane %v2452, 4
        %v2454 = vmax.f32 %v2452, %v2453
        %v2455 = vrot.slane %v2454, 2
        %v2456 = vmax.f32 %v2454, %v2455
        %v2457 = vrot.slane %v2456, 1
        %v2458 = vmax.f32 %v2456, %v2457
        %v2459 = vmax.f32 %v1871, %v1877
        %v2460 = vmax.f32 %v2459, %v1883
        %v2461 = vmax.f32 %v2460, %v1889
        %v2462 = vmax.f32 %v2461, %v1895
        %v2463 = vmax.f32 %v2462, %v1901
        %v2464 = vmax.f32 %v2463, %v1907
        %v2465 = vmax.f32 %v2464, %v1913
        %v2466 = vmax.f32 %v2465, %v1919
        %v2467 = vmax.f32 %v2466, %v1925
        %v2468 = vmax.f32 %v2467, %v1931
        %v2469 = vmax.f32 %v2468, %v1937
        %v2470 = vmax.f32 %v2469, %v1943
        %v2471 = vmax.f32 %v2470, %v1949
        %v2472 = vmax.f32 %v2471, %v1955
        %v2473 = vmax.f32 %v2472, %v1961
        %v2474 = vmax.f32 %v2473, %v1967
        %v2475 = vmax.f32 %v2474, %v1973
        %v2476 = vmax.f32 %v2475, %v1979
        %v2477 = vmax.f32 %v2476, %v1985
        %v2478 = vmax.f32 %v2477, %v1991
        %v2479 = vmax.f32 %v2478, %v1997
        %v2480 = vmax.f32 %v2479, %v2003
        %v2481 = vmax.f32 %v2480, %v2009
        %v2482 = vmax.f32 %v2481, %v2015
        %v2483 = vmax.f32 %v2482, %v2021
        %v2484 = vmax.f32 %v2483, %v2027
        %v2485 = vmax.f32 %v2484, %v2033
        %v2486 = vmax.f32 %v2485, %v2039
        %v2487 = vmax.f32 %v2486, %v2045
        %v2488 = vmax.f32 %v2487, %v2051
        %v2489 = vmax.f32 %v2488, %v2057
        %v2490 = vmax.f32 %v2489, %v2063
        %v2491 = vmax.f32 %v2490, %v2069
        %v2492 = vmax.f32 %v2491, %v2075
        %v2493 = vmax.f32 %v2492, %v2081
        %v2494 = vmax.f32 %v2493, %v2087
        %v2495 = vmax.f32 %v2494, %v2093
        %v2496 = vmax.f32 %v2495, %v2099
        %v2497 = vmax.f32 %v2496, %v2105
        %v2498 = vmax.f32 %v2497, %v2111
        %v2499 = vmax.f32 %v2498, %v2117
        %v2500 = vmax.f32 %v2499, %v2123
        %v2501 = vmax.f32 %v2500, %v2129
        %v2502 = vmax.f32 %v2501, %v2135
        %v2503 = vmax.f32 %v2502, %v2141
        %v2504 = vmax.f32 %v2503, %v2147
        %v2505 = vmax.f32 %v2504, %v2153
        %v2506 = vmax.f32 %v2505, %v2159
        %v2507 = vmax.f32 %v2506, %v2165
        %v2508 = vmax.f32 %v2507, %v2171
        %v2509 = vmax.f32 %v2508, %v2177
        %v2510 = vmax.f32 %v2509, %v2183
        %v2511 = vmax.f32 %v2510, %v2189
        %v2512 = vmax.f32 %v2511, %v2195
        %v2513 = vmax.f32 %v2512, %v2201
        %v2514 = vmax.f32 %v2513, %v2207
        %v2515 = vmax.f32 %v2514, %v2213
        %v2516 = vmax.f32 %v2515, %v2219
        %v2517 = vmax.f32 %v2516, %v2225
        %v2518 = vmax.f32 %v2517, %v2231
        %v2519 = vmax.f32 %v2518, %v2237
        %v2520 = vmax.f32 %v2519, %v2243
        %v2521 = vmax.f32 %v2520, %v2249
        %v2522 = vrot.slane %v2521, 4
        %v2523 = vmax.f32 %v2521, %v2522
        %v2524 = vrot.slane %v2523, 2
        %v2525 = vmax.f32 %v2523, %v2524
        %v2526 = vrot.slane %v2525, 1
        %v2527 = vmax.f32 %v2525, %v2526
        %v2532 = vcombine.low %v2320, %v2389
        %v2533 = vcombine.low %v2458, %v2527
        %v2535 = vunpack.c.l.s4 1966171168
        %v2536 = vunpack.c.0.s8 %v2535
        %v2537 = vlaneseq
        %v2538 = vshrl.u32 %v2537, 7
        %v2539 = vsub.s32 %v2536, %v2538
        %v2540 = vrot.slane %v2532, %v2539
        %v2542 = vunpack.c.l.s4 1966171168
        %v2543 = vunpack.c.0.s8 %v2542
        %v2544 = vlaneseq
        %v2545 = vshrl.u32 %v2544, 7
        %v2546 = vsub.s32 %v2543, %v2545
        %v2547 = vrot.slane %v2533, %v2546
        %v2548 = vcombine.low %v2540, %v2547
        %v2550 = vunpack.c.l.s4 1966171168
        %v2551 = vunpack.c.0.s8 %v2550
        %v2552 = vlaneseq
        %v2553 = vshrl.u32 %v2552, 7
        %v2554 = vsub.s32 %v2551, %v2553
        %v2555 = vrot.slane %v2548, %v2554
        %v2557 = vmax.f32 %v2251, %v2555
        %v2558 = vsub.f32 %v2251, %v2557
        %v2559 = vmul.f32 %v2558, 1.442695
        %v2560 = vpow.pop %v2559
        %v2562 = vlaneseq
        %v2563 = vshrl.u32 %v2562, 7
        %v2564 = vsub.s32 0, %v2563
        %v2565 = vrot.slane %v2557, %v2564
        %v2566 = vlaneseq
        %v2567 = vshrl.u32 %v2566, 7
        %v2568 = vsub.s32 1, %v2567
        %v2569 = vrot.slane %v2557, %v2568
        %v2570 = vlaneseq
        %v2571 = vshrl.u32 %v2570, 7
        %v2572 = vsub.s32 2, %v2571
        %v2573 = vrot.slane %v2557, %v2572
        %v2574 = vlaneseq
        %v2575 = vshrl.u32 %v2574, 7
        %v2576 = vsub.s32 3, %v2575
        %v2577 = vrot.slane %v2557, %v2576
        %v2582 = vsub.f32 %v1420, %v2565
        %v2583 = vsub.f32 %v1422, %v2569
        %v2584 = vsub.f32 %v1869, %v2573
        %v2585 = vsub.f32 %v1871, %v2577
        %v2586 = vsub.f32 %v1426, %v2565
        %v2587 = vsub.f32 %v1428, %v2569
        %v2588 = vsub.f32 %v1875, %v2573
        %v2589 = vsub.f32 %v1877, %v2577
        %v2590 = vsub.f32 %v1432, %v2565
        %v2591 = vsub.f32 %v1434, %v2569
        %v2592 = vsub.f32 %v1881, %v2573
        %v2593 = vsub.f32 %v1883, %v2577
        %v2594 = vsub.f32 %v1438, %v2565
        %v2595 = vsub.f32 %v1440, %v2569
        %v2596 = vsub.f32 %v1887, %v2573
        %v2597 = vsub.f32 %v1889, %v2577
        %v2598 = vsub.f32 %v1444, %v2565
        %v2599 = vsub.f32 %v1446, %v2569
        %v2600 = vsub.f32 %v1893, %v2573
        %v2601 = vsub.f32 %v1895, %v2577
        %v2602 = vsub.f32 %v1450, %v2565
        %v2603 = vsub.f32 %v1452, %v2569
        %v2604 = vsub.f32 %v1899, %v2573
        %v2605 = vsub.f32 %v1901, %v2577
        %v2606 = vsub.f32 %v1456, %v2565
        %v2607 = vsub.f32 %v1458, %v2569
        %v2608 = vsub.f32 %v1905, %v2573
        %v2609 = vsub.f32 %v1907, %v2577
        %v2610 = vsub.f32 %v1462, %v2565
        %v2611 = vsub.f32 %v1464, %v2569
        %v2612 = vsub.f32 %v1911, %v2573
        %v2613 = vsub.f32 %v1913, %v2577
        %v2614 = vsub.f32 %v1468, %v2565
        %v2615 = vsub.f32 %v1470, %v2569
        %v2616 = vsub.f32 %v1917, %v2573
        %v2617 = vsub.f32 %v1919, %v2577
        %v2618 = vsub.f32 %v1474, %v2565
        %v2619 = vsub.f32 %v1476, %v2569
        %v2620 = vsub.f32 %v1923, %v2573
        %v2621 = vsub.f32 %v1925, %v2577
        %v2622 = vsub.f32 %v1480, %v2565
        %v2623 = vsub.f32 %v1482, %v2569
        %v2624 = vsub.f32 %v1929, %v2573
        %v2625 = vsub.f32 %v1931, %v2577
        %v2626 = vsub.f32 %v1486, %v2565
        %v2627 = vsub.f32 %v1488, %v2569
        %v2628 = vsub.f32 %v1935, %v2573
        %v2629 = vsub.f32 %v1937, %v2577
        %v2630 = vsub.f32 %v1492, %v2565
        %v2631 = vsub.f32 %v1494, %v2569
        %v2632 = vsub.f32 %v1941, %v2573
        %v2633 = vsub.f32 %v1943, %v2577
        %v2634 = vsub.f32 %v1498, %v2565
        %v2635 = vsub.f32 %v1500, %v2569
        %v2636 = vsub.f32 %v1947, %v2573
        %v2637 = vsub.f32 %v1949, %v2577
        %v2638 = vsub.f32 %v1504, %v2565
        %v2639 = vsub.f32 %v1506, %v2569
        %v2640 = vsub.f32 %v1953, %v2573
        %v2641 = vsub.f32 %v1955, %v2577
        %v2642 = vsub.f32 %v1510, %v2565
        %v2643 = vsub.f32 %v1512, %v2569
        %v2644 = vsub.f32 %v1959, %v2573
        %v2645 = vsub.f32 %v1961, %v2577
        %v2646 = vsub.f32 %v1516, %v2565
        %v2647 = vsub.f32 %v1518, %v2569
        %v2648 = vsub.f32 %v1965, %v2573
        %v2649 = vsub.f32 %v1967, %v2577
        %v2650 = vsub.f32 %v1522, %v2565
        %v2651 = vsub.f32 %v1524, %v2569
        %v2652 = vsub.f32 %v1971, %v2573
        %v2653 = vsub.f32 %v1973, %v2577
        %v2654 = vsub.f32 %v1528, %v2565
        %v2655 = vsub.f32 %v1530, %v2569
        %v2656 = vsub.f32 %v1977, %v2573
        %v2657 = vsub.f32 %v1979, %v2577
        %v2658 = vsub.f32 %v1534, %v2565
        %v2659 = vsub.f32 %v1536, %v2569
        %v2660 = vsub.f32 %v1983, %v2573
        %v2661 = vsub.f32 %v1985, %v2577
        %v2662 = vsub.f32 %v1540, %v2565
        %v2663 = vsub.f32 %v1542, %v2569
        %v2664 = vsub.f32 %v1989, %v2573
        %v2665 = vsub.f32 %v1991, %v2577
        %v2666 = vsub.f32 %v1546, %v2565
        %v2667 = vsub.f32 %v1548, %v2569
        %v2668 = vsub.f32 %v1995, %v2573
        %v2669 = vsub.f32 %v1997, %v2577
        %v2670 = vsub.f32 %v1552, %v2565
        %v2671 = vsub.f32 %v1554, %v2569
        %v2672 = vsub.f32 %v2001, %v2573
        %v2673 = vsub.f32 %v2003, %v2577
        %v2674 = vsub.f32 %v1558, %v2565
        %v2675 = vsub.f32 %v1560, %v2569
        %v2676 = vsub.f32 %v2007, %v2573
        %v2677 = vsub.f32 %v2009, %v2577
        %v2678 = vsub.f32 %v1564, %v2565
        %v2679 = vsub.f32 %v1566, %v2569
        %v2680 = vsub.f32 %v2013, %v2573
        %v2681 = vsub.f32 %v2015, %v2577
        %v2682 = vsub.f32 %v1570, %v2565
        %v2683 = vsub.f32 %v1572, %v2569
        %v2684 = vsub.f32 %v2019, %v2573
        %v2685 = vsub.f32 %v2021, %v2577
        %v2686 = vsub.f32 %v1576, %v2565
        %v2687 = vsub.f32 %v1578, %v2569
        %v2688 = vsub.f32 %v2025, %v2573
        %v2689 = vsub.f32 %v2027, %v2577
        %v2690 = vsub.f32 %v1582, %v2565
        %v2691 = vsub.f32 %v1584, %v2569
        %v2692 = vsub.f32 %v2031, %v2573
        %v2693 = vsub.f32 %v2033, %v2577
        %v2694 = vsub.f32 %v1588, %v2565
        %v2695 = vsub.f32 %v1590, %v2569
        %v2696 = vsub.f32 %v2037, %v2573
        %v2697 = vsub.f32 %v2039, %v2577
        %v2698 = vsub.f32 %v1594, %v2565
        %v2699 = vsub.f32 %v1596, %v2569
        %v2700 = vsub.f32 %v2043, %v2573
        %v2701 = vsub.f32 %v2045, %v2577
        %v2702 = vsub.f32 %v1600, %v2565
        %v2703 = vsub.f32 %v1602, %v2569
        %v2704 = vsub.f32 %v2049, %v2573
        %v2705 = vsub.f32 %v2051, %v2577
        %v2706 = vsub.f32 %v1606, %v2565
        %v2707 = vsub.f32 %v1608, %v2569
        %v2708 = vsub.f32 %v2055, %v2573
        %v2709 = vsub.f32 %v2057, %v2577
        %v2710 = vsub.f32 %v1612, %v2565
        %v2711 = vsub.f32 %v1614, %v2569
        %v2712 = vsub.f32 %v2061, %v2573
        %v2713 = vsub.f32 %v2063, %v2577
        %v2714 = vsub.f32 %v1618, %v2565
        %v2715 = vsub.f32 %v1620, %v2569
        %v2716 = vsub.f32 %v2067, %v2573
        %v2717 = vsub.f32 %v2069, %v2577
        %v2718 = vsub.f32 %v1624, %v2565
        %v2719 = vsub.f32 %v1626, %v2569
        %v2720 = vsub.f32 %v2073, %v2573
        %v2721 = vsub.f32 %v2075, %v2577
        %v2722 = vsub.f32 %v1630, %v2565
        %v2723 = vsub.f32 %v1632, %v2569
        %v2724 = vsub.f32 %v2079, %v2573
        %v2725 = vsub.f32 %v2081, %v2577
        %v2726 = vsub.f32 %v1636, %v2565
        %v2727 = vsub.f32 %v1638, %v2569
        %v2728 = vsub.f32 %v2085, %v2573
        %v2729 = vsub.f32 %v2087, %v2577
        %v2730 = vsub.f32 %v1642, %v2565
        %v2731 = vsub.f32 %v1644, %v2569
        %v2732 = vsub.f32 %v2091, %v2573
        %v2733 = vsub.f32 %v2093, %v2577
        %v2734 = vsub.f32 %v1648, %v2565
        %v2735 = vsub.f32 %v1650, %v2569
        %v2736 = vsub.f32 %v2097, %v2573
        %v2737 = vsub.f32 %v2099, %v2577
        %v2738 = vsub.f32 %v1654, %v2565
        %v2739 = vsub.f32 %v1656, %v2569
        %v2740 = vsub.f32 %v2103, %v2573
        %v2741 = vsub.f32 %v2105, %v2577
        %v2742 = vsub.f32 %v1660, %v2565
        %v2743 = vsub.f32 %v1662, %v2569
        %v2744 = vsub.f32 %v2109, %v2573
        %v2745 = vsub.f32 %v2111, %v2577
        %v2746 = vsub.f32 %v1666, %v2565
        %v2747 = vsub.f32 %v1668, %v2569
        %v2748 = vsub.f32 %v2115, %v2573
        %v2749 = vsub.f32 %v2117, %v2577
        %v2750 = vsub.f32 %v1672, %v2565
        %v2751 = vsub.f32 %v1674, %v2569
        %v2752 = vsub.f32 %v2121, %v2573
        %v2753 = vsub.f32 %v2123, %v2577
        %v2754 = vsub.f32 %v1678, %v2565
        %v2755 = vsub.f32 %v1680, %v2569
        %v2756 = vsub.f32 %v2127, %v2573
        %v2757 = vsub.f32 %v2129, %v2577
        %v2758 = vsub.f32 %v1684, %v2565
        %v2759 = vsub.f32 %v1686, %v2569
        %v2760 = vsub.f32 %v2133, %v2573
        %v2761 = vsub.f32 %v2135, %v2577
        %v2762 = vsub.f32 %v1690, %v2565
        %v2763 = vsub.f32 %v1692, %v2569
        %v2764 = vsub.f32 %v2139, %v2573
        %v2765 = vsub.f32 %v2141, %v2577
        %v2766 = vsub.f32 %v1696, %v2565
        %v2767 = vsub.f32 %v1698, %v2569
        %v2768 = vsub.f32 %v2145, %v2573
        %v2769 = vsub.f32 %v2147, %v2577
        %v2770 = vsub.f32 %v1702, %v2565
        %v2771 = vsub.f32 %v1704, %v2569
        %v2772 = vsub.f32 %v2151, %v2573
        %v2773 = vsub.f32 %v2153, %v2577
        %v2774 = vsub.f32 %v1708, %v2565
        %v2775 = vsub.f32 %v1710, %v2569
        %v2776 = vsub.f32 %v2157, %v2573
        %v2777 = vsub.f32 %v2159, %v2577
        %v2778 = vsub.f32 %v1714, %v2565
        %v2779 = vsub.f32 %v1716, %v2569
        %v2780 = vsub.f32 %v2163, %v2573
        %v2781 = vsub.f32 %v2165, %v2577
        %v2782 = vsub.f32 %v1720, %v2565
        %v2783 = vsub.f32 %v1722, %v2569
        %v2784 = vsub.f32 %v2169, %v2573
        %v2785 = vsub.f32 %v2171, %v2577
        %v2786 = vsub.f32 %v1726, %v2565
        %v2787 = vsub.f32 %v1728, %v2569
        %v2788 = vsub.f32 %v2175, %v2573
        %v2789 = vsub.f32 %v2177, %v2577
        %v2790 = vsub.f32 %v1732, %v2565
        %v2791 = vsub.f32 %v1734, %v2569
        %v2792 = vsub.f32 %v2181, %v2573
        %v2793 = vsub.f32 %v2183, %v2577
        %v2794 = vsub.f32 %v1738, %v2565
        %v2795 = vsub.f32 %v1740, %v2569
        %v2796 = vsub.f32 %v2187, %v2573
        %v2797 = vsub.f32 %v2189, %v2577
        %v2798 = vsub.f32 %v1744, %v2565
        %v2799 = vsub.f32 %v1746, %v2569
        %v2800 = vsub.f32 %v2193, %v2573
        %v2801 = vsub.f32 %v2195, %v2577
        %v2802 = vsub.f32 %v1750, %v2565
        %v2803 = vsub.f32 %v1752, %v2569
        %v2804 = vsub.f32 %v2199, %v2573
        %v2805 = vsub.f32 %v2201, %v2577
        %v2806 = vsub.f32 %v1756, %v2565
        %v2807 = vsub.f32 %v1758, %v2569
        %v2808 = vsub.f32 %v2205, %v2573
        %v2809 = vsub.f32 %v2207, %v2577
        %v2810 = vsub.f32 %v1762, %v2565
        %v2811 = vsub.f32 %v1764, %v2569
        %v2812 = vsub.f32 %v2211, %v2573
        %v2813 = vsub.f32 %v2213, %v2577
        %v2814 = vsub.f32 %v1768, %v2565
        %v2815 = vsub.f32 %v1770, %v2569
        %v2816 = vsub.f32 %v2217, %v2573
        %v2817 = vsub.f32 %v2219, %v2577
        %v2818 = vsub.f32 %v1774, %v2565
        %v2819 = vsub.f32 %v1776, %v2569
        %v2820 = vsub.f32 %v2223, %v2573
        %v2821 = vsub.f32 %v2225, %v2577
        %v2822 = vsub.f32 %v1780, %v2565
        %v2823 = vsub.f32 %v1782, %v2569
        %v2824 = vsub.f32 %v2229, %v2573
        %v2825 = vsub.f32 %v2231, %v2577
        %v2826 = vsub.f32 %v1786, %v2565
        %v2827 = vsub.f32 %v1788, %v2569
        %v2828 = vsub.f32 %v2235, %v2573
        %v2829 = vsub.f32 %v2237, %v2577
        %v2830 = vsub.f32 %v1792, %v2565
        %v2831 = vsub.f32 %v1794, %v2569
        %v2832 = vsub.f32 %v2241, %v2573
        %v2833 = vsub.f32 %v2243, %v2577
        %v2834 = vsub.f32 %v1798, %v2565
        %v2835 = vsub.f32 %v1800, %v2569
        %v2836 = vsub.f32 %v2247, %v2573
        %v2837 = vsub.f32 %v2249, %v2577
        %v2838 = vmul.f32 %v2582, 1.442695
        %v2839 = vpow.pop %v2838
        %v2840 = vmul.f32 %v2583, 1.442695
        %v2841 = vpow.pop %v2840
        %v2842 = vmul.f32 %v2584, 1.442695
        %v2843 = vpow.pop %v2842
        %v2844 = vmul.f32 %v2585, 1.442695
        %v2845 = vpow.pop %v2844
        %v2846 = vmul.f32 %v2586, 1.442695
        %v2847 = vpow.pop %v2846
        %v2848 = vmul.f32 %v2587, 1.442695
        %v2849 = vpow.pop %v2848
        %v2850 = vmul.f32 %v2588, 1.442695
        %v2851 = vpow.pop %v2850
        %v2852 = vmul.f32 %v2589, 1.442695
        %v2853 = vpow.pop %v2852
        %v2854 = vmul.f32 %v2590, 1.442695
        %v2855 = vpow.pop %v2854
        %v2856 = vmul.f32 %v2591, 1.442695
        %v2857 = vpow.pop %v2856
        %v2858 = vmul.f32 %v2592, 1.442695
        %v2859 = vpow.pop %v2858
        %v2860 = vmul.f32 %v2593, 1.442695
        %v2861 = vpow.pop %v2860
        %v2862 = vmul.f32 %v2594, 1.442695
        %v2863 = vpow.pop %v2862
        %v2864 = vmul.f32 %v2595, 1.442695
        %v2865 = vpow.pop %v2864
        %v2866 = vmul.f32 %v2596, 1.442695
        %v2867 = vpow.pop %v2866
        %v2868 = vmul.f32 %v2597, 1.442695
        %v2869 = vpow.pop %v2868
        %v2870 = vmul.f32 %v2598, 1.442695
        %v2871 = vpow.pop %v2870
        %v2872 = vmul.f32 %v2599, 1.442695
        %v2873 = vpow.pop %v2872
        %v2874 = vmul.f32 %v2600, 1.442695
        %v2875 = vpow.pop %v2874
        %v2876 = vmul.f32 %v2601, 1.442695
        %v2877 = vpow.pop %v2876
        %v2878 = vmul.f32 %v2602, 1.442695
        %v2879 = vpow.pop %v2878
        %v2880 = vmul.f32 %v2603, 1.442695
        %v2881 = vpow.pop %v2880
        %v2882 = vmul.f32 %v2604, 1.442695
        %v2883 = vpow.pop %v2882
        %v2884 = vmul.f32 %v2605, 1.442695
        %v2885 = vpow.pop %v2884
        %v2886 = vmul.f32 %v2606, 1.442695
        %v2887 = vpow.pop %v2886
        %v2888 = vmul.f32 %v2607, 1.442695
        %v2889 = vpow.pop %v2888
        %v2890 = vmul.f32 %v2608, 1.442695
        %v2891 = vpow.pop %v2890
        %v2892 = vmul.f32 %v2609, 1.442695
        %v2893 = vpow.pop %v2892
        %v2894 = vmul.f32 %v2610, 1.442695
        %v2895 = vpow.pop %v2894
        %v2896 = vmul.f32 %v2611, 1.442695
        %v2897 = vpow.pop %v2896
        %v2898 = vmul.f32 %v2612, 1.442695
        %v2899 = vpow.pop %v2898
        %v2900 = vmul.f32 %v2613, 1.442695
        %v2901 = vpow.pop %v2900
        %v2902 = vmul.f32 %v2614, 1.442695
        %v2903 = vpow.pop %v2902
        %v2904 = vmul.f32 %v2615, 1.442695
        %v2905 = vpow.pop %v2904
        %v2906 = vmul.f32 %v2616, 1.442695
        %v2907 = vpow.pop %v2906
        %v2908 = vmul.f32 %v2617, 1.442695
        %v2909 = vpow.pop %v2908
        %v2910 = vmul.f32 %v2618, 1.442695
        %v2911 = vpow.pop %v2910
        %v2912 = vmul.f32 %v2619, 1.442695
        %v2913 = vpow.pop %v2912
        %v2914 = vmul.f32 %v2620, 1.442695
        %v2915 = vpow.pop %v2914
        %v2916 = vmul.f32 %v2621, 1.442695
        %v2917 = vpow.pop %v2916
        %v2918 = vmul.f32 %v2622, 1.442695
        %v2919 = vpow.pop %v2918
        %v2920 = vmul.f32 %v2623, 1.442695
        %v2921 = vpow.pop %v2920
        %v2922 = vmul.f32 %v2624, 1.442695
        %v2923 = vpow.pop %v2922
        %v2924 = vmul.f32 %v2625, 1.442695
        %v2925 = vpow.pop %v2924
        %v2926 = vmul.f32 %v2626, 1.442695
        %v2927 = vpow.pop %v2926
        %v2928 = vmul.f32 %v2627, 1.442695
        %v2929 = vpow.pop %v2928
        %v2930 = vmul.f32 %v2628, 1.442695
        %v2931 = vpow.pop %v2930
        %v2932 = vmul.f32 %v2629, 1.442695
        %v2933 = vpow.pop %v2932
        %v2934 = vmul.f32 %v2630, 1.442695
        %v2935 = vpow.pop %v2934
        %v2936 = vmul.f32 %v2631, 1.442695
        %v2937 = vpow.pop %v2936
        %v2938 = vmul.f32 %v2632, 1.442695
        %v2939 = vpow.pop %v2938
        %v2940 = vmul.f32 %v2633, 1.442695
        %v2941 = vpow.pop %v2940
        %v2942 = vmul.f32 %v2634, 1.442695
        %v2943 = vpow.pop %v2942
        %v2944 = vmul.f32 %v2635, 1.442695
        %v2945 = vpow.pop %v2944
        %v2946 = vmul.f32 %v2636, 1.442695
        %v2947 = vpow.pop %v2946
        %v2948 = vmul.f32 %v2637, 1.442695
        %v2949 = vpow.pop %v2948
        %v2950 = vmul.f32 %v2638, 1.442695
        %v2951 = vpow.pop %v2950
        %v2952 = vmul.f32 %v2639, 1.442695
        %v2953 = vpow.pop %v2952
        %v2954 = vmul.f32 %v2640, 1.442695
        %v2955 = vpow.pop %v2954
        %v2956 = vmul.f32 %v2641, 1.442695
        %v2957 = vpow.pop %v2956
        %v2958 = vmul.f32 %v2642, 1.442695
        %v2959 = vpow.pop %v2958
        %v2960 = vmul.f32 %v2643, 1.442695
        %v2961 = vpow.pop %v2960
        %v2962 = vmul.f32 %v2644, 1.442695
        %v2963 = vpow.pop %v2962
        %v2964 = vmul.f32 %v2645, 1.442695
        %v2965 = vpow.pop %v2964
        %v2966 = vmul.f32 %v2646, 1.442695
        %v2967 = vpow.pop %v2966
        %v2968 = vmul.f32 %v2647, 1.442695
        %v2969 = vpow.pop %v2968
        %v2970 = vmul.f32 %v2648, 1.442695
        %v2971 = vpow.pop %v2970
        %v2972 = vmul.f32 %v2649, 1.442695
        %v2973 = vpow.pop %v2972
        %v2974 = vmul.f32 %v2650, 1.442695
        %v2975 = vpow.pop %v2974
        %v2976 = vmul.f32 %v2651, 1.442695
        %v2977 = vpow.pop %v2976
        %v2978 = vmul.f32 %v2652, 1.442695
        %v2979 = vpow.pop %v2978
        %v2980 = vmul.f32 %v2653, 1.442695
        %v2981 = vpow.pop %v2980
        %v2982 = vmul.f32 %v2654, 1.442695
        %v2983 = vpow.pop %v2982
        %v2984 = vmul.f32 %v2655, 1.442695
        %v2985 = vpow.pop %v2984
        %v2986 = vmul.f32 %v2656, 1.442695
        %v2987 = vpow.pop %v2986
        %v2988 = vmul.f32 %v2657, 1.442695
        %v2989 = vpow.pop %v2988
        %v2990 = vmul.f32 %v2658, 1.442695
        %v2991 = vpow.pop %v2990
        %v2992 = vmul.f32 %v2659, 1.442695
        %v2993 = vpow.pop %v2992
        %v2994 = vmul.f32 %v2660, 1.442695
        %v2995 = vpow.pop %v2994
        %v2996 = vmul.f32 %v2661, 1.442695
        %v2997 = vpow.pop %v2996
        %v2998 = vmul.f32 %v2662, 1.442695
        %v2999 = vpow.pop %v2998
        %v3000 = vmul.f32 %v2663, 1.442695
        %v3001 = vpow.pop %v3000
        %v3002 = vmul.f32 %v2664, 1.442695
        %v3003 = vpow.pop %v3002
        %v3004 = vmul.f32 %v2665, 1.442695
        %v3005 = vpow.pop %v3004
        %v3006 = vmul.f32 %v2666, 1.442695
        %v3007 = vpow.pop %v3006
        %v3008 = vmul.f32 %v2667, 1.442695
        %v3009 = vpow.pop %v3008
        %v3010 = vmul.f32 %v2668, 1.442695
        %v3011 = vpow.pop %v3010
        %v3012 = vmul.f32 %v2669, 1.442695
        %v3013 = vpow.pop %v3012
        %v3014 = vmul.f32 %v2670, 1.442695
        %v3015 = vpow.pop %v3014
        %v3016 = vmul.f32 %v2671, 1.442695
        %v3017 = vpow.pop %v3016
        %v3018 = vmul.f32 %v2672, 1.442695
        %v3019 = vpow.pop %v3018
        %v3020 = vmul.f32 %v2673, 1.442695
        %v3021 = vpow.pop %v3020
        %v3022 = vmul.f32 %v2674, 1.442695
        %v3023 = vpow.pop %v3022
        %v3024 = vmul.f32 %v2675, 1.442695
        %v3025 = vpow.pop %v3024
        %v3026 = vmul.f32 %v2676, 1.442695
        %v3027 = vpow.pop %v3026
        %v3028 = vmul.f32 %v2677, 1.442695
        %v3029 = vpow.pop %v3028
        %v3030 = vmul.f32 %v2678, 1.442695
        %v3031 = vpow.pop %v3030
        %v3032 = vmul.f32 %v2679, 1.442695
        %v3033 = vpow.pop %v3032
        %v3034 = vmul.f32 %v2680, 1.442695
        %v3035 = vpow.pop %v3034
        %v3036 = vmul.f32 %v2681, 1.442695
        %v3037 = vpow.pop %v3036
        %v3038 = vmul.f32 %v2682, 1.442695
        %v3039 = vpow.pop %v3038
        %v3040 = vmul.f32 %v2683, 1.442695
        %v3041 = vpow.pop %v3040
        %v3042 = vmul.f32 %v2684, 1.442695
        %v3043 = vpow.pop %v3042
        %v3044 = vmul.f32 %v2685, 1.442695
        %v3045 = vpow.pop %v3044
        %v3046 = vmul.f32 %v2686, 1.442695
        %v3047 = vpow.pop %v3046
        %v3048 = vmul.f32 %v2687, 1.442695
        %v3049 = vpow.pop %v3048
        %v3050 = vmul.f32 %v2688, 1.442695
        %v3051 = vpow.pop %v3050
        %v3052 = vmul.f32 %v2689, 1.442695
        %v3053 = vpow.pop %v3052
        %v3054 = vmul.f32 %v2690, 1.442695
        %v3055 = vpow.pop %v3054
        %v3056 = vmul.f32 %v2691, 1.442695
        %v3057 = vpow.pop %v3056
        %v3058 = vmul.f32 %v2692, 1.442695
        %v3059 = vpow.pop %v3058
        %v3060 = vmul.f32 %v2693, 1.442695
        %v3061 = vpow.pop %v3060
        %v3062 = vmul.f32 %v2694, 1.442695
        %v3063 = vpow.pop %v3062
        %v3064 = vmul.f32 %v2695, 1.442695
        %v3065 = vpow.pop %v3064
        %v3066 = vmul.f32 %v2696, 1.442695
        %v3067 = vpow.pop %v3066
        %v3068 = vmul.f32 %v2697, 1.442695
        %v3069 = vpow.pop %v3068
        %v3070 = vmul.f32 %v2698, 1.442695
        %v3071 = vpow.pop %v3070
        %v3072 = vmul.f32 %v2699, 1.442695
        %v3073 = vpow.pop %v3072
        %v3074 = vmul.f32 %v2700, 1.442695
        %v3075 = vpow.pop %v3074
        %v3076 = vmul.f32 %v2701, 1.442695
        %v3077 = vpow.pop %v3076
        %v3078 = vmul.f32 %v2702, 1.442695
        %v3079 = vpow.pop %v3078
        %v3080 = vmul.f32 %v2703, 1.442695
        %v3081 = vpow.pop %v3080
        %v3082 = vmul.f32 %v2704, 1.442695
        %v3083 = vpow.pop %v3082
        %v3084 = vmul.f32 %v2705, 1.442695
        %v3085 = vpow.pop %v3084
        %v3086 = vmul.f32 %v2706, 1.442695
        %v3087 = vpow.pop %v3086
        %v3088 = vmul.f32 %v2707, 1.442695
        %v3089 = vpow.pop %v3088
        %v3090 = vmul.f32 %v2708, 1.442695
        %v3091 = vpow.pop %v3090
        %v3092 = vmul.f32 %v2709, 1.442695
        %v3093 = vpow.pop %v3092
        %v3094 = vmul.f32 %v2710, 1.442695
        %v3095 = vpow.pop %v3094
        %v3096 = vmul.f32 %v2711, 1.442695
        %v3097 = vpow.pop %v3096
        %v3098 = vmul.f32 %v2712, 1.442695
        %v3099 = vpow.pop %v3098
        %v3100 = vmul.f32 %v2713, 1.442695
        %v3101 = vpow.pop %v3100
        %v3102 = vmul.f32 %v2714, 1.442695
        %v3103 = vpow.pop %v3102
        %v3104 = vmul.f32 %v2715, 1.442695
        %v3105 = vpow.pop %v3104
        %v3106 = vmul.f32 %v2716, 1.442695
        %v3107 = vpow.pop %v3106
        %v3108 = vmul.f32 %v2717, 1.442695
        %v3109 = vpow.pop %v3108
        %v3110 = vmul.f32 %v2718, 1.442695
        %v3111 = vpow.pop %v3110
        %v3112 = vmul.f32 %v2719, 1.442695
        %v3113 = vpow.pop %v3112
        %v3114 = vmul.f32 %v2720, 1.442695
        %v3115 = vpow.pop %v3114
        %v3116 = vmul.f32 %v2721, 1.442695
        %v3117 = vpow.pop %v3116
        %v3118 = vmul.f32 %v2722, 1.442695
        %v3119 = vpow.pop %v3118
        %v3120 = vmul.f32 %v2723, 1.442695
        %v3121 = vpow.pop %v3120
        %v3122 = vmul.f32 %v2724, 1.442695
        %v3123 = vpow.pop %v3122
        %v3124 = vmul.f32 %v2725, 1.442695
        %v3125 = vpow.pop %v3124
        %v3126 = vmul.f32 %v2726, 1.442695
        %v3127 = vpow.pop %v3126
        %v3128 = vmul.f32 %v2727, 1.442695
        %v3129 = vpow.pop %v3128
        %v3130 = vmul.f32 %v2728, 1.442695
        %v3131 = vpow.pop %v3130
        %v3132 = vmul.f32 %v2729, 1.442695
        %v3133 = vpow.pop %v3132
        %v3134 = vmul.f32 %v2730, 1.442695
        %v3135 = vpow.pop %v3134
        %v3136 = vmul.f32 %v2731, 1.442695
        %v3137 = vpow.pop %v3136
        %v3138 = vmul.f32 %v2732, 1.442695
        %v3139 = vpow.pop %v3138
        %v3140 = vmul.f32 %v2733, 1.442695
        %v3141 = vpow.pop %v3140
        %v3142 = vmul.f32 %v2734, 1.442695
        %v3143 = vpow.pop %v3142
        %v3144 = vmul.f32 %v2735, 1.442695
        %v3145 = vpow.pop %v3144
        %v3146 = vmul.f32 %v2736, 1.442695
        %v3147 = vpow.pop %v3146
        %v3148 = vmul.f32 %v2737, 1.442695
        %v3149 = vpow.pop %v3148
        %v3150 = vmul.f32 %v2738, 1.442695
        %v3151 = vpow.pop %v3150
        %v3152 = vmul.f32 %v2739, 1.442695
        %v3153 = vpow.pop %v3152
        %v3154 = vmul.f32 %v2740, 1.442695
        %v3155 = vpow.pop %v3154
        %v3156 = vmul.f32 %v2741, 1.442695
        %v3157 = vpow.pop %v3156
        %v3158 = vmul.f32 %v2742, 1.442695
        %v3159 = vpow.pop %v3158
        %v3160 = vmul.f32 %v2743, 1.442695
        %v3161 = vpow.pop %v3160
        %v3162 = vmul.f32 %v2744, 1.442695
        %v3163 = vpow.pop %v3162
        %v3164 = vmul.f32 %v2745, 1.442695
        %v3165 = vpow.pop %v3164
        %v3166 = vmul.f32 %v2746, 1.442695
        %v3167 = vpow.pop %v3166
        %v3168 = vmul.f32 %v2747, 1.442695
        %v3169 = vpow.pop %v3168
        %v3170 = vmul.f32 %v2748, 1.442695
        %v3171 = vpow.pop %v3170
        %v3172 = vmul.f32 %v2749, 1.442695
        %v3173 = vpow.pop %v3172
        %v3174 = vmul.f32 %v2750, 1.442695
        %v3175 = vpow.pop %v3174
        %v3176 = vmul.f32 %v2751, 1.442695
        %v3177 = vpow.pop %v3176
        %v3178 = vmul.f32 %v2752, 1.442695
        %v3179 = vpow.pop %v3178
        %v3180 = vmul.f32 %v2753, 1.442695
        %v3181 = vpow.pop %v3180
        %v3182 = vmul.f32 %v2754, 1.442695
        %v3183 = vpow.pop %v3182
        %v3184 = vmul.f32 %v2755, 1.442695
        %v3185 = vpow.pop %v3184
        %v3186 = vmul.f32 %v2756, 1.442695
        %v3187 = vpow.pop %v3186
        %v3188 = vmul.f32 %v2757, 1.442695
        %v3189 = vpow.pop %v3188
        %v3190 = vmul.f32 %v2758, 1.442695
        %v3191 = vpow.pop %v3190
        %v3192 = vmul.f32 %v2759, 1.442695
        %v3193 = vpow.pop %v3192
        %v3194 = vmul.f32 %v2760, 1.442695
        %v3195 = vpow.pop %v3194
        %v3196 = vmul.f32 %v2761, 1.442695
        %v3197 = vpow.pop %v3196
        %v3198 = vmul.f32 %v2762, 1.442695
        %v3199 = vpow.pop %v3198
        %v3200 = vmul.f32 %v2763, 1.442695
        %v3201 = vpow.pop %v3200
        %v3202 = vmul.f32 %v2764, 1.442695
        %v3203 = vpow.pop %v3202
        %v3204 = vmul.f32 %v2765, 1.442695
        %v3205 = vpow.pop %v3204
        %v3206 = vmul.f32 %v2766, 1.442695
        %v3207 = vpow.pop %v3206
        %v3208 = vmul.f32 %v2767, 1.442695
        %v3209 = vpow.pop %v3208
        %v3210 = vmul.f32 %v2768, 1.442695
        %v3211 = vpow.pop %v3210
        %v3212 = vmul.f32 %v2769, 1.442695
        %v3213 = vpow.pop %v3212
        %v3214 = vmul.f32 %v2770, 1.442695
        %v3215 = vpow.pop %v3214
        %v3216 = vmul.f32 %v2771, 1.442695
        %v3217 = vpow.pop %v3216
        %v3218 = vmul.f32 %v2772, 1.442695
        %v3219 = vpow.pop %v3218
        %v3220 = vmul.f32 %v2773, 1.442695
        %v3221 = vpow.pop %v3220
        %v3222 = vmul.f32 %v2774, 1.442695
        %v3223 = vpow.pop %v3222
        %v3224 = vmul.f32 %v2775, 1.442695
        %v3225 = vpow.pop %v3224
        %v3226 = vmul.f32 %v2776, 1.442695
        %v3227 = vpow.pop %v3226
        %v3228 = vmul.f32 %v2777, 1.442695
        %v3229 = vpow.pop %v3228
        %v3230 = vmul.f32 %v2778, 1.442695
        %v3231 = vpow.pop %v3230
        %v3232 = vmul.f32 %v2779, 1.442695
        %v3233 = vpow.pop %v3232
        %v3234 = vmul.f32 %v2780, 1.442695
        %v3235 = vpow.pop %v3234
        %v3236 = vmul.f32 %v2781, 1.442695
        %v3237 = vpow.pop %v3236
        %v3238 = vmul.f32 %v2782, 1.442695
        %v3239 = vpow.pop %v3238
        %v3240 = vmul.f32 %v2783, 1.442695
        %v3241 = vpow.pop %v3240
        %v3242 = vmul.f32 %v2784, 1.442695
        %v3243 = vpow.pop %v3242
        %v3244 = vmul.f32 %v2785, 1.442695
        %v3245 = vpow.pop %v3244
        %v3246 = vmul.f32 %v2786, 1.442695
        %v3247 = vpow.pop %v3246
        %v3248 = vmul.f32 %v2787, 1.442695
        %v3249 = vpow.pop %v3248
        %v3250 = vmul.f32 %v2788, 1.442695
        %v3251 = vpow.pop %v3250
        %v3252 = vmul.f32 %v2789, 1.442695
        %v3253 = vpow.pop %v3252
        %v3254 = vmul.f32 %v2790, 1.442695
        %v3255 = vpow.pop %v3254
        %v3256 = vmul.f32 %v2791, 1.442695
        %v3257 = vpow.pop %v3256
        %v3258 = vmul.f32 %v2792, 1.442695
        %v3259 = vpow.pop %v3258
        %v3260 = vmul.f32 %v2793, 1.442695
        %v3261 = vpow.pop %v3260
        %v3262 = vmul.f32 %v2794, 1.442695
        %v3263 = vpow.pop %v3262
        %v3264 = vmul.f32 %v2795, 1.442695
        %v3265 = vpow.pop %v3264
        %v3266 = vmul.f32 %v2796, 1.442695
        %v3267 = vpow.pop %v3266
        %v3268 = vmul.f32 %v2797, 1.442695
        %v3269 = vpow.pop %v3268
        %v3270 = vmul.f32 %v2798, 1.442695
        %v3271 = vpow.pop %v3270
        %v3272 = vmul.f32 %v2799, 1.442695
        %v3273 = vpow.pop %v3272
        %v3274 = vmul.f32 %v2800, 1.442695
        %v3275 = vpow.pop %v3274
        %v3276 = vmul.f32 %v2801, 1.442695
        %v3277 = vpow.pop %v3276
        %v3278 = vmul.f32 %v2802, 1.442695
        %v3279 = vpow.pop %v3278
        %v3280 = vmul.f32 %v2803, 1.442695
        %v3281 = vpow.pop %v3280
        %v3282 = vmul.f32 %v2804, 1.442695
        %v3283 = vpow.pop %v3282
        %v3284 = vmul.f32 %v2805, 1.442695
        %v3285 = vpow.pop %v3284
        %v3286 = vmul.f32 %v2806, 1.442695
        %v3287 = vpow.pop %v3286
        %v3288 = vmul.f32 %v2807, 1.442695
        %v3289 = vpow.pop %v3288
        %v3290 = vmul.f32 %v2808, 1.442695
        %v3291 = vpow.pop %v3290
        %v3292 = vmul.f32 %v2809, 1.442695
        %v3293 = vpow.pop %v3292
        %v3294 = vmul.f32 %v2810, 1.442695
        %v3295 = vpow.pop %v3294
        %v3296 = vmul.f32 %v2811, 1.442695
        %v3297 = vpow.pop %v3296
        %v3298 = vmul.f32 %v2812, 1.442695
        %v3299 = vpow.pop %v3298
        %v3300 = vmul.f32 %v2813, 1.442695
        %v3301 = vpow.pop %v3300
        %v3302 = vmul.f32 %v2814, 1.442695
        %v3303 = vpow.pop %v3302
        %v3304 = vmul.f32 %v2815, 1.442695
        %v3305 = vpow.pop %v3304
        %v3306 = vmul.f32 %v2816, 1.442695
        %v3307 = vpow.pop %v3306
        %v3308 = vmul.f32 %v2817, 1.442695
        %v3309 = vpow.pop %v3308
        %v3310 = vmul.f32 %v2818, 1.442695
        %v3311 = vpow.pop %v3310
        %v3312 = vmul.f32 %v2819, 1.442695
        %v3313 = vpow.pop %v3312
        %v3314 = vmul.f32 %v2820, 1.442695
        %v3315 = vpow.pop %v3314
        %v3316 = vmul.f32 %v2821, 1.442695
        %v3317 = vpow.pop %v3316
        %v3318 = vmul.f32 %v2822, 1.442695
        %v3319 = vpow.pop %v3318
        %v3320 = vmul.f32 %v2823, 1.442695
        %v3321 = vpow.pop %v3320
        %v3322 = vmul.f32 %v2824, 1.442695
        %v3323 = vpow.pop %v3322
        %v3324 = vmul.f32 %v2825, 1.442695
        %v3325 = vpow.pop %v3324
        %v3326 = vmul.f32 %v2826, 1.442695
        %v3327 = vpow.pop %v3326
        %v3328 = vmul.f32 %v2827, 1.442695
        %v3329 = vpow.pop %v3328
        %v3330 = vmul.f32 %v2828, 1.442695
        %v3331 = vpow.pop %v3330
        %v3332 = vmul.f32 %v2829, 1.442695
        %v3333 = vpow.pop %v3332
        %v3334 = vmul.f32 %v2830, 1.442695
        %v3335 = vpow.pop %v3334
        %v3336 = vmul.f32 %v2831, 1.442695
        %v3337 = vpow.pop %v3336
        %v3338 = vmul.f32 %v2832, 1.442695
        %v3339 = vpow.pop %v3338
        %v3340 = vmul.f32 %v2833, 1.442695
        %v3341 = vpow.pop %v3340
        %v3342 = vmul.f32 %v2834, 1.442695
        %v3343 = vpow.pop %v3342
        %v3344 = vmul.f32 %v2835, 1.442695
        %v3345 = vpow.pop %v3344
        %v3346 = vmul.f32 %v2836, 1.442695
        %v3347 = vpow.pop %v3346
        %v3348 = vmul.f32 %v2837, 1.442695
        %v3349 = vpow.pop %v3348
        %v3350 = vld [vmem:[#allocation4] sm:$0xf]
        %v3351 = vmul.f32 %v2560, %v3350
        %v3352 = vadd.f32 %v2839, %v2847
        %v3353 = vadd.f32 %v3352, %v2855
        %v3354 = vadd.f32 %v3353, %v2863
        %v3355 = vadd.f32 %v3354, %v2871
        %v3356 = vadd.f32 %v3355, %v2879
        %v3357 = vadd.f32 %v3356, %v2887
        %v3358 = vadd.f32 %v3357, %v2895
        %v3359 = vadd.f32 %v3358, %v2903
        %v3360 = vadd.f32 %v3359, %v2911
        %v3361 = vadd.f32 %v3360, %v2919
        %v3362 = vadd.f32 %v3361, %v2927
        %v3363 = vadd.f32 %v3362, %v2935
        %v3364 = vadd.f32 %v3363, %v2943
        %v3365 = vadd.f32 %v3364, %v2951
        %v3366 = vadd.f32 %v3365, %v2959
        %v3367 = vadd.f32 %v3366, %v2967
        %v3368 = vadd.f32 %v3367, %v2975
        %v3369 = vadd.f32 %v3368, %v2983
        %v3370 = vadd.f32 %v3369, %v2991
        %v3371 = vadd.f32 %v3370, %v2999
        %v3372 = vadd.f32 %v3371, %v3007
        %v3373 = vadd.f32 %v3372, %v3015
        %v3374 = vadd.f32 %v3373, %v3023
        %v3375 = vadd.f32 %v3374, %v3031
        %v3376 = vadd.f32 %v3375, %v3039
        %v3377 = vadd.f32 %v3376, %v3047
        %v3378 = vadd.f32 %v3377, %v3055
        %v3379 = vadd.f32 %v3378, %v3063
        %v3380 = vadd.f32 %v3379, %v3071
        %v3381 = vadd.f32 %v3380, %v3079
        %v3382 = vadd.f32 %v3381, %v3087
        %v3383 = vadd.f32 %v3382, %v3095
        %v3384 = vadd.f32 %v3383, %v3103
        %v3385 = vadd.f32 %v3384, %v3111
        %v3386 = vadd.f32 %v3385, %v3119
        %v3387 = vadd.f32 %v3386, %v3127
        %v3388 = vadd.f32 %v3387, %v3135
        %v3389 = vadd.f32 %v3388, %v3143
        %v3390 = vadd.f32 %v3389, %v3151
        %v3391 = vadd.f32 %v3390, %v3159
        %v3392 = vadd.f32 %v3391, %v3167
        %v3393 = vadd.f32 %v3392, %v3175
        %v3394 = vadd.f32 %v3393, %v3183
        %v3395 = vadd.f32 %v3394, %v3191
        %v3396 = vadd.f32 %v3395, %v3199
        %v3397 = vadd.f32 %v3396, %v3207
        %v3398 = vadd.f32 %v3397, %v3215
        %v3399 = vadd.f32 %v3398, %v3223
        %v3400 = vadd.f32 %v3399, %v3231
        %v3401 = vadd.f32 %v3400, %v3239
        %v3402 = vadd.f32 %v3401, %v3247
        %v3403 = vadd.f32 %v3402, %v3255
        %v3404 = vadd.f32 %v3403, %v3263
        %v3405 = vadd.f32 %v3404, %v3271
        %v3406 = vadd.f32 %v3405, %v3279
        %v3407 = vadd.f32 %v3406, %v3287
        %v3408 = vadd.f32 %v3407, %v3295
        %v3409 = vadd.f32 %v3408, %v3303
        %v3410 = vadd.f32 %v3409, %v3311
        %v3411 = vadd.f32 %v3410, %v3319
        %v3412 = vadd.f32 %v3411, %v3327
        %v3413 = vadd.f32 %v3412, %v3335
        %v3414 = vadd.f32 %v3413, %v3343
        %v3415 = vrot.slane %v3414, 4
        %v3416 = vadd.f32 %v3414, %v3415
        %v3417 = vrot.slane %v3416, 2
        %v3418 = vadd.f32 %v3416, %v3417
        %v3419 = vrot.slane %v3418, 1
        %v3420 = vadd.f32 %v3418, %v3419
        %v3421 = vadd.f32 %v2841, %v2849
        %v3422 = vadd.f32 %v3421, %v2857
        %v3423 = vadd.f32 %v3422, %v2865
        %v3424 = vadd.f32 %v3423, %v2873
        %v3425 = vadd.f32 %v3424, %v2881
        %v3426 = vadd.f32 %v3425, %v2889
        %v3427 = vadd.f32 %v3426, %v2897
        %v3428 = vadd.f32 %v3427, %v2905
        %v3429 = vadd.f32 %v3428, %v2913
        %v3430 = vadd.f32 %v3429, %v2921
        %v3431 = vadd.f32 %v3430, %v2929
        %v3432 = vadd.f32 %v3431, %v2937
        %v3433 = vadd.f32 %v3432, %v2945
        %v3434 = vadd.f32 %v3433, %v2953
        %v3435 = vadd.f32 %v3434, %v2961
        %v3436 = vadd.f32 %v3435, %v2969
        %v3437 = vadd.f32 %v3436, %v2977
        %v3438 = vadd.f32 %v3437, %v2985
        %v3439 = vadd.f32 %v3438, %v2993
        %v3440 = vadd.f32 %v3439, %v3001
        %v3441 = vadd.f32 %v3440, %v3009
        %v3442 = vadd.f32 %v3441, %v3017
        %v3443 = vadd.f32 %v3442, %v3025
        %v3444 = vadd.f32 %v3443, %v3033
        %v3445 = vadd.f32 %v3444, %v3041
        %v3446 = vadd.f32 %v3445, %v3049
        %v3447 = vadd.f32 %v3446, %v3057
        %v3448 = vadd.f32 %v3447, %v3065
        %v3449 = vadd.f32 %v3448, %v3073
        %v3450 = vadd.f32 %v3449, %v3081
        %v3451 = vadd.f32 %v3450, %v3089
        %v3452 = vadd.f32 %v3451, %v3097
        %v3453 = vadd.f32 %v3452, %v3105
        %v3454 = vadd.f32 %v3453, %v3113
        %v3455 = vadd.f32 %v3454, %v3121
        %v3456 = vadd.f32 %v3455, %v3129
        %v3457 = vadd.f32 %v3456, %v3137
        %v3458 = vadd.f32 %v3457, %v3145
        %v3459 = vadd.f32 %v3458, %v3153
        %v3460 = vadd.f32 %v3459, %v3161
        %v3461 = vadd.f32 %v3460, %v3169
        %v3462 = vadd.f32 %v3461, %v3177
        %v3463 = vadd.f32 %v3462, %v3185
        %v3464 = vadd.f32 %v3463, %v3193
        %v3465 = vadd.f32 %v3464, %v3201
        %v3466 = vadd.f32 %v3465, %v3209
        %v3467 = vadd.f32 %v3466, %v3217
        %v3468 = vadd.f32 %v3467, %v3225
        %v3469 = vadd.f32 %v3468, %v3233
        %v3470 = vadd.f32 %v3469, %v3241
        %v3471 = vadd.f32 %v3470, %v3249
        %v3472 = vadd.f32 %v3471, %v3257
        %v3473 = vadd.f32 %v3472, %v3265
        %v3474 = vadd.f32 %v3473, %v3273
        %v3475 = vadd.f32 %v3474, %v3281
        %v3476 = vadd.f32 %v3475, %v3289
        %v3477 = vadd.f32 %v3476, %v3297
        %v3478 = vadd.f32 %v3477, %v3305
        %v3479 = vadd.f32 %v3478, %v3313
        %v3480 = vadd.f32 %v3479, %v3321
        %v3481 = vadd.f32 %v3480, %v3329
        %v3482 = vadd.f32 %v3481, %v3337
        %v3483 = vadd.f32 %v3482, %v3345
        %v3484 = vrot.slane %v3483, 4
        %v3485 = vadd.f32 %v3483, %v3484
        %v3486 = vrot.slane %v3485, 2
        %v3487 = vadd.f32 %v3485, %v3486
        %v3488 = vrot.slane %v3487, 1
        %v3489 = vadd.f32 %v3487, %v3488
        %v3490 = vadd.f32 %v2843, %v2851
        %v3491 = vadd.f32 %v3490, %v2859
        %v3492 = vadd.f32 %v3491, %v2867
        %v3493 = vadd.f32 %v3492, %v2875
        %v3494 = vadd.f32 %v3493, %v2883
        %v3495 = vadd.f32 %v3494, %v2891
        %v3496 = vadd.f32 %v3495, %v2899
        %v3497 = vadd.f32 %v3496, %v2907
        %v3498 = vadd.f32 %v3497, %v2915
        %v3499 = vadd.f32 %v3498, %v2923
        %v3500 = vadd.f32 %v3499, %v2931
        %v3501 = vadd.f32 %v3500, %v2939
        %v3502 = vadd.f32 %v3501, %v2947
        %v3503 = vadd.f32 %v3502, %v2955
        %v3504 = vadd.f32 %v3503, %v2963
        %v3505 = vadd.f32 %v3504, %v2971
        %v3506 = vadd.f32 %v3505, %v2979
        %v3507 = vadd.f32 %v3506, %v2987
        %v3508 = vadd.f32 %v3507, %v2995
        %v3509 = vadd.f32 %v3508, %v3003
        %v3510 = vadd.f32 %v3509, %v3011
        %v3511 = vadd.f32 %v3510, %v3019
        %v3512 = vadd.f32 %v3511, %v3027
        %v3513 = vadd.f32 %v3512, %v3035
        %v3514 = vadd.f32 %v3513, %v3043
        %v3515 = vadd.f32 %v3514, %v3051
        %v3516 = vadd.f32 %v3515, %v3059
        %v3517 = vadd.f32 %v3516, %v3067
        %v3518 = vadd.f32 %v3517, %v3075
        %v3519 = vadd.f32 %v3518, %v3083
        %v3520 = vadd.f32 %v3519, %v3091
        %v3521 = vadd.f32 %v3520, %v3099
        %v3522 = vadd.f32 %v3521, %v3107
        %v3523 = vadd.f32 %v3522, %v3115
        %v3524 = vadd.f32 %v3523, %v3123
        %v3525 = vadd.f32 %v3524, %v3131
        %v3526 = vadd.f32 %v3525, %v3139
        %v3527 = vadd.f32 %v3526, %v3147
        %v3528 = vadd.f32 %v3527, %v3155
        %v3529 = vadd.f32 %v3528, %v3163
        %v3530 = vadd.f32 %v3529, %v3171
        %v3531 = vadd.f32 %v3530, %v3179
        %v3532 = vadd.f32 %v3531, %v3187
        %v3533 = vadd.f32 %v3532, %v3195
        %v3534 = vadd.f32 %v3533, %v3203
        %v3535 = vadd.f32 %v3534, %v3211
        %v3536 = vadd.f32 %v3535, %v3219
        %v3537 = vadd.f32 %v3536, %v3227
        %v3538 = vadd.f32 %v3537, %v3235
        %v3539 = vadd.f32 %v3538, %v3243
        %v3540 = vadd.f32 %v3539, %v3251
        %v3541 = vadd.f32 %v3540, %v3259
        %v3542 = vadd.f32 %v3541, %v3267
        %v3543 = vadd.f32 %v3542, %v3275
        %v3544 = vadd.f32 %v3543, %v3283
        %v3545 = vadd.f32 %v3544, %v3291
        %v3546 = vadd.f32 %v3545, %v3299
        %v3547 = vadd.f32 %v3546, %v3307
        %v3548 = vadd.f32 %v3547, %v3315
        %v3549 = vadd.f32 %v3548, %v3323
        %v3550 = vadd.f32 %v3549, %v3331
        %v3551 = vadd.f32 %v3550, %v3339
        %v3552 = vadd.f32 %v3551, %v3347
        %v3553 = vrot.slane %v3552, 4
        %v3554 = vadd.f32 %v3552, %v3553
        %v3555 = vrot.slane %v3554, 2
        %v3556 = vadd.f32 %v3554, %v3555
        %v3557 = vrot.slane %v3556, 1
        %v3558 = vadd.f32 %v3556, %v3557
        %v3559 = vadd.f32 %v2845, %v2853
        %v3560 = vadd.f32 %v3559, %v2861
        %v3561 = vadd.f32 %v3560, %v2869
        %v3562 = vadd.f32 %v3561, %v2877
        %v3563 = vadd.f32 %v3562, %v2885
        %v3564 = vadd.f32 %v3563, %v2893
        %v3565 = vadd.f32 %v3564, %v2901
        %v3566 = vadd.f32 %v3565, %v2909
        %v3567 = vadd.f32 %v3566, %v2917
        %v3568 = vadd.f32 %v3567, %v2925
        %v3569 = vadd.f32 %v3568, %v2933
        %v3570 = vadd.f32 %v3569, %v2941
        %v3571 = vadd.f32 %v3570, %v2949
        %v3572 = vadd.f32 %v3571, %v2957
        %v3573 = vadd.f32 %v3572, %v2965
        %v3574 = vadd.f32 %v3573, %v2973
        %v3575 = vadd.f32 %v3574, %v2981
        %v3576 = vadd.f32 %v3575, %v2989
        %v3577 = vadd.f32 %v3576, %v2997
        %v3578 = vadd.f32 %v3577, %v3005
        %v3579 = vadd.f32 %v3578, %v3013
        %v3580 = vadd.f32 %v3579, %v3021
        %v3581 = vadd.f32 %v3580, %v3029
        %v3582 = vadd.f32 %v3581, %v3037
        %v3583 = vadd.f32 %v3582, %v3045
        %v3584 = vadd.f32 %v3583, %v3053
        %v3585 = vadd.f32 %v3584, %v3061
        %v3586 = vadd.f32 %v3585, %v3069
        %v3587 = vadd.f32 %v3586, %v3077
        %v3588 = vadd.f32 %v3587, %v3085
        %v3589 = vadd.f32 %v3588, %v3093
        %v3590 = vadd.f32 %v3589, %v3101
        %v3591 = vadd.f32 %v3590, %v3109
        %v3592 = vadd.f32 %v3591, %v3117
        %v3593 = vadd.f32 %v3592, %v3125
        %v3594 = vadd.f32 %v3593, %v3133
        %v3595 = vadd.f32 %v3594, %v3141
        %v3596 = vadd.f32 %v3595, %v3149
        %v3597 = vadd.f32 %v3596, %v3157
        %v3598 = vadd.f32 %v3597, %v3165
        %v3599 = vadd.f32 %v3598, %v3173
        %v3600 = vadd.f32 %v3599, %v3181
        %v3601 = vadd.f32 %v3600, %v3189
        %v3602 = vadd.f32 %v3601, %v3197
        %v3603 = vadd.f32 %v3602, %v3205
        %v3604 = vadd.f32 %v3603, %v3213
        %v3605 = vadd.f32 %v3604, %v3221
        %v3606 = vadd.f32 %v3605, %v3229
        %v3607 = vadd.f32 %v3606, %v3237
        %v3608 = vadd.f32 %v3607, %v3245
        %v3609 = vadd.f32 %v3608, %v3253
        %v3610 = vadd.f32 %v3609, %v3261
        %v3611 = vadd.f32 %v3610, %v3269
        %v3612 = vadd.f32 %v3611, %v3277
        %v3613 = vadd.f32 %v3612, %v3285
        %v3614 = vadd.f32 %v3613, %v3293
        %v3615 = vadd.f32 %v3614, %v3301
        %v3616 = vadd.f32 %v3615, %v3309
        %v3617 = vadd.f32 %v3616, %v3317
        %v3618 = vadd.f32 %v3617, %v3325
        %v3619 = vadd.f32 %v3618, %v3333
        %v3620 = vadd.f32 %v3619, %v3341
        %v3621 = vadd.f32 %v3620, %v3349
        %v3622 = vrot.slane %v3621, 4
        %v3623 = vadd.f32 %v3621, %v3622
        %v3624 = vrot.slane %v3623, 2
        %v3625 = vadd.f32 %v3623, %v3624
        %v3626 = vrot.slane %v3625, 1
        %v3627 = vadd.f32 %v3625, %v3626
        %v3632 = vcombine.low %v3420, %v3489
        %v3633 = vcombine.low %v3558, %v3627
        %v3635 = vunpack.c.l.s4 1966171168
        %v3636 = vunpack.c.0.s8 %v3635
        %v3637 = vlaneseq
        %v3638 = vshrl.u32 %v3637, 7
        %v3639 = vsub.s32 %v3636, %v3638
        %v3640 = vrot.slane %v3632, %v3639
        %v3642 = vunpack.c.l.s4 1966171168
        %v3643 = vunpack.c.0.s8 %v3642
        %v3644 = vlaneseq
        %v3645 = vshrl.u32 %v3644, 7
        %v3646 = vsub.s32 %v3643, %v3645
        %v3647 = vrot.slane %v3633, %v3646
        %v3648 = vcombine.low %v3640, %v3647
        %v3650 = vunpack.c.l.s4 1966171168
        %v3651 = vunpack.c.0.s8 %v3650
        %v3652 = vlaneseq
        %v3653 = vshrl.u32 %v3652, 7
        %v3654 = vsub.s32 %v3651, %v3653
        %v3655 = vrot.slane %v3648, %v3654
        %v3657 = vadd.f32 %v3351, %v3655
        %v3658 = vlaneseq
        %vm3659 = vcmp.ge.s32.totalorder %v3658, 0
        %vm3660 = vcmp.lt.s32.totalorder %v3658, 512
        %vm3661 = vmand %vm3659, %vm3660
        %3662 = vst.msk [vmem:[#allocation4] sm:$0xf] %vm3661, %v3657
        %v3663 = vld [vmem:[#allocation5] sm:$0xff]
        %v3664 = vld [vmem:[#allocation5 + $0x8] sm:$0xff]
        %v3665 = vld [vmem:[#allocation5 + $0x10] sm:$0xff]
        %v3666 = vld [vmem:[#allocation5 + $0x18] sm:$0xff]
        %v3667 = vld [vmem:[#allocation5 + $0x20] sm:$0xff]
        %v3668 = vld [vmem:[#allocation5 + $0x28] sm:$0xff]
        %v3669 = vld [vmem:[#allocation5 + $0x30] sm:$0xff]
        %v3670 = vld [vmem:[#allocation5 + $0x38] sm:$0xff]
        %v3671 = vld [vmem:[#allocation5 + $0x40] sm:$0xff]
        %v3672 = vld [vmem:[#allocation5 + $0x48] sm:$0xff]
        %v3673 = vld [vmem:[#allocation5 + $0x50] sm:$0xff]
        %v3674 = vld [vmem:[#allocation5 + $0x58] sm:$0xff]
        %v3675 = vld [vmem:[#allocation5 + $0x60] sm:$0xff]
        %v3676 = vld [vmem:[#allocation5 + $0x68] sm:$0xff]
        %v3677 = vld [vmem:[#allocation5 + $0x70] sm:$0xff]
        %v3678 = vld [vmem:[#allocation5 + $0x78] sm:$0xff]
        %v3680 = vlaneseq
        %v3681 = vshrl.u32 %v3680, 7
        %v3682 = vsub.s32 0, %v3681
        %v3683 = vrot.slane %v2560, %v3682
        %v3684 = vlaneseq
        %v3685 = vshrl.u32 %v3684, 7
        %v3686 = vsub.s32 1, %v3685
        %v3687 = vrot.slane %v2560, %v3686
        %v3688 = vlaneseq
        %v3689 = vshrl.u32 %v3688, 7
        %v3690 = vsub.s32 2, %v3689
        %v3691 = vrot.slane %v2560, %v3690
        %v3692 = vlaneseq
        %v3693 = vshrl.u32 %v3692, 7
        %v3694 = vsub.s32 3, %v3693
        %v3695 = vrot.slane %v2560, %v3694
        %v3700 = vmul.f32 %v3683, %v3663
        %v3701 = vmul.f32 %v3687, %v3664
        %v3702 = vmul.f32 %v3691, %v3665
        %v3703 = vmul.f32 %v3695, %v3666
        %v3704 = vmul.f32 %v3683, %v3667
        %v3705 = vmul.f32 %v3687, %v3668
        %v3706 = vmul.f32 %v3691, %v3669
        %v3707 = vmul.f32 %v3695, %v3670
        %v3708 = vmul.f32 %v3683, %v3671
        %v3709 = vmul.f32 %v3687, %v3672
        %v3710 = vmul.f32 %v3691, %v3673
        %v3711 = vmul.f32 %v3695, %v3674
        %v3712 = vmul.f32 %v3683, %v3675
        %v3713 = vmul.f32 %v3687, %v3676
        %v3714 = vmul.f32 %v3691, %v3677
        %v3715 = vmul.f32 %v3695, %v3678
        %3716 = vmatprep.subr.mxu0 %v2961
        %3717 = vmatpush1.msra.mxu0 %v2959
        %3718 = vmatprep.subr.mxu0 %v2953
        %3719 = vmatpush1.msra.mxu0 %v2951
        %3720 = vmatprep.subr.mxu0 %v2945
        %3721 = vmatpush1.msra.mxu0 %v2943
        %3722 = vmatprep.subr.mxu0 %v2937
        %3723 = vmatpush1.msra.mxu0 %v2935
        %3724 = vmatprep.subr.mxu0 %v2929
        %3725 = vmatpush1.msra.mxu0 %v2927
        %3726 = vmatprep.subr.mxu0 %v2921
        %3727 = vmatpush1.msra.mxu0 %v2919
        %3728 = vmatprep.subr.mxu0 %v2913
        %3729 = vmatpush1.msra.mxu0 %v2911
        %3730 = vmatprep.subr.mxu0 %v2905
        %3731 = vmatpush1.msra.mxu0 %v2903
        %3732 = vmatprep.subr.mxu0 %v2897
        %3733 = vmatpush1.msra.mxu0 %v2895
        %3734 = vmatprep.subr.mxu0 %v2889
        %3735 = vmatpush1.msra.mxu0 %v2887
        %3736 = vmatprep.subr.mxu0 %v2881
        %3737 = vmatpush1.msra.mxu0 %v2879
        %3738 = vmatprep.subr.mxu0 %v2873
        %3739 = vmatpush1.msra.mxu0 %v2871
        %3740 = vmatprep.subr.mxu0 %v2865
        %3741 = vmatpush1.msra.mxu0 %v2863
        %3742 = vmatprep.subr.mxu0 %v2857
        %3743 = vmatpush1.msra.mxu0 %v2855
        %3744 = vmatprep.subr.mxu0 %v2849
        %3745 = vmatpush1.msra.mxu0 %v2847
        %3746 = vmatprep.subr.mxu0 %v2841
        %3747 = vmatpush1.msra.mxu0 %v2839
        %3748 = vmatprep.subr.mxu0 %v3089
        %3749 = vmatpush2.msra.mxu0 %v3087
        %3750 = vmatprep.subr.mxu0 %v3081
        %3751 = vmatpush2.msra.mxu0 %v3079
        %3752 = vmatprep.subr.mxu0 %v3073
        %3753 = vmatpush2.msra.mxu0 %v3071
        %3754 = vmatprep.subr.mxu0 %v3065
        %3755 = vmatpush2.msra.mxu0 %v3063
        %3756 = vmatprep.subr.mxu0 %v3057
        %3757 = vmatpush2.msra.mxu0 %v3055
        %3758 = vmatprep.subr.mxu0 %v3049
        %3759 = vmatpush2.msra.mxu0 %v3047
        %3760 = vmatprep.subr.mxu0 %v3041
        %3761 = vmatpush2.msra.mxu0 %v3039
        %3762 = vmatprep.subr.mxu0 %v3033
        %3763 = vmatpush2.msra.mxu0 %v3031
        %3764 = vmatprep.subr.mxu0 %v3025
        %3765 = vmatpush2.msra.mxu0 %v3023
        %3766 = vmatprep.subr.mxu0 %v3017
        %3767 = vmatpush2.msra.mxu0 %v3015
        %3768 = vmatprep.subr.mxu0 %v3009
        %3769 = vmatpush2.msra.mxu0 %v3007
        %3770 = vmatprep.subr.mxu0 %v3001
        %3771 = vmatpush2.msra.mxu0 %v2999
        %3772 = vmatprep.subr.mxu0 %v2993
        %3773 = vmatpush2.msra.mxu0 %v2991
        %3774 = vmatprep.subr.mxu0 %v2985
        %3775 = vmatpush2.msra.mxu0 %v2983
        %3776 = vmatprep.subr.mxu0 %v2977
        %3777 = vmatpush2.msra.mxu0 %v2975
        %3778 = vmatprep.subr.mxu0 %v2969
        %3779 = vmatpush2.msra.mxu0 %v2967
        %3780 = vmatprep.mubr.f32.mxu0 %v908
        %3781 = vmatmul.mubr.f32.gmra.mxu0 %v906
        %v3782 = vpop.f32.mrf.mxu0
        %v3783 = vadd.f32 0.0, %v3782
        %v3784 = vpop.f32.mrf.mxu0
        %v3785 = vadd.f32 0.0, %v3784
        %3786 = vmatprep.mubr.f32.mxu0 %v914
        %3787 = vmatmul.mubr.f32.gmra.mxu0 %v912
        %v3788 = vpop.f32.mrf.mxu0
        %v3789 = vadd.f32 0.0, %v3788
        %v3790 = vpop.f32.mrf.mxu0
        %v3791 = vadd.f32 0.0, %v3790
        %3792 = vmatprep.mubr.f32.mxu0 %v920
        %3793 = vmatmul.mubr.f32.gmra.mxu0 %v918
        %v3794 = vpop.f32.mrf.mxu0
        %v3795 = vadd.f32 0.0, %v3794
        %v3796 = vpop.f32.mrf.mxu0
        %v3797 = vadd.f32 0.0, %v3796
        %3798 = vmatprep.mubr.f32.mxu0 %v926
        %3799 = vmatmul.mubr.f32.gmra.mxu0 %v924
        %v3800 = vpop.f32.mrf.mxu0
        %v3801 = vadd.f32 0.0, %v3800
        %v3802 = vpop.f32.mrf.mxu0
        %v3803 = vadd.f32 0.0, %v3802
        %3804 = vdwg.mxu0
        %3805 = vmatprep.subr.mxu0 %v3217
        %3806 = vmatpush1.msra.mxu0 %v3215
        %3807 = vmatprep.subr.mxu0 %v3209
        %3808 = vmatpush1.msra.mxu0 %v3207
        %3809 = vmatprep.subr.mxu0 %v3201
        %3810 = vmatpush1.msra.mxu0 %v3199
        %3811 = vmatprep.subr.mxu0 %v3193
        %3812 = vmatpush1.msra.mxu0 %v3191
        %3813 = vmatprep.subr.mxu0 %v3185
        %3814 = vmatpush1.msra.mxu0 %v3183
        %3815 = vmatprep.subr.mxu0 %v3177
        %3816 = vmatpush1.msra.mxu0 %v3175
        %3817 = vmatprep.subr.mxu0 %v3169
        %3818 = vmatpush1.msra.mxu0 %v3167
        %3819 = vmatprep.subr.mxu0 %v3161
        %3820 = vmatpush1.msra.mxu0 %v3159
        %3821 = vmatprep.subr.mxu0 %v3153
        %3822 = vmatpush1.msra.mxu0 %v3151
        %3823 = vmatprep.subr.mxu0 %v3145
        %3824 = vmatpush1.msra.mxu0 %v3143
        %3825 = vmatprep.subr.mxu0 %v3137
        %3826 = vmatpush1.msra.mxu0 %v3135
        %3827 = vmatprep.subr.mxu0 %v3129
        %3828 = vmatpush1.msra.mxu0 %v3127
        %3829 = vmatprep.subr.mxu0 %v3121
        %3830 = vmatpush1.msra.mxu0 %v3119
        %3831 = vmatprep.subr.mxu0 %v3113
        %3832 = vmatpush1.msra.mxu0 %v3111
        %3833 = vmatprep.subr.mxu0 %v3105
        %3834 = vmatpush1.msra.mxu0 %v3103
        %3835 = vmatprep.subr.mxu0 %v3097
        %3836 = vmatpush1.msra.mxu0 %v3095
        %3837 = vmatprep.subr.mxu0 %v3345
        %3838 = vmatpush2.msra.mxu0 %v3343
        %3839 = vmatprep.subr.mxu0 %v3337
        %3840 = vmatpush2.msra.mxu0 %v3335
        %3841 = vmatprep.subr.mxu0 %v3329
        %3842 = vmatpush2.msra.mxu0 %v3327
        %3843 = vmatprep.subr.mxu0 %v3321
        %3844 = vmatpush2.msra.mxu0 %v3319
        %3845 = vmatprep.subr.mxu0 %v3313
        %3846 = vmatpush2.msra.mxu0 %v3311
        %3847 = vmatprep.subr.mxu0 %v3305
        %3848 = vmatpush2.msra.mxu0 %v3303
        %3849 = vmatprep.subr.mxu0 %v3297
        %3850 = vmatpush2.msra.mxu0 %v3295
        %3851 = vmatprep.subr.mxu0 %v3289
        %3852 = vmatpush2.msra.mxu0 %v3287
        %3853 = vmatprep.subr.mxu0 %v3281
        %3854 = vmatpush2.msra.mxu0 %v3279
        %3855 = vmatprep.subr.mxu0 %v3273
        %3856 = vmatpush2.msra.mxu0 %v3271
        %3857 = vmatprep.subr.mxu0 %v3265
        %3858 = vmatpush2.msra.mxu0 %v3263
        %3859 = vmatprep.subr.mxu0 %v3257
        %3860 = vmatpush2.msra.mxu0 %v3255
        %3861 = vmatprep.subr.mxu0 %v3249
        %3862 = vmatpush2.msra.mxu0 %v3247
        %3863 = vmatprep.subr.mxu0 %v3241
        %3864 = vmatpush2.msra.mxu0 %v3239
        %3865 = vmatprep.subr.mxu0 %v3233
        %3866 = vmatpush2.msra.mxu0 %v3231
        %3867 = vmatprep.subr.mxu0 %v3225
        %3868 = vmatpush2.msra.mxu0 %v3223
        %3869 = vmatprep.mubr.f32.mxu0 %v997
        %3870 = vmatmul.mubr.f32.gmra.mxu0 %v995
        %v3871 = vpop.f32.mrf.mxu0
        %v3872 = vadd.f32 %v3783, %v3871
        %v3873 = vpop.f32.mrf.mxu0
        %v3874 = vadd.f32 %v3785, %v3873
        %3875 = vmatprep.mubr.f32.mxu0 %v1003
        %3876 = vmatmul.mubr.f32.gmra.mxu0 %v1001
        %v3877 = vpop.f32.mrf.mxu0
        %v3878 = vadd.f32 %v3789, %v3877
        %v3879 = vpop.f32.mrf.mxu0
        %v3880 = vadd.f32 %v3791, %v3879
        %3881 = vmatprep.mubr.f32.mxu0 %v1009
        %3882 = vmatmul.mubr.f32.gmra.mxu0 %v1007
        %v3883 = vpop.f32.mrf.mxu0
        %v3884 = vadd.f32 %v3795, %v3883
        %v3885 = vpop.f32.mrf.mxu0
        %v3886 = vadd.f32 %v3797, %v3885
        %3887 = vmatprep.mubr.f32.mxu0 %v1015
        %3888 = vmatmul.mubr.f32.gmra.mxu0 %v1013
        %v3889 = vpop.f32.mrf.mxu0
        %v3890 = vadd.f32 %v3801, %v3889
        %v3891 = vpop.f32.mrf.mxu0
        %v3892 = vadd.f32 %v3803, %v3891
        %3893 = vdwg.mxu0
        %3894 = vmatprep.subr.mxu0 %v2965
        %3895 = vmatpush1.msra.mxu0 %v2963
        %3896 = vmatprep.subr.mxu0 %v2957
        %3897 = vmatpush1.msra.mxu0 %v2955
        %3898 = vmatprep.subr.mxu0 %v2949
        %3899 = vmatpush1.msra.mxu0 %v2947
        %3900 = vmatprep.subr.mxu0 %v2941
        %3901 = vmatpush1.msra.mxu0 %v2939
        %3902 = vmatprep.subr.mxu0 %v2933
        %3903 = vmatpush1.msra.mxu0 %v2931
        %3904 = vmatprep.subr.mxu0 %v2925
        %3905 = vmatpush1.msra.mxu0 %v2923
        %3906 = vmatprep.subr.mxu0 %v2917
        %3907 = vmatpush1.msra.mxu0 %v2915
        %3908 = vmatprep.subr.mxu0 %v2909
        %3909 = vmatpush1.msra.mxu0 %v2907
        %3910 = vmatprep.subr.mxu0 %v2901
        %3911 = vmatpush1.msra.mxu0 %v2899
        %3912 = vmatprep.subr.mxu0 %v2893
        %3913 = vmatpush1.msra.mxu0 %v2891
        %3914 = vmatprep.subr.mxu0 %v2885
        %3915 = vmatpush1.msra.mxu0 %v2883
        %3916 = vmatprep.subr.mxu0 %v2877
        %3917 = vmatpush1.msra.mxu0 %v2875
        %3918 = vmatprep.subr.mxu0 %v2869
        %3919 = vmatpush1.msra.mxu0 %v2867
        %3920 = vmatprep.subr.mxu0 %v2861
        %3921 = vmatpush1.msra.mxu0 %v2859
        %3922 = vmatprep.subr.mxu0 %v2853
        %3923 = vmatpush1.msra.mxu0 %v2851
        %3924 = vmatprep.subr.mxu0 %v2845
        %3925 = vmatpush1.msra.mxu0 %v2843
        %3926 = vmatprep.subr.mxu0 %v3093
        %3927 = vmatpush2.msra.mxu0 %v3091
        %3928 = vmatprep.subr.mxu0 %v3085
        %3929 = vmatpush2.msra.mxu0 %v3083
        %3930 = vmatprep.subr.mxu0 %v3077
        %3931 = vmatpush2.msra.mxu0 %v3075
        %3932 = vmatprep.subr.mxu0 %v3069
        %3933 = vmatpush2.msra.mxu0 %v3067
        %3934 = vmatprep.subr.mxu0 %v3061
        %3935 = vmatpush2.msra.mxu0 %v3059
        %3936 = vmatprep.subr.mxu0 %v3053
        %3937 = vmatpush2.msra.mxu0 %v3051
        %3938 = vmatprep.subr.mxu0 %v3045
        %3939 = vmatpush2.msra.mxu0 %v3043
        %3940 = vmatprep.subr.mxu0 %v3037
        %3941 = vmatpush2.msra.mxu0 %v3035
        %3942 = vmatprep.subr.mxu0 %v3029
        %3943 = vmatpush2.msra.mxu0 %v3027
        %3944 = vmatprep.subr.mxu0 %v3021
        %3945 = vmatpush2.msra.mxu0 %v3019
        %3946 = vmatprep.subr.mxu0 %v3013
        %3947 = vmatpush2.msra.mxu0 %v3011
        %3948 = vmatprep.subr.mxu0 %v3005
        %3949 = vmatpush2.msra.mxu0 %v3003
        %3950 = vmatprep.subr.mxu0 %v2997
        %3951 = vmatpush2.msra.mxu0 %v2995
        %3952 = vmatprep.subr.mxu0 %v2989
        %3953 = vmatpush2.msra.mxu0 %v2987
        %3954 = vmatprep.subr.mxu0 %v2981
        %3955 = vmatpush2.msra.mxu0 %v2979
        %3956 = vmatprep.subr.mxu0 %v2973
        %3957 = vmatpush2.msra.mxu0 %v2971
        %3958 = vmatprep.mubr.f32.mxu0 %v908
        %3959 = vmatmul.mubr.f32.gmra.mxu0 %v906
        %v3960 = vpop.f32.mrf.mxu0
        %v3961 = vadd.f32 0.0, %v3960
        %v3962 = vpop.f32.mrf.mxu0
        %v3963 = vadd.f32 0.0, %v3962
        %3964 = vmatprep.mubr.f32.mxu0 %v914
        %3965 = vmatmul.mubr.f32.gmra.mxu0 %v912
        %v3966 = vpop.f32.mrf.mxu0
        %v3967 = vadd.f32 0.0, %v3966
        %v3968 = vpop.f32.mrf.mxu0
        %v3969 = vadd.f32 0.0, %v3968
        %3970 = vmatprep.mubr.f32.mxu0 %v920
        %3971 = vmatmul.mubr.f32.gmra.mxu0 %v918
        %v3972 = vpop.f32.mrf.mxu0
        %v3973 = vadd.f32 0.0, %v3972
        %v3974 = vpop.f32.mrf.mxu0
        %v3975 = vadd.f32 0.0, %v3974
        %3976 = vmatprep.mubr.f32.mxu0 %v926
        %3977 = vmatmul.mubr.f32.gmra.mxu0 %v924
        %v3978 = vpop.f32.mrf.mxu0
        %v3979 = vadd.f32 0.0, %v3978
        %v3980 = vpop.f32.mrf.mxu0
        %v3981 = vadd.f32 0.0, %v3980
        %3982 = vdwg.mxu0
        %3983 = vmatprep.subr.mxu0 %v3221
        %3984 = vmatpush1.msra.mxu0 %v3219
        %3985 = vmatprep.subr.mxu0 %v3213
        %3986 = vmatpush1.msra.mxu0 %v3211
        %3987 = vmatprep.subr.mxu0 %v3205
        %3988 = vmatpush1.msra.mxu0 %v3203
        %3989 = vmatprep.subr.mxu0 %v3197
        %3990 = vmatpush1.msra.mxu0 %v3195
        %3991 = vmatprep.subr.mxu0 %v3189
        %3992 = vmatpush1.msra.mxu0 %v3187
        %3993 = vmatprep.subr.mxu0 %v3181
        %3994 = vmatpush1.msra.mxu0 %v3179
        %3995 = vmatprep.subr.mxu0 %v3173
        %3996 = vmatpush1.msra.mxu0 %v3171
        %3997 = vmatprep.subr.mxu0 %v3165
        %3998 = vmatpush1.msra.mxu0 %v3163
        %3999 = vmatprep.subr.mxu0 %v3157
        %4000 = vmatpush1.msra.mxu0 %v3155
        %4001 = vmatprep.subr.mxu0 %v3149
        %4002 = vmatpush1.msra.mxu0 %v3147
        %4003 = vmatprep.subr.mxu0 %v3141
        %4004 = vmatpush1.msra.mxu0 %v3139
        %4005 = vmatprep.subr.mxu0 %v3133
        %4006 = vmatpush1.msra.mxu0 %v3131
        %4007 = vmatprep.subr.mxu0 %v3125
        %4008 = vmatpush1.msra.mxu0 %v3123
        %4009 = vmatprep.subr.mxu0 %v3117
        %4010 = vmatpush1.msra.mxu0 %v3115
        %4011 = vmatprep.subr.mxu0 %v3109
        %4012 = vmatpush1.msra.mxu0 %v3107
        %4013 = vmatprep.subr.mxu0 %v3101
        %4014 = vmatpush1.msra.mxu0 %v3099
        %4015 = vmatprep.subr.mxu0 %v3349
        %4016 = vmatpush2.msra.mxu0 %v3347
        %4017 = vmatprep.subr.mxu0 %v3341
        %4018 = vmatpush2.msra.mxu0 %v3339
        %4019 = vmatprep.subr.mxu0 %v3333
        %4020 = vmatpush2.msra.mxu0 %v3331
        %4021 = vmatprep.subr.mxu0 %v3325
        %4022 = vmatpush2.msra.mxu0 %v3323
        %4023 = vmatprep.subr.mxu0 %v3317
        %4024 = vmatpush2.msra.mxu0 %v3315
        %4025 = vmatprep.subr.mxu0 %v3309
        %4026 = vmatpush2.msra.mxu0 %v3307
        %4027 = vmatprep.subr.mxu0 %v3301
        %4028 = vmatpush2.msra.mxu0 %v3299
        %4029 = vmatprep.subr.mxu0 %v3293
        %4030 = vmatpush2.msra.mxu0 %v3291
        %4031 = vmatprep.subr.mxu0 %v3285
        %4032 = vmatpush2.msra.mxu0 %v3283
        %4033 = vmatprep.subr.mxu0 %v3277
        %4034 = vmatpush2.msra.mxu0 %v3275
        %4035 = vmatprep.subr.mxu0 %v3269
        %4036 = vmatpush2.msra.mxu0 %v3267
        %4037 = vmatprep.subr.mxu0 %v3261
        %4038 = vmatpush2.msra.mxu0 %v3259
        %4039 = vmatprep.subr.mxu0 %v3253
        %4040 = vmatpush2.msra.mxu0 %v3251
        %4041 = vmatprep.subr.mxu0 %v3245
        %4042 = vmatpush2.msra.mxu0 %v3243
        %4043 = vmatprep.subr.mxu0 %v3237
        %4044 = vmatpush2.msra.mxu0 %v3235
        %4045 = vmatprep.subr.mxu0 %v3229
        %4046 = vmatpush2.msra.mxu0 %v3227
        %4047 = vmatprep.mubr.f32.mxu0 %v997
        %4048 = vmatmul.mubr.f32.gmra.mxu0 %v995
        %v4049 = vpop.f32.mrf.mxu0
        %v4050 = vadd.f32 %v3961, %v4049
        %v4051 = vpop.f32.mrf.mxu0
        %v4052 = vadd.f32 %v3963, %v4051
        %4053 = vmatprep.mubr.f32.mxu0 %v1003
        %4054 = vmatmul.mubr.f32.gmra.mxu0 %v1001
        %v4055 = vpop.f32.mrf.mxu0
        %v4056 = vadd.f32 %v3967, %v4055
        %v4057 = vpop.f32.mrf.mxu0
        %v4058 = vadd.f32 %v3969, %v4057
        %4059 = vmatprep.mubr.f32.mxu0 %v1009
        %4060 = vmatmul.mubr.f32.gmra.mxu0 %v1007
        %v4061 = vpop.f32.mrf.mxu0
        %v4062 = vadd.f32 %v3973, %v4061
        %v4063 = vpop.f32.mrf.mxu0
        %v4064 = vadd.f32 %v3975, %v4063
        %4065 = vmatprep.mubr.f32.mxu0 %v1015
        %4066 = vmatmul.mubr.f32.gmra.mxu0 %v1013
        %v4067 = vpop.f32.mrf.mxu0
        %v4068 = vadd.f32 %v3979, %v4067
        %v4069 = vpop.f32.mrf.mxu0
        %v4070 = vadd.f32 %v3981, %v4069
        %4071 = vdwg.mxu0
        %v4072 = vadd.f32 %v3700, %v3872
        %v4073 = vadd.f32 %v3701, %v3874
        %v4074 = vadd.f32 %v3702, %v4050
        %v4075 = vadd.f32 %v3703, %v4052
        %v4076 = vadd.f32 %v3704, %v3878
        %v4077 = vadd.f32 %v3705, %v3880
        %v4078 = vadd.f32 %v3706, %v4056
        %v4079 = vadd.f32 %v3707, %v4058
        %v4080 = vadd.f32 %v3708, %v3884
        %v4081 = vadd.f32 %v3709, %v3886
        %v4082 = vadd.f32 %v3710, %v4062
        %v4083 = vadd.f32 %v3711, %v4064
        %v4084 = vadd.f32 %v3712, %v3890
        %v4085 = vadd.f32 %v3713, %v3892
        %v4086 = vadd.f32 %v3714, %v4068
        %v4087 = vadd.f32 %v3715, %v4070
        %4088 = vst [vmem:[#allocation5] sm:$0xff] %v4072
        %4089 = vst [vmem:[#allocation5 + $0x8] sm:$0xff] %v4073
        %4090 = vst [vmem:[#allocation5 + $0x10] sm:$0xff] %v4074
        %4091 = vst [vmem:[#allocation5 + $0x18] sm:$0xff] %v4075
        %4092 = vst [vmem:[#allocation5 + $0x20] sm:$0xff] %v4076
        %4093 = vst [vmem:[#allocation5 + $0x28] sm:$0xff] %v4077
        %4094 = vst [vmem:[#allocation5 + $0x30] sm:$0xff] %v4078
        %4095 = vst [vmem:[#allocation5 + $0x38] sm:$0xff] %v4079
        %4096 = vst [vmem:[#allocation5 + $0x40] sm:$0xff] %v4080
        %4097 = vst [vmem:[#allocation5 + $0x48] sm:$0xff] %v4081
        %4098 = vst [vmem:[#allocation5 + $0x50] sm:$0xff] %v4082
        %4099 = vst [vmem:[#allocation5 + $0x58] sm:$0xff] %v4083
        %4100 = vst [vmem:[#allocation5 + $0x60] sm:$0xff] %v4084
        %4101 = vst [vmem:[#allocation5 + $0x68] sm:$0xff] %v4085
        %4102 = vst [vmem:[#allocation5 + $0x70] sm:$0xff] %v4086
        %4103 = vst [vmem:[#allocation5 + $0x78] sm:$0xff] %v4087
        %4104 = vst.msk [vmem:[#allocation3] sm:$0xf] %vm3661, %v2557
        %p4105 = scmp.eq.s32.totalorder %s38, 1
        // Predicated region
        $region69: #{tpu_custom_call.1} parent=55 // pred_check
          %p4106 = pneg %p4105
        $region70: #{tpu_custom_call.1} parent=55 // pred_check_branch
          %4108 = sbr.rel (%p4106) target = $region72
        $region71: #{tpu_custom_call.1} parent=55 // pred_region
          %v4109 = vld [vmem:[#allocation5] sm:$0xff]
          %v4110 = vld [vmem:[#allocation5 + $0x8] sm:$0xff]
          %v4111 = vld [vmem:[#allocation5 + $0x10] sm:$0xff]
          %v4112 = vld [vmem:[#allocation5 + $0x18] sm:$0xff]
          %v4113 = vld [vmem:[#allocation5 + $0x20] sm:$0xff]
          %v4114 = vld [vmem:[#allocation5 + $0x28] sm:$0xff]
          %v4115 = vld [vmem:[#allocation5 + $0x30] sm:$0xff]
          %v4116 = vld [vmem:[#allocation5 + $0x38] sm:$0xff]
          %v4117 = vld [vmem:[#allocation5 + $0x40] sm:$0xff]
          %v4118 = vld [vmem:[#allocation5 + $0x48] sm:$0xff]
          %v4119 = vld [vmem:[#allocation5 + $0x50] sm:$0xff]
          %v4120 = vld [vmem:[#allocation5 + $0x58] sm:$0xff]
          %v4121 = vld [vmem:[#allocation5 + $0x60] sm:$0xff]
          %v4122 = vld [vmem:[#allocation5 + $0x68] sm:$0xff]
          %v4123 = vld [vmem:[#allocation5 + $0x70] sm:$0xff]
          %v4124 = vld [vmem:[#allocation5 + $0x78] sm:$0xff]
          %v4125 = vld [vmem:[#allocation4] sm:$0xf]
          %v4127 = vlaneseq
          %v4128 = vshrl.u32 %v4127, 7
          %v4129 = vsub.s32 0, %v4128
          %v4130 = vrot.slane %v4125, %v4129
          %v4131 = vlaneseq
          %v4132 = vshrl.u32 %v4131, 7
          %v4133 = vsub.s32 1, %v4132
          %v4134 = vrot.slane %v4125, %v4133
          %v4135 = vlaneseq
          %v4136 = vshrl.u32 %v4135, 7
          %v4137 = vsub.s32 2, %v4136
          %v4138 = vrot.slane %v4125, %v4137
          %v4139 = vlaneseq
          %v4140 = vshrl.u32 %v4139, 7
          %v4141 = vsub.s32 3, %v4140
          %v4142 = vrot.slane %v4125, %v4141
          %v4147 = vrcp.pop %v4130
          %v4148 = vmul.f32 %v4109, %v4147
          %v4149 = vrcp.pop %v4134
          %v4150 = vmul.f32 %v4110, %v4149
          %v4151 = vrcp.pop %v4138
          %v4152 = vmul.f32 %v4111, %v4151
          %v4153 = vrcp.pop %v4142
          %v4154 = vmul.f32 %v4112, %v4153
          %v4155 = vmul.f32 %v4113, %v4147
          %v4156 = vmul.f32 %v4114, %v4149
          %v4157 = vmul.f32 %v4115, %v4151
          %v4158 = vmul.f32 %v4116, %v4153
          %v4159 = vmul.f32 %v4117, %v4147
          %v4160 = vmul.f32 %v4118, %v4149
          %v4161 = vmul.f32 %v4119, %v4151
          %v4162 = vmul.f32 %v4120, %v4153
          %v4163 = vmul.f32 %v4121, %v4147
          %v4164 = vmul.f32 %v4122, %v4149
          %v4165 = vmul.f32 %v4123, %v4151
          %v4166 = vmul.f32 %v4124, %v4153
          %v4167 = vld [vmem:[#allocation6] sm:$0x1]
          %v4169 = vlaneseq
          %v4170 = vshrl.u32 %v4169, 7
          %v4171 = vsub.s32 0, %v4170
          %v4172 = vrot.slane %v4167, %v4171
          %4173 = vset.pattern.permute.xlu0 0
          %4174 = vperm.xlu0 %4173, %v4172
          %v4175 = vpop.permute.xlu0 %4174
          %v4177 = vmul.f32 %v4175, %v4148
          %v4178 = vmul.f32 %v4175, %v4150
          %v4179 = vmul.f32 %v4175, %v4152
          %v4180 = vmul.f32 %v4175, %v4154
          %v4181 = vmul.f32 %v4175, %v4155
          %v4182 = vmul.f32 %v4175, %v4156
          %v4183 = vmul.f32 %v4175, %v4157
          %v4184 = vmul.f32 %v4175, %v4158
          %v4185 = vmul.f32 %v4175, %v4159
          %v4186 = vmul.f32 %v4175, %v4160
          %v4187 = vmul.f32 %v4175, %v4161
          %v4188 = vmul.f32 %v4175, %v4162
          %v4189 = vmul.f32 %v4175, %v4163
          %v4190 = vmul.f32 %v4175, %v4164
          %v4191 = vmul.f32 %v4175, %v4165
          %v4192 = vmul.f32 %v4175, %v4166
          %v4193 = vld [vmem:[%s373] sm:$0xff]
          %v4194 = vld [vmem:[%s373 + $0x8] sm:$0xff]
          %v4195 = vld [vmem:[%s373 + $0x10] sm:$0xff]
          %v4196 = vld [vmem:[%s373 + $0x18] sm:$0xff]
          %v4197 = vld [vmem:[%s373 + $0x20] sm:$0xff]
          %v4198 = vld [vmem:[%s373 + $0x28] sm:$0xff]
          %v4199 = vld [vmem:[%s373 + $0x30] sm:$0xff]
          %v4200 = vld [vmem:[%s373 + $0x38] sm:$0xff]
          %v4201 = vld [vmem:[%s373 + $0x40] sm:$0xff]
          %v4202 = vld [vmem:[%s373 + $0x48] sm:$0xff]
          %v4203 = vld [vmem:[%s373 + $0x50] sm:$0xff]
          %v4204 = vld [vmem:[%s373 + $0x58] sm:$0xff]
          %v4205 = vld [vmem:[%s373 + $0x60] sm:$0xff]
          %v4206 = vld [vmem:[%s373 + $0x68] sm:$0xff]
          %v4207 = vld [vmem:[%s373 + $0x70] sm:$0xff]
          %v4208 = vld [vmem:[%s373 + $0x78] sm:$0xff]
          %v4209 = vadd.f32 %v4177, %v4193
          %v4210 = vadd.f32 %v4178, %v4194
          %v4211 = vadd.f32 %v4179, %v4195
          %v4212 = vadd.f32 %v4180, %v4196
          %v4213 = vadd.f32 %v4181, %v4197
          %v4214 = vadd.f32 %v4182, %v4198
          %v4215 = vadd.f32 %v4183, %v4199
          %v4216 = vadd.f32 %v4184, %v4200
          %v4217 = vadd.f32 %v4185, %v4201
          %v4218 = vadd.f32 %v4186, %v4202
          %v4219 = vadd.f32 %v4187, %v4203
          %v4220 = vadd.f32 %v4188, %v4204
          %v4221 = vadd.f32 %v4189, %v4205
          %v4222 = vadd.f32 %v4190, %v4206
          %v4223 = vadd.f32 %v4191, %v4207
          %v4224 = vadd.f32 %v4192, %v4208
          %4225 = vst [vmem:[%s421] sm:$0xff] %v4209
          %4226 = vst [vmem:[%s421 + $0x8] sm:$0xff] %v4210
          %4227 = vst [vmem:[%s421 + $0x10] sm:$0xff] %v4211
          %4228 = vst [vmem:[%s421 + $0x18] sm:$0xff] %v4212
          %4229 = vst [vmem:[%s421 + $0x20] sm:$0xff] %v4213
          %4230 = vst [vmem:[%s421 + $0x28] sm:$0xff] %v4214
          %4231 = vst [vmem:[%s421 + $0x30] sm:$0xff] %v4215
          %4232 = vst [vmem:[%s421 + $0x38] sm:$0xff] %v4216
          %4233 = vst [vmem:[%s421 + $0x40] sm:$0xff] %v4217
          %4234 = vst [vmem:[%s421 + $0x48] sm:$0xff] %v4218
          %4235 = vst [vmem:[%s421 + $0x50] sm:$0xff] %v4219
          %4236 = vst [vmem:[%s421 + $0x58] sm:$0xff] %v4220
          %4237 = vst [vmem:[%s421 + $0x60] sm:$0xff] %v4221
          %4238 = vst [vmem:[%s421 + $0x68] sm:$0xff] %v4222
          %4239 = vst [vmem:[%s421 + $0x70] sm:$0xff] %v4223
          %4240 = vst [vmem:[%s421 + $0x78] sm:$0xff] %v4224
        $region72: #{tpu_custom_call.1} parent=55 // pred_fallthru
          _
        %s4241 = sand.u32 %s263, 1
        %s4242 = scalar_lea.sflag [#allocation9], %s4241
        %s4243 = sand.u32 %s263, 1
        %s4244 = smul.addr %s4243, 128
        %s4245 = scalar_lea.vmem [#allocation12], %s4244
        // Predicated region
        $region73: #{tpu_custom_call.1} parent=55 // pred_check
          %p4246 = pneg %p273
        $region74: #{tpu_custom_call.1} parent=55 // pred_check_branch
          %4248 = sbr.rel (%p4246) target = $region76
        $region75: #{tpu_custom_call.1} parent=55 // pred_region
          %s4249 = smul.u32 4, %s37
          %s4251 = ssub.s32 2048, 2048
          %4252 = vsyncadd %s4242, %s4251
          %s4253 = smul.addr %s36, 32
          %s4254 = sadd.s32 %s4249, %s4253
          %s4255 = smul.addr %s4254, 128
          %s4256 = scalar_lea.hbm %s9, %s4255
          %s4257 = sshll.u32 %s4245, 4
          %s4258 = int_to_ptr.vmem [resolvable:$true] %s4257
          %4263 = dma.vmem_to_hbm [thread:$0]  %s4258, 2048, %s4256, %s4242, 512, 1024, 32
        $region76: #{tpu_custom_call.1} parent=55 // pred_fallthru
          _
      $region56: #{tpu_custom_call.1} parent=5 // pred_fallthru
        _
      %p4264 = scmp.le.s32.totalorder 2, %s26
      // Predicated region
      $region77: #{tpu_custom_call.1} parent=5 // pred_check
        %p4265 = pneg %p4264
      $region78: #{tpu_custom_call.1} parent=5 // pred_check_branch
        %4267 = sbr.rel (%p4265) target = $region80
      $region79: #{tpu_custom_call.1} parent=5 // pred_region
        %s4268 = ssub.s32 %s26, 2
        // Predicated region
        $region81: #{tpu_custom_call.1} parent=79 // pred_check
          %p4269 = pneg %p279
        $region82: #{tpu_custom_call.1} parent=79 // pred_check_branch
          %4271 = sbr.rel (%p4269) target = $region84
        $region83: #{tpu_custom_call.1} parent=79 // pred_region
          %s4272 = sand.u32 %s264, 1
          %s4273 = scalar_lea.sflag [#allocation9], %s4272
          %s4274 = sand.u32 %s264, 1
          %s4275 = smul.addr %s4274, 128
          %s4276 = scalar_lea.vmem [#allocation12], %s4275
          %4277 = dma.done %s4273, 2048
        $region84: #{tpu_custom_call.1} parent=79 // pred_fallthru
          _
      $region80: #{tpu_custom_call.1} parent=5 // pred_fallthru
        _
    $region6: #{tpu_custom_call.1} parent=1 // loop_footer
      %s30 = sadd.s32 1, %s26
    $region7: #{tpu_custom_call.1} parent=1 // loop_footer_branch
      %25 = sbr.rel target = $region3
    $region8: #{tpu_custom_call.1} parent=1 // loop_exit
      _
    %4278 = vsyncpa [#allocation8], 1
    %s4279 = scalar_lea.sflag [#allocation8], 1
    %4280 = vsyncpa %s4279, 1
    %4281 = vsyncpa [#allocation11], 1
    %s4282 = scalar_lea.sflag [#allocation11], 1
    %4283 = vsyncpa %s4282, 1
    %4284 = vsyncpa [#allocation9], 1
    %s4285 = scalar_lea.sflag [#allocation9], 1
    %4286 = vsyncpa %s4285, 1

</llo_original>
